<compile_context>
chip_gen: v6e
topology: v6e:2x2x1
jax: 0.10.0
libtpu: 0.0.40
codegen_flags: <defaults>
</compile_context>

<pallas_src>
import functools

import jax
import jax.numpy as jnp
from jax.experimental import pallas as pl
from jax.experimental.pallas import tpu as pltpu


# ---------------------------------------------------------------------------
# Fused kernel: all heads + conv2 for the whole batch, single invocation.
# ---------------------------------------------------------------------------
def _gat_kernel(x_ref, wall_ref, ablk_ref, w2_ref, a2_ref, o_ref, cat_ref, *,
                B, N, hid_c, n_heads, alpha):
    # x_ref   : (B*N, in_c)                 VMEM (whole array)
    # wall_ref: (in_c, n_heads*hid_c)       VMEM  -- all head W's concatenated
    # ablk_ref: (n_heads*hid_c, 2*n_heads)  VMEM  -- block-diagonal (a1_h, a2_h)
    # w2_ref  : (n_heads*hid_c, out_c)      VMEM
    # a2_ref  : (out_c, 2)                  VMEM  -- columns (a1, a2) of conv2
    # o_ref   : (B*N, out_c)                VMEM
    # cat_ref : (B*N, n_heads*hid_c)        VMEM scratch (ELU'd head concat)

    def elu(v):
        # NOTE: both branches evaluated; exp on the discarded positive branch is
        # benign on TPU (no 0*inf) and exp routes to the otherwise-idle EUP.
        return jnp.where(v > 0, v, jnp.exp(v) - 1.0)

    def softmax_attend(f1_col, f2_row, h_blk):
        # e[i, j] = LeakyReLU(f1[i] + f2[j]); softmax over j; attn @ h_blk.
        # Adjacency is intentionally NOT applied (matches the PyTorch forward).
        # TODO(synk): for large N, tile the j axis with an online softmax and
        #             raise vmem_limit_bytes; dense (N,N) is fine at N=16.
        e = f1_col + f2_row                                         # (N, N)
        e = jnp.where(e > 0, e, alpha * e)                          # LeakyReLU
        e = e - jnp.max(e, axis=-1, keepdims=True)
        p = jnp.exp(e)
        attn = p * pl.reciprocal(jnp.sum(p, axis=-1, keepdims=True), approx=True)
        return jnp.dot(attn, h_blk, preferred_element_type=jnp.float32)

    # ---- Phase 1: fused projections for ALL heads and ALL batch rows --------
    x = x_ref[...]                                                  # (B*N, in_c)
    h_all = jnp.dot(x, wall_ref[...],
                    preferred_element_type=jnp.float32)             # (B*N, H*hid)
    f_all = jnp.dot(h_all, ablk_ref[...],
                    preferred_element_type=jnp.float32)             # (B*N, 2H)

    # ---- Phase 2: per-batch (N,N) attention per head -> lane-dense scratch --
    # TODO(synk): switch the unrolled head loop to lax.fori_loop (bounded live
    #             ranges) once N/hid_c grow; at these toy sizes unrolled wins.
    for b in range(B):                               # B=2, unrolled
        hb = h_all[b * N:(b + 1) * N, :]             # (N, H*hid)
        fb = f_all[b * N:(b + 1) * N, :]             # (N, 2H)
        fbt = fb.T                                   # ONE transpose for all heads
        for hh in range(n_heads):                    # n_heads=6, unrolled
            head = softmax_attend(
                fb[:, 2 * hh:2 * hh + 1],            # f1_h as (N, 1)
                fbt[2 * hh + 1:2 * hh + 2, :],       # f2_h as (1, N)
                hb[:, hh * hid_c:(hh + 1) * hid_c])  # this head's h  (N, hid)
            cat_ref[b * N:(b + 1) * N,
                    hh * hid_c:(hh + 1) * hid_c] = elu(head)

    # ---- Phase 3: conv2 projections batched over all B*N rows ---------------
    cat = cat_ref[...]                                              # (B*N, H*hid)
    h2 = jnp.dot(cat, w2_ref[...],
                 preferred_element_type=jnp.float32)                # (B*N, out_c)
    f2 = jnp.dot(h2, a2_ref[...],
                 preferred_element_type=jnp.float32)                # (B*N, 2)

    # ---- Phase 4: per-batch conv2 attention + final ELU + store -------------
    # TODO(synk): when N*out_c grows, present a lane-dense (padded / flattened)
    #             output slab instead of an out_c=4-wide last dim.
    for b in range(B):
        h2b = h2[b * N:(b + 1) * N, :]
        f2b = f2[b * N:(b + 1) * N, :]
        f2bt = f2b.T
        out2 = softmax_attend(f2b[:, 0:1], f2bt[1:2, :], h2b)       # (N, out_c)
        o_ref[b * N:(b + 1) * N, :] = elu(out2).astype(o_ref.dtype)


# ---------------------------------------------------------------------------
# GAT module: parameters + forward (glue in plain JAX, hot path in Pallas)
# ---------------------------------------------------------------------------
def xavier_normal(key, shape):
    fan_in, fan_out = shape[0], shape[1]
    std = (2.0 / (fan_in + fan_out)) ** 0.5
    return std * jax.random.normal(key, shape, dtype=jnp.float32)


def init_gat_params(key, in_c, hid_c, out_c, n_heads=6):
    params = {"heads": [], "conv2": {}}
    keys = jax.random.split(key, 2 * n_heads + 2)
    for i in range(n_heads):
        params["heads"].append({
            "W": xavier_normal(keys[2 * i], (in_c, hid_c)),
            "a": xavier_normal(keys[2 * i + 1], (2 * hid_c, 1)),
        })
    params["conv2"]["W"] = xavier_normal(keys[-2], (hid_c * n_heads, out_c))
    params["conv2"]["a"] = xavier_normal(keys[-1], (2 * out_c, 1))
    return params


def _pack_weights(params):
    """Host-side weight packing for the fused kernel."""
    n_heads = len(params["heads"])
    hid_c = params["heads"][0]["W"].shape[1]
    out_c = params["conv2"]["W"].shape[1]

    # All head W's concatenated on the lane axis: (in_c, n_heads*hid_c).
    W_all = jnp.concatenate([h["W"] for h in params["heads"]], axis=1)

    # Block-diagonal attention vectors: (n_heads*hid_c, 2*n_heads),
    # column 2h = a1 of head h, column 2h+1 = a2 of head h.
    A_blk = jnp.zeros((n_heads * hid_c, 2 * n_heads), dtype=jnp.float32)
    for i, hp in enumerate(params["heads"]):
        a1 = hp["a"][:hid_c, 0]
        a2 = hp["a"][hid_c:, 0]
        A_blk = A_blk.at[i * hid_c:(i + 1) * hid_c, 2 * i].set(a1)
        A_blk = A_blk.at[i * hid_c:(i + 1) * hid_c, 2 * i + 1].set(a2)

    W2 = params["conv2"]["W"]                                       # (H*hid, out_c)
    a2_mat = jnp.concatenate([params["conv2"]["a"][:out_c],
                              params["conv2"]["a"][out_c:]], axis=1)  # (out_c, 2)
    return W_all, A_blk, W2, a2_mat, n_heads, hid_c, out_c


def gat_forward(params, flow_x, adj):
    """flow_x: (B, N, T, F) -> (B, N, 1, out_c). `adj` is unused (as in PyTorch)."""
    del adj  # The PyTorch forward never applies the adjacency -> dense attention.
    B, N = flow_x.shape[0], flow_x.shape[1]
    x = flow_x.reshape(B * N, -1).astype(jnp.float32)               # (B*N, in_c)
    in_c = x.shape[-1]

    W_all, A_blk, W2, a2_mat, n_heads, hid_c, out_c = _pack_weights(params)

    kernel = functools.partial(_gat_kernel, B=B, N=N, hid_c=hid_c,
                               n_heads=n_heads, alpha=0.2)
    vmem_spec = pl.BlockSpec(memory_space=pltpu.MemorySpace.VMEM)
    out = pl.pallas_call(
        kernel,
        out_shape=jax.ShapeDtypeStruct((B * N, out_c), jnp.float32),
        in_specs=[vmem_spec] * 5,            # whole arrays resident in VMEM
        out_specs=vmem_spec,
        scratch_shapes=[pltpu.VMEM((B * N, n_heads * hid_c), jnp.float32)],
    )(x, W_all, A_blk, W2, a2_mat)
    return out.reshape(B, N, 1, out_c)


# ---------------------------------------------------------------------------
# Pure-JAX reference (mirrors the PyTorch math) for correctness checking
# ---------------------------------------------------------------------------
def _ref_layer(x, W, a, alpha=0.2):
    out_c = W.shape[1]
    h = x @ W                                                       # (B, N, out_c)
    f1 = h @ a[:out_c]                                              # (B, N, 1)
    f2 = h @ a[out_c:]                                              # (B, N, 1)
    e = f1 + jnp.swapaxes(f2, 1, 2)                                 # (B, N, N)
    e = jnp.where(e > 0, e, alpha * e)
    attn = jax.nn.softmax(e, axis=2)
    return attn @ h


def _ref_forward(params, flow_x, adj):
    del adj
    B, N = flow_x.shape[0], flow_x.shape[1]
    x = flow_x.reshape(B, N, -1)
    elu = lambda v: jnp.where(v > 0, v, jnp.exp(v) - 1.0)
    cat = elu(jnp.concatenate([_ref_layer(x, h["W"], h["a"]) for h in params["heads"]],
                              axis=-1))
    out2 = elu(_ref_layer(cat, params["conv2"]["W"], params["conv2"]["a"]))
    return out2[:, :, None, :]


# ---------------------------------------------------------------------------
if __name__ == "__main__":
    B, N, T, F_in = 2, 16, 4, 1        # flow_x: (B, N, T, F) -> in_c = T*F = 4
    in_c, hid_c, out_c, n_heads = T * F_in, 8, 4, 6

    key = jax.random.PRNGKey(0)
    k_x, k_p = jax.random.split(key)
    flow_x = jax.random.normal(k_x, (B, N, T, F_in), dtype=jnp.float32)
    adj = jnp.ones((N, N), dtype=jnp.float32)   # built but unused (matches PyTorch)

    params = init_gat_params(k_p, in_c, hid_c, out_c, n_heads=n_heads)

    out = jax.block_until_ready(gat_forward(params, flow_x, adj))
    ref = _ref_forward(params, flow_x, adj)

    assert out.shape == (B, N, 1, out_c), out.shape
    # slightly looser tolerance: softmax denom uses the approximate EUP reciprocal
    assert jnp.allclose(out, ref, atol=2e-3, rtol=2e-3), float(jnp.max(jnp.abs(out - ref)))
    print("KERNEL_OK")
</pallas_src>

<mosaic_0001>
module attributes {stable_mosaic.version = 11 : i64} {
  func.func @_gat_kernel(%arg0: memref<32x4xf32, #tpu.memory_space<vmem>>, %arg1: memref<4x48xf32, #tpu.memory_space<vmem>>, %arg2: memref<48x12xf32, #tpu.memory_space<vmem>>, %arg3: memref<48x4xf32, #tpu.memory_space<vmem>>, %arg4: memref<4x2xf32, #tpu.memory_space<vmem>>, %arg5: memref<32x4xf32, #tpu.memory_space<vmem>>, %arg6: memref<32x48xf32, #tpu.memory_space<vmem>>) attributes {dimension_semantics = [], scalar_prefetch = 0 : i64, scratch_operands = 1 : i64, tpu.core_type = #tpu.core_type<tc>} {
    %c0 = arith.constant 0 : index
    %c0_0 = arith.constant 0 : index
    %0 = vector.load %arg0[%c0, %c0_0] : memref<32x4xf32, #tpu.memory_space<vmem>>, vector<32x4xf32>
    %c0_1 = arith.constant 0 : index
    %c0_2 = arith.constant 0 : index
    %1 = vector.load %arg1[%c0_1, %c0_2] : memref<4x48xf32, #tpu.memory_space<vmem>>, vector<4x48xf32>
    %cst = arith.constant dense<0.000000e+00> : vector<32x48xf32>
    %2 = tpu.matmul %0, %1, %cst {dimension_numbers = #tpu.dot_dimension_numbers<[1], [0], [0], [1], [0, 0, 1, 1], [], []>} : vector<32x4xf32>, vector<4x48xf32>, vector<32x48xf32> -> vector<32x48xf32>
    %c0_3 = arith.constant 0 : index
    %c0_4 = arith.constant 0 : index
    %3 = vector.load %arg2[%c0_3, %c0_4] : memref<48x12xf32, #tpu.memory_space<vmem>>, vector<48x12xf32>
    %cst_5 = arith.constant dense<0.000000e+00> : vector<32x12xf32>
    %4 = tpu.matmul %2, %3, %cst_5 {dimension_numbers = #tpu.dot_dimension_numbers<[1], [0], [0], [1], [0, 0, 1, 1], [], []>} : vector<32x48xf32>, vector<48x12xf32>, vector<32x12xf32> -> vector<32x12xf32>
    %5 = vector.extract_strided_slice %2 {offsets = [0, 0], sizes = [16, 48], strides = [1, 1]} : vector<32x48xf32> to vector<16x48xf32>
    %6 = vector.extract_strided_slice %4 {offsets = [0, 0], sizes = [16, 12], strides = [1, 1]} : vector<32x12xf32> to vector<16x12xf32>
    %7 = tpu.transpose %6, [1, 0] : vector<16x12xf32> -> vector<12x16xf32>
    %8 = vector.extract_strided_slice %6 {offsets = [0, 0], sizes = [16, 1], strides = [1, 1]} : vector<16x12xf32> to vector<16x1xf32>
    %9 = vector.extract_strided_slice %7 {offsets = [1, 0], sizes = [1, 16], strides = [1, 1]} : vector<12x16xf32> to vector<1x16xf32>
    %10 = vector.extract_strided_slice %5 {offsets = [0, 0], sizes = [16, 8], strides = [1, 1]} : vector<16x48xf32> to vector<16x8xf32>
    %11 = vector.broadcast %8 : vector<16x1xf32> to vector<16x16xf32>
    %12 = vector.broadcast %9 : vector<1x16xf32> to vector<16x16xf32>
    %13 = arith.addf %11, %12 : vector<16x16xf32>
    %cst_6 = arith.constant 0.000000e+00 : f32
    %14 = vector.broadcast %cst_6 : f32 to vector<16x16xf32>
    %15 = arith.cmpf ogt, %13, %14 : vector<16x16xf32>
    %cst_7 = arith.constant 2.000000e-01 : f32
    %16 = vector.broadcast %cst_7 : f32 to vector<16x16xf32>
    %17 = arith.mulf %16, %13 : vector<16x16xf32>
    %18 = arith.select %15, %13, %17 : vector<16x16xi1>, vector<16x16xf32>
    %cst_8 = arith.constant dense<0xFF800000> : vector<16xf32>
    %19 = vector.multi_reduction <maximumf>, %18, %cst_8 [1] : vector<16x16xf32> to vector<16xf32>
    %20 = vector.shape_cast %19 : vector<16xf32> to vector<16x1xf32>
    %21 = vector.broadcast %20 : vector<16x1xf32> to vector<16x16xf32>
    %22 = arith.subf %18, %21 : vector<16x16xf32>
    %23 = math.exp %22 : vector<16x16xf32>
    %cst_9 = arith.constant dense<0.000000e+00> : vector<16xf32>
    %24 = vector.multi_reduction <add>, %23, %cst_9 [1] : vector<16x16xf32> to vector<16xf32>
    %25 = vector.shape_cast %24 : vector<16xf32> to vector<16x1xf32>
    %26 = tpu.reciprocal %25 {approx = true} : vector<16x1xf32> -> vector<16x1xf32>
    %27 = vector.broadcast %26 : vector<16x1xf32> to vector<16x16xf32>
    %28 = arith.mulf %23, %27 : vector<16x16xf32>
    %cst_10 = arith.constant dense<0.000000e+00> : vector<16x8xf32>
    %29 = tpu.matmul %28, %10, %cst_10 {dimension_numbers = #tpu.dot_dimension_numbers<[1], [0], [0], [1], [0, 0, 1, 1], [], []>} : vector<16x16xf32>, vector<16x8xf32>, vector<16x8xf32> -> vector<16x8xf32>
    %cst_11 = arith.constant 0.000000e+00 : f32
    %30 = vector.broadcast %cst_11 : f32 to vector<16x8xf32>
    %31 = arith.cmpf ogt, %29, %30 : vector<16x8xf32>
    %32 = math.exp %29 : vector<16x8xf32>
    %cst_12 = arith.constant 1.000000e+00 : f32
    %33 = vector.broadcast %cst_12 : f32 to vector<16x8xf32>
    %34 = arith.subf %32, %33 : vector<16x8xf32>
    %35 = arith.select %31, %29, %34 : vector<16x8xi1>, vector<16x8xf32>
    %c0_13 = arith.constant 0 : index
    %c0_14 = arith.constant 0 : index
    %36 = vector.load %arg6[%c0_13, %c0_14] : memref<32x48xf32, #tpu.memory_space<vmem>>, vector<16x8xf32>
    tpu.vector_store %arg6[%c0_13, %c0_14], %35 {strides = array<i32>} : memref<32x48xf32, #tpu.memory_space<vmem>>, vector<16x8xf32>,
    %37 = vector.extract_strided_slice %6 {offsets = [0, 2], sizes = [16, 1], strides = [1, 1]} : vector<16x12xf32> to vector<16x1xf32>
    %38 = vector.extract_strided_slice %7 {offsets = [3, 0], sizes = [1, 16], strides = [1, 1]} : vector<12x16xf32> to vector<1x16xf32>
    %39 = vector.extract_strided_slice %5 {offsets = [0, 8], sizes = [16, 8], strides = [1, 1]} : vector<16x48xf32> to vector<16x8xf32>
    %40 = vector.broadcast %37 : vector<16x1xf32> to vector<16x16xf32>
    %41 = vector.broadcast %38 : vector<1x16xf32> to vector<16x16xf32>
    %42 = arith.addf %40, %41 : vector<16x16xf32>
    %cst_15 = arith.constant 0.000000e+00 : f32
    %43 = vector.broadcast %cst_15 : f32 to vector<16x16xf32>
    %44 = arith.cmpf ogt, %42, %43 : vector<16x16xf32>
    %cst_16 = arith.constant 2.000000e-01 : f32
    %45 = vector.broadcast %cst_16 : f32 to vector<16x16xf32>
    %46 = arith.mulf %45, %42 : vector<16x16xf32>
    %47 = arith.select %44, %42, %46 : vector<16x16xi1>, vector<16x16xf32>
    %cst_17 = arith.constant dense<0xFF800000> : vector<16xf32>
    %48 = vector.multi_reduction <maximumf>, %47, %cst_17 [1] : vector<16x16xf32> to vector<16xf32>
    %49 = vector.shape_cast %48 : vector<16xf32> to vector<16x1xf32>
    %50 = vector.broadcast %49 : vector<16x1xf32> to vector<16x16xf32>
    %51 = arith.subf %47, %50 : vector<16x16xf32>
    %52 = math.exp %51 : vector<16x16xf32>
    %cst_18 = arith.constant dense<0.000000e+00> : vector<16xf32>
    %53 = vector.multi_reduction <add>, %52, %cst_18 [1] : vector<16x16xf32> to vector<16xf32>
    %54 = vector.shape_cast %53 : vector<16xf32> to vector<16x1xf32>
    %55 = tpu.reciprocal %54 {approx = true} : vector<16x1xf32> -> vector<16x1xf32>
    %56 = vector.broadcast %55 : vector<16x1xf32> to vector<16x16xf32>
    %57 = arith.mulf %52, %56 : vector<16x16xf32>
    %cst_19 = arith.constant dense<0.000000e+00> : vector<16x8xf32>
    %58 = tpu.matmul %57, %39, %cst_19 {dimension_numbers = #tpu.dot_dimension_numbers<[1], [0], [0], [1], [0, 0, 1, 1], [], []>} : vector<16x16xf32>, vector<16x8xf32>, vector<16x8xf32> -> vector<16x8xf32>
    %cst_20 = arith.constant 0.000000e+00 : f32
    %59 = vector.broadcast %cst_20 : f32 to vector<16x8xf32>
    %60 = arith.cmpf ogt, %58, %59 : vector<16x8xf32>
    %61 = math.exp %58 : vector<16x8xf32>
    %cst_21 = arith.constant 1.000000e+00 : f32
    %62 = vector.broadcast %cst_21 : f32 to vector<16x8xf32>
    %63 = arith.subf %61, %62 : vector<16x8xf32>
    %64 = arith.select %60, %58, %63 : vector<16x8xi1>, vector<16x8xf32>
    %c0_22 = arith.constant 0 : index
    %c8 = arith.constant 8 : index
    %65 = vector.load %arg6[%c0_22, %c8] : memref<32x48xf32, #tpu.memory_space<vmem>>, vector<16x8xf32>
    tpu.vector_store %arg6[%c0_22, %c8], %64 {strides = array<i32>} : memref<32x48xf32, #tpu.memory_space<vmem>>, vector<16x8xf32>,
    %66 = vector.extract_strided_slice %6 {offsets = [0, 4], sizes = [16, 1], strides = [1, 1]} : vector<16x12xf32> to vector<16x1xf32>
    %67 = vector.extract_strided_slice %7 {offsets = [5, 0], sizes = [1, 16], strides = [1, 1]} : vector<12x16xf32> to vector<1x16xf32>
    %68 = vector.extract_strided_slice %5 {offsets = [0, 16], sizes = [16, 8], strides = [1, 1]} : vector<16x48xf32> to vector<16x8xf32>
    %69 = vector.broadcast %66 : vector<16x1xf32> to vector<16x16xf32>
    %70 = vector.broadcast %67 : vector<1x16xf32> to vector<16x16xf32>
    %71 = arith.addf %69, %70 : vector<16x16xf32>
    %cst_23 = arith.constant 0.000000e+00 : f32
    %72 = vector.broadcast %cst_23 : f32 to vector<16x16xf32>
    %73 = arith.cmpf ogt, %71, %72 : vector<16x16xf32>
    %cst_24 = arith.constant 2.000000e-01 : f32
    %74 = vector.broadcast %cst_24 : f32 to vector<16x16xf32>
    %75 = arith.mulf %74, %71 : vector<16x16xf32>
    %76 = arith.select %73, %71, %75 : vector<16x16xi1>, vector<16x16xf32>
    %cst_25 = arith.constant dense<0xFF800000> : vector<16xf32>
    %77 = vector.multi_reduction <maximumf>, %76, %cst_25 [1] : vector<16x16xf32> to vector<16xf32>
    %78 = vector.shape_cast %77 : vector<16xf32> to vector<16x1xf32>
    %79 = vector.broadcast %78 : vector<16x1xf32> to vector<16x16xf32>
    %80 = arith.subf %76, %79 : vector<16x16xf32>
    %81 = math.exp %80 : vector<16x16xf32>
    %cst_26 = arith.constant dense<0.000000e+00> : vector<16xf32>
    %82 = vector.multi_reduction <add>, %81, %cst_26 [1] : vector<16x16xf32> to vector<16xf32>
    %83 = vector.shape_cast %82 : vector<16xf32> to vector<16x1xf32>
    %84 = tpu.reciprocal %83 {approx = true} : vector<16x1xf32> -> vector<16x1xf32>
    %85 = vector.broadcast %84 : vector<16x1xf32> to vector<16x16xf32>
    %86 = arith.mulf %81, %85 : vector<16x16xf32>
    %cst_27 = arith.constant dense<0.000000e+00> : vector<16x8xf32>
    %87 = tpu.matmul %86, %68, %cst_27 {dimension_numbers = #tpu.dot_dimension_numbers<[1], [0], [0], [1], [0, 0, 1, 1], [], []>} : vector<16x16xf32>, vector<16x8xf32>, vector<16x8xf32> -> vector<16x8xf32>
    %cst_28 = arith.constant 0.000000e+00 : f32
    %88 = vector.broadcast %cst_28 : f32 to vector<16x8xf32>
    %89 = arith.cmpf ogt, %87, %88 : vector<16x8xf32>
    %90 = math.exp %87 : vector<16x8xf32>
    %cst_29 = arith.constant 1.000000e+00 : f32
    %91 = vector.broadcast %cst_29 : f32 to vector<16x8xf32>
    %92 = arith.subf %90, %91 : vector<16x8xf32>
    %93 = arith.select %89, %87, %92 : vector<16x8xi1>, vector<16x8xf32>
    %c0_30 = arith.constant 0 : index
    %c16 = arith.constant 16 : index
    %94 = vector.load %arg6[%c0_30, %c16] : memref<32x48xf32, #tpu.memory_space<vmem>>, vector<16x8xf32>
    tpu.vector_store %arg6[%c0_30, %c16], %93 {strides = array<i32>} : memref<32x48xf32, #tpu.memory_space<vmem>>, vector<16x8xf32>,
    %95 = vector.extract_strided_slice %6 {offsets = [0, 6], sizes = [16, 1], strides = [1, 1]} : vector<16x12xf32> to vector<16x1xf32>
    %96 = vector.extract_strided_slice %7 {offsets = [7, 0], sizes = [1, 16], strides = [1, 1]} : vector<12x16xf32> to vector<1x16xf32>
    %97 = vector.extract_strided_slice %5 {offsets = [0, 24], sizes = [16, 8], strides = [1, 1]} : vector<16x48xf32> to vector<16x8xf32>
    %98 = vector.broadcast %95 : vector<16x1xf32> to vector<16x16xf32>
    %99 = vector.broadcast %96 : vector<1x16xf32> to vector<16x16xf32>
    %100 = arith.addf %98, %99 : vector<16x16xf32>
    %cst_31 = arith.constant 0.000000e+00 : f32
    %101 = vector.broadcast %cst_31 : f32 to vector<16x16xf32>
    %102 = arith.cmpf ogt, %100, %101 : vector<16x16xf32>
    %cst_32 = arith.constant 2.000000e-01 : f32
    %103 = vector.broadcast %cst_32 : f32 to vector<16x16xf32>
    %104 = arith.mulf %103, %100 : vector<16x16xf32>
    %105 = arith.select %102, %100, %104 : vector<16x16xi1>, vector<16x16xf32>
    %cst_33 = arith.constant dense<0xFF800000> : vector<16xf32>
    %106 = vector.multi_reduction <maximumf>, %105, %cst_33 [1] : vector<16x16xf32> to vector<16xf32>
    %107 = vector.shape_cast %106 : vector<16xf32> to vector<16x1xf32>
    %108 = vector.broadcast %107 : vector<16x1xf32> to vector<16x16xf32>
    %109 = arith.subf %105, %108 : vector<16x16xf32>
    %110 = math.exp %109 : vector<16x16xf32>
    %cst_34 = arith.constant dense<0.000000e+00> : vector<16xf32>
    %111 = vector.multi_reduction <add>, %110, %cst_34 [1] : vector<16x16xf32> to vector<16xf32>
    %112 = vector.shape_cast %111 : vector<16xf32> to vector<16x1xf32>
    %113 = tpu.reciprocal %112 {approx = true} : vector<16x1xf32> -> vector<16x1xf32>
    %114 = vector.broadcast %113 : vector<16x1xf32> to vector<16x16xf32>
    %115 = arith.mulf %110, %114 : vector<16x16xf32>
    %cst_35 = arith.constant dense<0.000000e+00> : vector<16x8xf32>
    %116 = tpu.matmul %115, %97, %cst_35 {dimension_numbers = #tpu.dot_dimension_numbers<[1], [0], [0], [1], [0, 0, 1, 1], [], []>} : vector<16x16xf32>, vector<16x8xf32>, vector<16x8xf32> -> vector<16x8xf32>
    %cst_36 = arith.constant 0.000000e+00 : f32
    %117 = vector.broadcast %cst_36 : f32 to vector<16x8xf32>
    %118 = arith.cmpf ogt, %116, %117 : vector<16x8xf32>
    %119 = math.exp %116 : vector<16x8xf32>
    %cst_37 = arith.constant 1.000000e+00 : f32
    %120 = vector.broadcast %cst_37 : f32 to vector<16x8xf32>
    %121 = arith.subf %119, %120 : vector<16x8xf32>
    %122 = arith.select %118, %116, %121 : vector<16x8xi1>, vector<16x8xf32>
    %c0_38 = arith.constant 0 : index
    %c24 = arith.constant 24 : index
    %123 = vector.load %arg6[%c0_38, %c24] : memref<32x48xf32, #tpu.memory_space<vmem>>, vector<16x8xf32>
    tpu.vector_store %arg6[%c0_38, %c24], %122 {strides = array<i32>} : memref<32x48xf32, #tpu.memory_space<vmem>>, vector<16x8xf32>,
    %124 = vector.extract_strided_slice %6 {offsets = [0, 8], sizes = [16, 1], strides = [1, 1]} : vector<16x12xf32> to vector<16x1xf32>
    %125 = vector.extract_strided_slice %7 {offsets = [9, 0], sizes = [1, 16], strides = [1, 1]} : vector<12x16xf32> to vector<1x16xf32>
    %126 = vector.extract_strided_slice %5 {offsets = [0, 32], sizes = [16, 8], strides = [1, 1]} : vector<16x48xf32> to vector<16x8xf32>
    %127 = vector.broadcast %124 : vector<16x1xf32> to vector<16x16xf32>
    %128 = vector.broadcast %125 : vector<1x16xf32> to vector<16x16xf32>
    %129 = arith.addf %127, %128 : vector<16x16xf32>
    %cst_39 = arith.constant 0.000000e+00 : f32
    %130 = vector.broadcast %cst_39 : f32 to vector<16x16xf32>
    %131 = arith.cmpf ogt, %129, %130 : vector<16x16xf32>
    %cst_40 = arith.constant 2.000000e-01 : f32
    %132 = vector.broadcast %cst_40 : f32 to vector<16x16xf32>
    %133 = arith.mulf %132, %129 : vector<16x16xf32>
    %134 = arith.select %131, %129, %133 : vector<16x16xi1>, vector<16x16xf32>
    %cst_41 = arith.constant dense<0xFF800000> : vector<16xf32>
    %135 = vector.multi_reduction <maximumf>, %134, %cst_41 [1] : vector<16x16xf32> to vector<16xf32>
    %136 = vector.shape_cast %135 : vector<16xf32> to vector<16x1xf32>
    %137 = vector.broadcast %136 : vector<16x1xf32> to vector<16x16xf32>
    %138 = arith.subf %134, %137 : vector<16x16xf32>
    %139 = math.exp %138 : vector<16x16xf32>
    %cst_42 = arith.constant dense<0.000000e+00> : vector<16xf32>
    %140 = vector.multi_reduction <add>, %139, %cst_42 [1] : vector<16x16xf32> to vector<16xf32>
    %141 = vector.shape_cast %140 : vector<16xf32> to vector<16x1xf32>
    %142 = tpu.reciprocal %141 {approx = true} : vector<16x1xf32> -> vector<16x1xf32>
    %143 = vector.broadcast %142 : vector<16x1xf32> to vector<16x16xf32>
    %144 = arith.mulf %139, %143 : vector<16x16xf32>
    %cst_43 = arith.constant dense<0.000000e+00> : vector<16x8xf32>
    %145 = tpu.matmul %144, %126, %cst_43 {dimension_numbers = #tpu.dot_dimension_numbers<[1], [0], [0], [1], [0, 0, 1, 1], [], []>} : vector<16x16xf32>, vector<16x8xf32>, vector<16x8xf32> -> vector<16x8xf32>
    %cst_44 = arith.constant 0.000000e+00 : f32
    %146 = vector.broadcast %cst_44 : f32 to vector<16x8xf32>
    %147 = arith.cmpf ogt, %145, %146 : vector<16x8xf32>
    %148 = math.exp %145 : vector<16x8xf32>
    %cst_45 = arith.constant 1.000000e+00 : f32
    %149 = vector.broadcast %cst_45 : f32 to vector<16x8xf32>
    %150 = arith.subf %148, %149 : vector<16x8xf32>
    %151 = arith.select %147, %145, %150 : vector<16x8xi1>, vector<16x8xf32>
    %c0_46 = arith.constant 0 : index
    %c32 = arith.constant 32 : index
    %152 = vector.load %arg6[%c0_46, %c32] : memref<32x48xf32, #tpu.memory_space<vmem>>, vector<16x8xf32>
    tpu.vector_store %arg6[%c0_46, %c32], %151 {strides = array<i32>} : memref<32x48xf32, #tpu.memory_space<vmem>>, vector<16x8xf32>,
    %153 = vector.extract_strided_slice %6 {offsets = [0, 10], sizes = [16, 1], strides = [1, 1]} : vector<16x12xf32> to vector<16x1xf32>
    %154 = vector.extract_strided_slice %7 {offsets = [11, 0], sizes = [1, 16], strides = [1, 1]} : vector<12x16xf32> to vector<1x16xf32>
    %155 = vector.extract_strided_slice %5 {offsets = [0, 40], sizes = [16, 8], strides = [1, 1]} : vector<16x48xf32> to vector<16x8xf32>
    %156 = vector.broadcast %153 : vector<16x1xf32> to vector<16x16xf32>
    %157 = vector.broadcast %154 : vector<1x16xf32> to vector<16x16xf32>
    %158 = arith.addf %156, %157 : vector<16x16xf32>
    %cst_47 = arith.constant 0.000000e+00 : f32
    %159 = vector.broadcast %cst_47 : f32 to vector<16x16xf32>
    %160 = arith.cmpf ogt, %158, %159 : vector<16x16xf32>
    %cst_48 = arith.constant 2.000000e-01 : f32
    %161 = vector.broadcast %cst_48 : f32 to vector<16x16xf32>
    %162 = arith.mulf %161, %158 : vector<16x16xf32>
    %163 = arith.select %160, %158, %162 : vector<16x16xi1>, vector<16x16xf32>
    %cst_49 = arith.constant dense<0xFF800000> : vector<16xf32>
    %164 = vector.multi_reduction <maximumf>, %163, %cst_49 [1] : vector<16x16xf32> to vector<16xf32>
    %165 = vector.shape_cast %164 : vector<16xf32> to vector<16x1xf32>
    %166 = vector.broadcast %165 : vector<16x1xf32> to vector<16x16xf32>
    %167 = arith.subf %163, %166 : vector<16x16xf32>
    %168 = math.exp %167 : vector<16x16xf32>
    %cst_50 = arith.constant dense<0.000000e+00> : vector<16xf32>
    %169 = vector.multi_reduction <add>, %168, %cst_50 [1] : vector<16x16xf32> to vector<16xf32>
    %170 = vector.shape_cast %169 : vector<16xf32> to vector<16x1xf32>
    %171 = tpu.reciprocal %170 {approx = true} : vector<16x1xf32> -> vector<16x1xf32>
    %172 = vector.broadcast %171 : vector<16x1xf32> to vector<16x16xf32>
    %173 = arith.mulf %168, %172 : vector<16x16xf32>
    %cst_51 = arith.constant dense<0.000000e+00> : vector<16x8xf32>
    %174 = tpu.matmul %173, %155, %cst_51 {dimension_numbers = #tpu.dot_dimension_numbers<[1], [0], [0], [1], [0, 0, 1, 1], [], []>} : vector<16x16xf32>, vector<16x8xf32>, vector<16x8xf32> -> vector<16x8xf32>
    %cst_52 = arith.constant 0.000000e+00 : f32
    %175 = vector.broadcast %cst_52 : f32 to vector<16x8xf32>
    %176 = arith.cmpf ogt, %174, %175 : vector<16x8xf32>
    %177 = math.exp %174 : vector<16x8xf32>
    %cst_53 = arith.constant 1.000000e+00 : f32
    %178 = vector.broadcast %cst_53 : f32 to vector<16x8xf32>
    %179 = arith.subf %177, %178 : vector<16x8xf32>
    %180 = arith.select %176, %174, %179 : vector<16x8xi1>, vector<16x8xf32>
    %c0_54 = arith.constant 0 : index
    %c40 = arith.constant 40 : index
    %181 = vector.load %arg6[%c0_54, %c40] : memref<32x48xf32, #tpu.memory_space<vmem>>, vector<16x8xf32>
    tpu.vector_store %arg6[%c0_54, %c40], %180 {strides = array<i32>} : memref<32x48xf32, #tpu.memory_space<vmem>>, vector<16x8xf32>,
    %182 = vector.extract_strided_slice %2 {offsets = [16, 0], sizes = [16, 48], strides = [1, 1]} : vector<32x48xf32> to vector<16x48xf32>
    %183 = vector.extract_strided_slice %4 {offsets = [16, 0], sizes = [16, 12], strides = [1, 1]} : vector<32x12xf32> to vector<16x12xf32>
    %184 = tpu.transpose %183, [1, 0] : vector<16x12xf32> -> vector<12x16xf32>
    %185 = vector.extract_strided_slice %183 {offsets = [0, 0], sizes = [16, 1], strides = [1, 1]} : vector<16x12xf32> to vector<16x1xf32>
    %186 = vector.extract_strided_slice %184 {offsets = [1, 0], sizes = [1, 16], strides = [1, 1]} : vector<12x16xf32> to vector<1x16xf32>
    %187 = vector.extract_strided_slice %182 {offsets = [0, 0], sizes = [16, 8], strides = [1, 1]} : vector<16x48xf32> to vector<16x8xf32>
    %188 = vector.broadcast %185 : vector<16x1xf32> to vector<16x16xf32>
    %189 = vector.broadcast %186 : vector<1x16xf32> to vector<16x16xf32>
    %190 = arith.addf %188, %189 : vector<16x16xf32>
    %cst_55 = arith.constant 0.000000e+00 : f32
    %191 = vector.broadcast %cst_55 : f32 to vector<16x16xf32>
    %192 = arith.cmpf ogt, %190, %191 : vector<16x16xf32>
    %cst_56 = arith.constant 2.000000e-01 : f32
    %193 = vector.broadcast %cst_56 : f32 to vector<16x16xf32>
    %194 = arith.mulf %193, %190 : vector<16x16xf32>
    %195 = arith.select %192, %190, %194 : vector<16x16xi1>, vector<16x16xf32>
    %cst_57 = arith.constant dense<0xFF800000> : vector<16xf32>
    %196 = vector.multi_reduction <maximumf>, %195, %cst_57 [1] : vector<16x16xf32> to vector<16xf32>
    %197 = vector.shape_cast %196 : vector<16xf32> to vector<16x1xf32>
    %198 = vector.broadcast %197 : vector<16x1xf32> to vector<16x16xf32>
    %199 = arith.subf %195, %198 : vector<16x16xf32>
    %200 = math.exp %199 : vector<16x16xf32>
    %cst_58 = arith.constant dense<0.000000e+00> : vector<16xf32>
    %201 = vector.multi_reduction <add>, %200, %cst_58 [1] : vector<16x16xf32> to vector<16xf32>
    %202 = vector.shape_cast %201 : vector<16xf32> to vector<16x1xf32>
    %203 = tpu.reciprocal %202 {approx = true} : vector<16x1xf32> -> vector<16x1xf32>
    %204 = vector.broadcast %203 : vector<16x1xf32> to vector<16x16xf32>
    %205 = arith.mulf %200, %204 : vector<16x16xf32>
    %cst_59 = arith.constant dense<0.000000e+00> : vector<16x8xf32>
    %206 = tpu.matmul %205, %187, %cst_59 {dimension_numbers = #tpu.dot_dimension_numbers<[1], [0], [0], [1], [0, 0, 1, 1], [], []>} : vector<16x16xf32>, vector<16x8xf32>, vector<16x8xf32> -> vector<16x8xf32>
    %cst_60 = arith.constant 0.000000e+00 : f32
    %207 = vector.broadcast %cst_60 : f32 to vector<16x8xf32>
    %208 = arith.cmpf ogt, %206, %207 : vector<16x8xf32>
    %209 = math.exp %206 : vector<16x8xf32>
    %cst_61 = arith.constant 1.000000e+00 : f32
    %210 = vector.broadcast %cst_61 : f32 to vector<16x8xf32>
    %211 = arith.subf %209, %210 : vector<16x8xf32>
    %212 = arith.select %208, %206, %211 : vector<16x8xi1>, vector<16x8xf32>
    %c16_62 = arith.constant 16 : index
    %c0_63 = arith.constant 0 : index
    %213 = vector.load %arg6[%c16_62, %c0_63] : memref<32x48xf32, #tpu.memory_space<vmem>>, vector<16x8xf32>
    tpu.vector_store %arg6[%c16_62, %c0_63], %212 {strides = array<i32>} : memref<32x48xf32, #tpu.memory_space<vmem>>, vector<16x8xf32>,
    %214 = vector.extract_strided_slice %183 {offsets = [0, 2], sizes = [16, 1], strides = [1, 1]} : vector<16x12xf32> to vector<16x1xf32>
    %215 = vector.extract_strided_slice %184 {offsets = [3, 0], sizes = [1, 16], strides = [1, 1]} : vector<12x16xf32> to vector<1x16xf32>
    %216 = vector.extract_strided_slice %182 {offsets = [0, 8], sizes = [16, 8], strides = [1, 1]} : vector<16x48xf32> to vector<16x8xf32>
    %217 = vector.broadcast %214 : vector<16x1xf32> to vector<16x16xf32>
    %218 = vector.broadcast %215 : vector<1x16xf32> to vector<16x16xf32>
    %219 = arith.addf %217, %218 : vector<16x16xf32>
    %cst_64 = arith.constant 0.000000e+00 : f32
    %220 = vector.broadcast %cst_64 : f32 to vector<16x16xf32>
    %221 = arith.cmpf ogt, %219, %220 : vector<16x16xf32>
    %cst_65 = arith.constant 2.000000e-01 : f32
    %222 = vector.broadcast %cst_65 : f32 to vector<16x16xf32>
    %223 = arith.mulf %222, %219 : vector<16x16xf32>
    %224 = arith.select %221, %219, %223 : vector<16x16xi1>, vector<16x16xf32>
    %cst_66 = arith.constant dense<0xFF800000> : vector<16xf32>
    %225 = vector.multi_reduction <maximumf>, %224, %cst_66 [1] : vector<16x16xf32> to vector<16xf32>
    %226 = vector.shape_cast %225 : vector<16xf32> to vector<16x1xf32>
    %227 = vector.broadcast %226 : vector<16x1xf32> to vector<16x16xf32>
    %228 = arith.subf %224, %227 : vector<16x16xf32>
    %229 = math.exp %228 : vector<16x16xf32>
    %cst_67 = arith.constant dense<0.000000e+00> : vector<16xf32>
    %230 = vector.multi_reduction <add>, %229, %cst_67 [1] : vector<16x16xf32> to vector<16xf32>
    %231 = vector.shape_cast %230 : vector<16xf32> to vector<16x1xf32>
    %232 = tpu.reciprocal %231 {approx = true} : vector<16x1xf32> -> vector<16x1xf32>
    %233 = vector.broadcast %232 : vector<16x1xf32> to vector<16x16xf32>
    %234 = arith.mulf %229, %233 : vector<16x16xf32>
    %cst_68 = arith.constant dense<0.000000e+00> : vector<16x8xf32>
    %235 = tpu.matmul %234, %216, %cst_68 {dimension_numbers = #tpu.dot_dimension_numbers<[1], [0], [0], [1], [0, 0, 1, 1], [], []>} : vector<16x16xf32>, vector<16x8xf32>, vector<16x8xf32> -> vector<16x8xf32>
    %cst_69 = arith.constant 0.000000e+00 : f32
    %236 = vector.broadcast %cst_69 : f32 to vector<16x8xf32>
    %237 = arith.cmpf ogt, %235, %236 : vector<16x8xf32>
    %238 = math.exp %235 : vector<16x8xf32>
    %cst_70 = arith.constant 1.000000e+00 : f32
    %239 = vector.broadcast %cst_70 : f32 to vector<16x8xf32>
    %240 = arith.subf %238, %239 : vector<16x8xf32>
    %241 = arith.select %237, %235, %240 : vector<16x8xi1>, vector<16x8xf32>
    %c16_71 = arith.constant 16 : index
    %c8_72 = arith.constant 8 : index
    %242 = vector.load %arg6[%c16_71, %c8_72] : memref<32x48xf32, #tpu.memory_space<vmem>>, vector<16x8xf32>
    tpu.vector_store %arg6[%c16_71, %c8_72], %241 {strides = array<i32>} : memref<32x48xf32, #tpu.memory_space<vmem>>, vector<16x8xf32>,
    %243 = vector.extract_strided_slice %183 {offsets = [0, 4], sizes = [16, 1], strides = [1, 1]} : vector<16x12xf32> to vector<16x1xf32>
    %244 = vector.extract_strided_slice %184 {offsets = [5, 0], sizes = [1, 16], strides = [1, 1]} : vector<12x16xf32> to vector<1x16xf32>
    %245 = vector.extract_strided_slice %182 {offsets = [0, 16], sizes = [16, 8], strides = [1, 1]} : vector<16x48xf32> to vector<16x8xf32>
    %246 = vector.broadcast %243 : vector<16x1xf32> to vector<16x16xf32>
    %247 = vector.broadcast %244 : vector<1x16xf32> to vector<16x16xf32>
    %248 = arith.addf %246, %247 : vector<16x16xf32>
    %cst_73 = arith.constant 0.000000e+00 : f32
    %249 = vector.broadcast %cst_73 : f32 to vector<16x16xf32>
    %250 = arith.cmpf ogt, %248, %249 : vector<16x16xf32>
    %cst_74 = arith.constant 2.000000e-01 : f32
    %251 = vector.broadcast %cst_74 : f32 to vector<16x16xf32>
    %252 = arith.mulf %251, %248 : vector<16x16xf32>
    %253 = arith.select %250, %248, %252 : vector<16x16xi1>, vector<16x16xf32>
    %cst_75 = arith.constant dense<0xFF800000> : vector<16xf32>
    %254 = vector.multi_reduction <maximumf>, %253, %cst_75 [1] : vector<16x16xf32> to vector<16xf32>
    %255 = vector.shape_cast %254 : vector<16xf32> to vector<16x1xf32>
    %256 = vector.broadcast %255 : vector<16x1xf32> to vector<16x16xf32>
    %257 = arith.subf %253, %256 : vector<16x16xf32>
    %258 = math.exp %257 : vector<16x16xf32>
    %cst_76 = arith.constant dense<0.000000e+00> : vector<16xf32>
    %259 = vector.multi_reduction <add>, %258, %cst_76 [1] : vector<16x16xf32> to vector<16xf32>
    %260 = vector.shape_cast %259 : vector<16xf32> to vector<16x1xf32>
    %261 = tpu.reciprocal %260 {approx = true} : vector<16x1xf32> -> vector<16x1xf32>
    %262 = vector.broadcast %261 : vector<16x1xf32> to vector<16x16xf32>
    %263 = arith.mulf %258, %262 : vector<16x16xf32>
    %cst_77 = arith.constant dense<0.000000e+00> : vector<16x8xf32>
    %264 = tpu.matmul %263, %245, %cst_77 {dimension_numbers = #tpu.dot_dimension_numbers<[1], [0], [0], [1], [0, 0, 1, 1], [], []>} : vector<16x16xf32>, vector<16x8xf32>, vector<16x8xf32> -> vector<16x8xf32>
    %cst_78 = arith.constant 0.000000e+00 : f32
    %265 = vector.broadcast %cst_78 : f32 to vector<16x8xf32>
    %266 = arith.cmpf ogt, %264, %265 : vector<16x8xf32>
    %267 = math.exp %264 : vector<16x8xf32>
    %cst_79 = arith.constant 1.000000e+00 : f32
    %268 = vector.broadcast %cst_79 : f32 to vector<16x8xf32>
    %269 = arith.subf %267, %268 : vector<16x8xf32>
    %270 = arith.select %266, %264, %269 : vector<16x8xi1>, vector<16x8xf32>
    %c16_80 = arith.constant 16 : index
    %c16_81 = arith.constant 16 : index
    %271 = vector.load %arg6[%c16_80, %c16_81] : memref<32x48xf32, #tpu.memory_space<vmem>>, vector<16x8xf32>
    tpu.vector_store %arg6[%c16_80, %c16_81], %270 {strides = array<i32>} : memref<32x48xf32, #tpu.memory_space<vmem>>, vector<16x8xf32>,
    %272 = vector.extract_strided_slice %183 {offsets = [0, 6], sizes = [16, 1], strides = [1, 1]} : vector<16x12xf32> to vector<16x1xf32>
    %273 = vector.extract_strided_slice %184 {offsets = [7, 0], sizes = [1, 16], strides = [1, 1]} : vector<12x16xf32> to vector<1x16xf32>
    %274 = vector.extract_strided_slice %182 {offsets = [0, 24], sizes = [16, 8], strides = [1, 1]} : vector<16x48xf32> to vector<16x8xf32>
    %275 = vector.broadcast %272 : vector<16x1xf32> to vector<16x16xf32>
    %276 = vector.broadcast %273 : vector<1x16xf32> to vector<16x16xf32>
    %277 = arith.addf %275, %276 : vector<16x16xf32>
    %cst_82 = arith.constant 0.000000e+00 : f32
    %278 = vector.broadcast %cst_82 : f32 to vector<16x16xf32>
    %279 = arith.cmpf ogt, %277, %278 : vector<16x16xf32>
    %cst_83 = arith.constant 2.000000e-01 : f32
    %280 = vector.broadcast %cst_83 : f32 to vector<16x16xf32>
    %281 = arith.mulf %280, %277 : vector<16x16xf32>
    %282 = arith.select %279, %277, %281 : vector<16x16xi1>, vector<16x16xf32>
    %cst_84 = arith.constant dense<0xFF800000> : vector<16xf32>
    %283 = vector.multi_reduction <maximumf>, %282, %cst_84 [1] : vector<16x16xf32> to vector<16xf32>
    %284 = vector.shape_cast %283 : vector<16xf32> to vector<16x1xf32>
    %285 = vector.broadcast %284 : vector<16x1xf32> to vector<16x16xf32>
    %286 = arith.subf %282, %285 : vector<16x16xf32>
    %287 = math.exp %286 : vector<16x16xf32>
    %cst_85 = arith.constant dense<0.000000e+00> : vector<16xf32>
    %288 = vector.multi_reduction <add>, %287, %cst_85 [1] : vector<16x16xf32> to vector<16xf32>
    %289 = vector.shape_cast %288 : vector<16xf32> to vector<16x1xf32>
    %290 = tpu.reciprocal %289 {approx = true} : vector<16x1xf32> -> vector<16x1xf32>
    %291 = vector.broadcast %290 : vector<16x1xf32> to vector<16x16xf32>
    %292 = arith.mulf %287, %291 : vector<16x16xf32>
    %cst_86 = arith.constant dense<0.000000e+00> : vector<16x8xf32>
    %293 = tpu.matmul %292, %274, %cst_86 {dimension_numbers = #tpu.dot_dimension_numbers<[1], [0], [0], [1], [0, 0, 1, 1], [], []>} : vector<16x16xf32>, vector<16x8xf32>, vector<16x8xf32> -> vector<16x8xf32>
    %cst_87 = arith.constant 0.000000e+00 : f32
    %294 = vector.broadcast %cst_87 : f32 to vector<16x8xf32>
    %295 = arith.cmpf ogt, %293, %294 : vector<16x8xf32>
    %296 = math.exp %293 : vector<16x8xf32>
    %cst_88 = arith.constant 1.000000e+00 : f32
    %297 = vector.broadcast %cst_88 : f32 to vector<16x8xf32>
    %298 = arith.subf %296, %297 : vector<16x8xf32>
    %299 = arith.select %295, %293, %298 : vector<16x8xi1>, vector<16x8xf32>
    %c16_89 = arith.constant 16 : index
    %c24_90 = arith.constant 24 : index
    %300 = vector.load %arg6[%c16_89, %c24_90] : memref<32x48xf32, #tpu.memory_space<vmem>>, vector<16x8xf32>
    tpu.vector_store %arg6[%c16_89, %c24_90], %299 {strides = array<i32>} : memref<32x48xf32, #tpu.memory_space<vmem>>, vector<16x8xf32>,
    %301 = vector.extract_strided_slice %183 {offsets = [0, 8], sizes = [16, 1], strides = [1, 1]} : vector<16x12xf32> to vector<16x1xf32>
    %302 = vector.extract_strided_slice %184 {offsets = [9, 0], sizes = [1, 16], strides = [1, 1]} : vector<12x16xf32> to vector<1x16xf32>
    %303 = vector.extract_strided_slice %182 {offsets = [0, 32], sizes = [16, 8], strides = [1, 1]} : vector<16x48xf32> to vector<16x8xf32>
    %304 = vector.broadcast %301 : vector<16x1xf32> to vector<16x16xf32>
    %305 = vector.broadcast %302 : vector<1x16xf32> to vector<16x16xf32>
    %306 = arith.addf %304, %305 : vector<16x16xf32>
    %cst_91 = arith.constant 0.000000e+00 : f32
    %307 = vector.broadcast %cst_91 : f32 to vector<16x16xf32>
    %308 = arith.cmpf ogt, %306, %307 : vector<16x16xf32>
    %cst_92 = arith.constant 2.000000e-01 : f32
    %309 = vector.broadcast %cst_92 : f32 to vector<16x16xf32>
    %310 = arith.mulf %309, %306 : vector<16x16xf32>
    %311 = arith.select %308, %306, %310 : vector<16x16xi1>, vector<16x16xf32>
    %cst_93 = arith.constant dense<0xFF800000> : vector<16xf32>
    %312 = vector.multi_reduction <maximumf>, %311, %cst_93 [1] : vector<16x16xf32> to vector<16xf32>
    %313 = vector.shape_cast %312 : vector<16xf32> to vector<16x1xf32>
    %314 = vector.broadcast %313 : vector<16x1xf32> to vector<16x16xf32>
    %315 = arith.subf %311, %314 : vector<16x16xf32>
    %316 = math.exp %315 : vector<16x16xf32>
    %cst_94 = arith.constant dense<0.000000e+00> : vector<16xf32>
    %317 = vector.multi_reduction <add>, %316, %cst_94 [1] : vector<16x16xf32> to vector<16xf32>
    %318 = vector.shape_cast %317 : vector<16xf32> to vector<16x1xf32>
    %319 = tpu.reciprocal %318 {approx = true} : vector<16x1xf32> -> vector<16x1xf32>
    %320 = vector.broadcast %319 : vector<16x1xf32> to vector<16x16xf32>
    %321 = arith.mulf %316, %320 : vector<16x16xf32>
    %cst_95 = arith.constant dense<0.000000e+00> : vector<16x8xf32>
    %322 = tpu.matmul %321, %303, %cst_95 {dimension_numbers = #tpu.dot_dimension_numbers<[1], [0], [0], [1], [0, 0, 1, 1], [], []>} : vector<16x16xf32>, vector<16x8xf32>, vector<16x8xf32> -> vector<16x8xf32>
    %cst_96 = arith.constant 0.000000e+00 : f32
    %323 = vector.broadcast %cst_96 : f32 to vector<16x8xf32>
    %324 = arith.cmpf ogt, %322, %323 : vector<16x8xf32>
    %325 = math.exp %322 : vector<16x8xf32>
    %cst_97 = arith.constant 1.000000e+00 : f32
    %326 = vector.broadcast %cst_97 : f32 to vector<16x8xf32>
    %327 = arith.subf %325, %326 : vector<16x8xf32>
    %328 = arith.select %324, %322, %327 : vector<16x8xi1>, vector<16x8xf32>
    %c16_98 = arith.constant 16 : index
    %c32_99 = arith.constant 32 : index
    %329 = vector.load %arg6[%c16_98, %c32_99] : memref<32x48xf32, #tpu.memory_space<vmem>>, vector<16x8xf32>
    tpu.vector_store %arg6[%c16_98, %c32_99], %328 {strides = array<i32>} : memref<32x48xf32, #tpu.memory_space<vmem>>, vector<16x8xf32>,
    %330 = vector.extract_strided_slice %183 {offsets = [0, 10], sizes = [16, 1], strides = [1, 1]} : vector<16x12xf32> to vector<16x1xf32>
    %331 = vector.extract_strided_slice %184 {offsets = [11, 0], sizes = [1, 16], strides = [1, 1]} : vector<12x16xf32> to vector<1x16xf32>
    %332 = vector.extract_strided_slice %182 {offsets = [0, 40], sizes = [16, 8], strides = [1, 1]} : vector<16x48xf32> to vector<16x8xf32>
    %333 = vector.broadcast %330 : vector<16x1xf32> to vector<16x16xf32>
    %334 = vector.broadcast %331 : vector<1x16xf32> to vector<16x16xf32>
    %335 = arith.addf %333, %334 : vector<16x16xf32>
    %cst_100 = arith.constant 0.000000e+00 : f32
    %336 = vector.broadcast %cst_100 : f32 to vector<16x16xf32>
    %337 = arith.cmpf ogt, %335, %336 : vector<16x16xf32>
    %cst_101 = arith.constant 2.000000e-01 : f32
    %338 = vector.broadcast %cst_101 : f32 to vector<16x16xf32>
    %339 = arith.mulf %338, %335 : vector<16x16xf32>
    %340 = arith.select %337, %335, %339 : vector<16x16xi1>, vector<16x16xf32>
    %cst_102 = arith.constant dense<0xFF800000> : vector<16xf32>
    %341 = vector.multi_reduction <maximumf>, %340, %cst_102 [1] : vector<16x16xf32> to vector<16xf32>
    %342 = vector.shape_cast %341 : vector<16xf32> to vector<16x1xf32>
    %343 = vector.broadcast %342 : vector<16x1xf32> to vector<16x16xf32>
    %344 = arith.subf %340, %343 : vector<16x16xf32>
    %345 = math.exp %344 : vector<16x16xf32>
    %cst_103 = arith.constant dense<0.000000e+00> : vector<16xf32>
    %346 = vector.multi_reduction <add>, %345, %cst_103 [1] : vector<16x16xf32> to vector<16xf32>
    %347 = vector.shape_cast %346 : vector<16xf32> to vector<16x1xf32>
    %348 = tpu.reciprocal %347 {approx = true} : vector<16x1xf32> -> vector<16x1xf32>
    %349 = vector.broadcast %348 : vector<16x1xf32> to vector<16x16xf32>
    %350 = arith.mulf %345, %349 : vector<16x16xf32>
    %cst_104 = arith.constant dense<0.000000e+00> : vector<16x8xf32>
    %351 = tpu.matmul %350, %332, %cst_104 {dimension_numbers = #tpu.dot_dimension_numbers<[1], [0], [0], [1], [0, 0, 1, 1], [], []>} : vector<16x16xf32>, vector<16x8xf32>, vector<16x8xf32> -> vector<16x8xf32>
    %cst_105 = arith.constant 0.000000e+00 : f32
    %352 = vector.broadcast %cst_105 : f32 to vector<16x8xf32>
    %353 = arith.cmpf ogt, %351, %352 : vector<16x8xf32>
    %354 = math.exp %351 : vector<16x8xf32>
    %cst_106 = arith.constant 1.000000e+00 : f32
    %355 = vector.broadcast %cst_106 : f32 to vector<16x8xf32>
    %356 = arith.subf %354, %355 : vector<16x8xf32>
    %357 = arith.select %353, %351, %356 : vector<16x8xi1>, vector<16x8xf32>
    %c16_107 = arith.constant 16 : index
    %c40_108 = arith.constant 40 : index
    %358 = vector.load %arg6[%c16_107, %c40_108] : memref<32x48xf32, #tpu.memory_space<vmem>>, vector<16x8xf32>
    tpu.vector_store %arg6[%c16_107, %c40_108], %357 {strides = array<i32>} : memref<32x48xf32, #tpu.memory_space<vmem>>, vector<16x8xf32>,
    %c0_109 = arith.constant 0 : index
    %c0_110 = arith.constant 0 : index
    %359 = vector.load %arg6[%c0_109, %c0_110] : memref<32x48xf32, #tpu.memory_space<vmem>>, vector<32x48xf32>
    %c0_111 = arith.constant 0 : index
    %c0_112 = arith.constant 0 : index
    %360 = vector.load %arg3[%c0_111, %c0_112] : memref<48x4xf32, #tpu.memory_space<vmem>>, vector<48x4xf32>
    %cst_113 = arith.constant dense<0.000000e+00> : vector<32x4xf32>
    %361 = tpu.matmul %359, %360, %cst_113 {dimension_numbers = #tpu.dot_dimension_numbers<[1], [0], [0], [1], [0, 0, 1, 1], [], []>} : vector<32x48xf32>, vector<48x4xf32>, vector<32x4xf32> -> vector<32x4xf32>
    %c0_114 = arith.constant 0 : index
    %c0_115 = arith.constant 0 : index
    %362 = vector.load %arg4[%c0_114, %c0_115] : memref<4x2xf32, #tpu.memory_space<vmem>>, vector<4x2xf32>
    %cst_116 = arith.constant dense<0.000000e+00> : vector<32x2xf32>
    %363 = tpu.matmul %361, %362, %cst_116 {dimension_numbers = #tpu.dot_dimension_numbers<[1], [0], [0], [1], [0, 0, 1, 1], [], []>} : vector<32x4xf32>, vector<4x2xf32>, vector<32x2xf32> -> vector<32x2xf32>
    %364 = vector.extract_strided_slice %361 {offsets = [0, 0], sizes = [16, 4], strides = [1, 1]} : vector<32x4xf32> to vector<16x4xf32>
    %365 = vector.extract_strided_slice %363 {offsets = [0, 0], sizes = [16, 2], strides = [1, 1]} : vector<32x2xf32> to vector<16x2xf32>
    %366 = tpu.transpose %365, [1, 0] : vector<16x2xf32> -> vector<2x16xf32>
    %367 = vector.extract_strided_slice %365 {offsets = [0, 0], sizes = [16, 1], strides = [1, 1]} : vector<16x2xf32> to vector<16x1xf32>
    %368 = vector.extract_strided_slice %366 {offsets = [1, 0], sizes = [1, 16], strides = [1, 1]} : vector<2x16xf32> to vector<1x16xf32>
    %369 = vector.broadcast %367 : vector<16x1xf32> to vector<16x16xf32>
    %370 = vector.broadcast %368 : vector<1x16xf32> to vector<16x16xf32>
    %371 = arith.addf %369, %370 : vector<16x16xf32>
    %cst_117 = arith.constant 0.000000e+00 : f32
    %372 = vector.broadcast %cst_117 : f32 to vector<16x16xf32>
    %373 = arith.cmpf ogt, %371, %372 : vector<16x16xf32>
    %cst_118 = arith.constant 2.000000e-01 : f32
    %374 = vector.broadcast %cst_118 : f32 to vector<16x16xf32>
    %375 = arith.mulf %374, %371 : vector<16x16xf32>
    %376 = arith.select %373, %371, %375 : vector<16x16xi1>, vector<16x16xf32>
    %cst_119 = arith.constant dense<0xFF800000> : vector<16xf32>
    %377 = vector.multi_reduction <maximumf>, %376, %cst_119 [1] : vector<16x16xf32> to vector<16xf32>
    %378 = vector.shape_cast %377 : vector<16xf32> to vector<16x1xf32>
    %379 = vector.broadcast %378 : vector<16x1xf32> to vector<16x16xf32>
    %380 = arith.subf %376, %379 : vector<16x16xf32>
    %381 = math.exp %380 : vector<16x16xf32>
    %cst_120 = arith.constant dense<0.000000e+00> : vector<16xf32>
    %382 = vector.multi_reduction <add>, %381, %cst_120 [1] : vector<16x16xf32> to vector<16xf32>
    %383 = vector.shape_cast %382 : vector<16xf32> to vector<16x1xf32>
    %384 = tpu.reciprocal %383 {approx = true} : vector<16x1xf32> -> vector<16x1xf32>
    %385 = vector.broadcast %384 : vector<16x1xf32> to vector<16x16xf32>
    %386 = arith.mulf %381, %385 : vector<16x16xf32>
    %cst_121 = arith.constant dense<0.000000e+00> : vector<16x4xf32>
    %387 = tpu.matmul %386, %364, %cst_121 {dimension_numbers = #tpu.dot_dimension_numbers<[1], [0], [0], [1], [0, 0, 1, 1], [], []>} : vector<16x16xf32>, vector<16x4xf32>, vector<16x4xf32> -> vector<16x4xf32>
    %cst_122 = arith.constant 0.000000e+00 : f32
    %388 = vector.broadcast %cst_122 : f32 to vector<16x4xf32>
    %389 = arith.cmpf ogt, %387, %388 : vector<16x4xf32>
    %390 = math.exp %387 : vector<16x4xf32>
    %cst_123 = arith.constant 1.000000e+00 : f32
    %391 = vector.broadcast %cst_123 : f32 to vector<16x4xf32>
    %392 = arith.subf %390, %391 : vector<16x4xf32>
    %393 = arith.select %389, %387, %392 : vector<16x4xi1>, vector<16x4xf32>
    %c0_124 = arith.constant 0 : index
    %c0_125 = arith.constant 0 : index
    %394 = vector.load %arg5[%c0_124, %c0_125] : memref<32x4xf32, #tpu.memory_space<vmem>>, vector<16x4xf32>
    tpu.vector_store %arg5[%c0_124, %c0_125], %393 {strides = array<i32>} : memref<32x4xf32, #tpu.memory_space<vmem>>, vector<16x4xf32>,
    %395 = vector.extract_strided_slice %361 {offsets = [16, 0], sizes = [16, 4], strides = [1, 1]} : vector<32x4xf32> to vector<16x4xf32>
    %396 = vector.extract_strided_slice %363 {offsets = [16, 0], sizes = [16, 2], strides = [1, 1]} : vector<32x2xf32> to vector<16x2xf32>
    %397 = tpu.transpose %396, [1, 0] : vector<16x2xf32> -> vector<2x16xf32>
    %398 = vector.extract_strided_slice %396 {offsets = [0, 0], sizes = [16, 1], strides = [1, 1]} : vector<16x2xf32> to vector<16x1xf32>
    %399 = vector.extract_strided_slice %397 {offsets = [1, 0], sizes = [1, 16], strides = [1, 1]} : vector<2x16xf32> to vector<1x16xf32>
    %400 = vector.broadcast %398 : vector<16x1xf32> to vector<16x16xf32>
    %401 = vector.broadcast %399 : vector<1x16xf32> to vector<16x16xf32>
    %402 = arith.addf %400, %401 : vector<16x16xf32>
    %cst_126 = arith.constant 0.000000e+00 : f32
    %403 = vector.broadcast %cst_126 : f32 to vector<16x16xf32>
    %404 = arith.cmpf ogt, %402, %403 : vector<16x16xf32>
    %cst_127 = arith.constant 2.000000e-01 : f32
    %405 = vector.broadcast %cst_127 : f32 to vector<16x16xf32>
    %406 = arith.mulf %405, %402 : vector<16x16xf32>
    %407 = arith.select %404, %402, %406 : vector<16x16xi1>, vector<16x16xf32>
    %cst_128 = arith.constant dense<0xFF800000> : vector<16xf32>
    %408 = vector.multi_reduction <maximumf>, %407, %cst_128 [1] : vector<16x16xf32> to vector<16xf32>
    %409 = vector.shape_cast %408 : vector<16xf32> to vector<16x1xf32>
    %410 = vector.broadcast %409 : vector<16x1xf32> to vector<16x16xf32>
    %411 = arith.subf %407, %410 : vector<16x16xf32>
    %412 = math.exp %411 : vector<16x16xf32>
    %cst_129 = arith.constant dense<0.000000e+00> : vector<16xf32>
    %413 = vector.multi_reduction <add>, %412, %cst_129 [1] : vector<16x16xf32> to vector<16xf32>
    %414 = vector.shape_cast %413 : vector<16xf32> to vector<16x1xf32>
    %415 = tpu.reciprocal %414 {approx = true} : vector<16x1xf32> -> vector<16x1xf32>
    %416 = vector.broadcast %415 : vector<16x1xf32> to vector<16x16xf32>
    %417 = arith.mulf %412, %416 : vector<16x16xf32>
    %cst_130 = arith.constant dense<0.000000e+00> : vector<16x4xf32>
    %418 = tpu.matmul %417, %395, %cst_130 {dimension_numbers = #tpu.dot_dimension_numbers<[1], [0], [0], [1], [0, 0, 1, 1], [], []>} : vector<16x16xf32>, vector<16x4xf32>, vector<16x4xf32> -> vector<16x4xf32>
    %cst_131 = arith.constant 0.000000e+00 : f32
    %419 = vector.broadcast %cst_131 : f32 to vector<16x4xf32>
    %420 = arith.cmpf ogt, %418, %419 : vector<16x4xf32>
    %421 = math.exp %418 : vector<16x4xf32>
    %cst_132 = arith.constant 1.000000e+00 : f32
    %422 = vector.broadcast %cst_132 : f32 to vector<16x4xf32>
    %423 = arith.subf %421, %422 : vector<16x4xf32>
    %424 = arith.select %420, %418, %423 : vector<16x4xi1>, vector<16x4xf32>
    %c16_133 = arith.constant 16 : index
    %c0_134 = arith.constant 0 : index
    %425 = vector.load %arg5[%c16_133, %c0_134] : memref<32x4xf32, #tpu.memory_space<vmem>>, vector<16x4xf32>
    tpu.vector_store %arg5[%c16_133, %c0_134], %424 {strides = array<i32>} : memref<32x4xf32, #tpu.memory_space<vmem>>, vector<16x4xf32>,
    return
  }
}

</mosaic_0001>

<llo_original>
// kernel: tpu_custom_call.1
$region0: #{tpu_custom_call.1}
  #allocation0 [shape = 'u32[]', space=smem, size = 0x4, offset = 0x4, fixed_abs, tag = 'smem constant byte address 0x4 - core index']
  #allocation1 [shape = 'u32[144,128]{1,0:T(1,128)}', space=vmem, size = 0x12000, scoped, tag = 'internal scratch']
  #allocation2 [shape = 'f32[32,48]{1,0:T(8,128)}', space=vmem, size = 0x4000, scoped, tag = 'scratch operand']
  %s0 = inlined_call_operand.vmem [shape: f32[32,4], index: 0, kind: input, shape index: {}]
  %s1 = inlined_call_operand.vmem [shape: f32[4,48], index: 1, kind: input, shape index: {}]
  %s2 = inlined_call_operand.vmem [shape: f32[48,12], index: 2, kind: input, shape index: {}]
  %s3 = inlined_call_operand.vmem [shape: f32[48,4], index: 3, kind: input, shape index: {}]
  %s4 = inlined_call_operand.vmem [shape: f32[4,2], index: 4, kind: input, shape index: {}]
  %s5 = inlined_call_operand.vmem [shape: f32[32,4], index: 5, kind: output, shape index: {}]
  %s6 = sld [smem:[#allocation0]]
  $region30: #{tpu_custom_call.1} parent=0
    _
  %s8 = ssub.s32 1, %s6
  %s9 = scalar_select 0, %s8, %s6
  // Predicated region
  $region2: #{tpu_custom_call.1} parent=0 // pred_check
    _
  $region3: #{tpu_custom_call.1} parent=0 // pred_check_branch
    %11 = sbr.rel (0) target = $region5
  $region4: #{tpu_custom_call.1} parent=0 // pred_region
    _
  $region5: #{tpu_custom_call.1} parent=0 // pred_fallthru
    _
  // Predicated region
  $region6: #{tpu_custom_call.1} parent=0 // pred_check
    _
  $region7: #{tpu_custom_call.1} parent=0 // pred_check_branch
    %13 = sbr.rel (0) target = $region9
  $region8: #{tpu_custom_call.1} parent=0 // pred_region
    _
  $region9: #{tpu_custom_call.1} parent=0 // pred_fallthru
    _
  // Predicated region
  $region10: #{tpu_custom_call.1} parent=0 // pred_check
    _
  $region11: #{tpu_custom_call.1} parent=0 // pred_check_branch
    %15 = sbr.rel (0) target = $region13
  $region12: #{tpu_custom_call.1} parent=0 // pred_region
    _
  $region13: #{tpu_custom_call.1} parent=0 // pred_fallthru
    _
  // Predicated region
  $region14: #{tpu_custom_call.1} parent=0 // pred_check
    _
  $region15: #{tpu_custom_call.1} parent=0 // pred_check_branch
    %17 = sbr.rel (0) target = $region17
  $region16: #{tpu_custom_call.1} parent=0 // pred_region
    _
  $region17: #{tpu_custom_call.1} parent=0 // pred_fallthru
    _
  // Predicated region
  $region18: #{tpu_custom_call.1} parent=0 // pred_check
    _
  $region19: #{tpu_custom_call.1} parent=0 // pred_check_branch
    %19 = sbr.rel (0) target = $region21
  $region20: #{tpu_custom_call.1} parent=0 // pred_region
    _
  $region21: #{tpu_custom_call.1} parent=0 // pred_fallthru
    _
  %v20 = vld [vmem:[%s0] sm:$0xff]
  %v21 = vld [vmem:[%s0 + $0x8] sm:$0xff]
  %v22 = vld [vmem:[%s0 + $0x10] sm:$0xff]
  %v23 = vld [vmem:[%s0 + $0x18] sm:$0xff]
  %v24 = vld [vmem:[%s1] sm:$0xf]
  %vm25 = vcmask 31744
  %v27 = vsel %vm25, %v20, 0
  %v30 = vsel %vm25, %v21, 0
  %v33 = vsel %vm25, %v22, 0
  %v36 = vsel %vm25, %v23, 0
  %vm38 = vcmask 1043456
  %v40 = vsel %vm38, %v24, 0
  %42 = vmatprep.subr.mxu0 0.0
  %43 = vmatpush1.msra.mxu0 0.0
  %44 = vmatprep.subr.mxu0 0.0
  %45 = vmatpush1.msra.mxu0 0.0
  %46 = vmatprep.subr.mxu0 0.0
  %47 = vmatpush1.msra.mxu0 0.0
  %48 = vmatprep.subr.mxu0 0.0
  %49 = vmatpush1.msra.mxu0 0.0
  %50 = vmatprep.subr.mxu0 0.0
  %51 = vmatpush1.msra.mxu0 0.0
  %52 = vmatprep.subr.mxu0 0.0
  %53 = vmatpush1.msra.mxu0 0.0
  %54 = vmatprep.subr.mxu0 0.0
  %55 = vmatpush1.msra.mxu0 0.0
  %56 = vmatprep.subr.mxu0 0.0
  %57 = vmatpush1.msra.mxu0 0.0
  %58 = vmatprep.subr.mxu0 0.0
  %59 = vmatpush1.msra.mxu0 0.0
  %60 = vmatprep.subr.mxu0 0.0
  %61 = vmatpush1.msra.mxu0 0.0
  %62 = vmatprep.subr.mxu0 0.0
  %63 = vmatpush1.msra.mxu0 0.0
  %64 = vmatprep.subr.mxu0 0.0
  %65 = vmatpush1.msra.mxu0 0.0
  %66 = vmatprep.subr.mxu0 0.0
  %67 = vmatpush1.msra.mxu0 0.0
  %68 = vmatprep.subr.mxu0 0.0
  %69 = vmatpush1.msra.mxu0 0.0
  %70 = vmatprep.subr.mxu0 0.0
  %71 = vmatpush1.msra.mxu0 0.0
  %72 = vmatprep.subr.mxu0 0.0
  %73 = vmatpush1.msra.mxu0 %v40
  %74 = vmatprep.subr.mxu0 0.0
  %75 = vmatpush2.msra.mxu0 0.0
  %76 = vmatprep.subr.mxu0 0.0
  %77 = vmatpush2.msra.mxu0 0.0
  %78 = vmatprep.subr.mxu0 0.0
  %79 = vmatpush2.msra.mxu0 0.0
  %80 = vmatprep.subr.mxu0 0.0
  %81 = vmatpush2.msra.mxu0 0.0
  %82 = vmatprep.subr.mxu0 0.0
  %83 = vmatpush2.msra.mxu0 0.0
  %84 = vmatprep.subr.mxu0 0.0
  %85 = vmatpush2.msra.mxu0 0.0
  %86 = vmatprep.subr.mxu0 0.0
  %87 = vmatpush2.msra.mxu0 0.0
  %88 = vmatprep.subr.mxu0 0.0
  %89 = vmatpush2.msra.mxu0 0.0
  %90 = vmatprep.subr.mxu0 0.0
  %91 = vmatpush2.msra.mxu0 0.0
  %92 = vmatprep.subr.mxu0 0.0
  %93 = vmatpush2.msra.mxu0 0.0
  %94 = vmatprep.subr.mxu0 0.0
  %95 = vmatpush2.msra.mxu0 0.0
  %96 = vmatprep.subr.mxu0 0.0
  %97 = vmatpush2.msra.mxu0 0.0
  %98 = vmatprep.subr.mxu0 0.0
  %99 = vmatpush2.msra.mxu0 0.0
  %100 = vmatprep.subr.mxu0 0.0
  %101 = vmatpush2.msra.mxu0 0.0
  %102 = vmatprep.subr.mxu0 0.0
  %103 = vmatpush2.msra.mxu0 0.0
  %104 = vmatprep.subr.mxu0 0.0
  %105 = vmatpush2.msra.mxu0 0.0
  %106 = vmatprep.mubr.f32.mxu0 0.0
  %107 = vmatmul.mubr.f32.gmra.mxu0 %v27
  %v108 = vpop.f32.mrf.mxu0
  %v109 = vadd.f32 0.0, %v108
  %v110 = vpop.f32.mrf.mxu0
  %111 = vmatprep.mubr.f32.mxu0 0.0
  %112 = vmatmul.mubr.f32.gmra.mxu0 %v30
  %v113 = vpop.f32.mrf.mxu0
  %v114 = vadd.f32 0.0, %v113
  %v115 = vpop.f32.mrf.mxu0
  %116 = vmatprep.mubr.f32.mxu0 0.0
  %117 = vmatmul.mubr.f32.gmra.mxu0 %v33
  %v118 = vpop.f32.mrf.mxu0
  %v119 = vadd.f32 0.0, %v118
  %v120 = vpop.f32.mrf.mxu0
  %121 = vmatprep.mubr.f32.mxu0 0.0
  %122 = vmatmul.mubr.f32.gmra.mxu0 %v36
  %v123 = vpop.f32.mrf.mxu0
  %v124 = vadd.f32 0.0, %v123
  %v125 = vpop.f32.mrf.mxu0
  %126 = vdwg.mxu0
  %v127 = vld [vmem:[%s2] sm:$0xff]
  %v128 = vld [vmem:[%s2 + $0x8] sm:$0xff]
  %v129 = vld [vmem:[%s2 + $0x10] sm:$0xff]
  %v130 = vld [vmem:[%s2 + $0x18] sm:$0xff]
  %v131 = vld [vmem:[%s2 + $0x20] sm:$0xff]
  %v132 = vld [vmem:[%s2 + $0x28] sm:$0xff]
  %vm133 = vcmask 392192
  %v135 = vsel %vm133, %v109, 0
  %v138 = vsel %vm133, %v114, 0
  %v141 = vsel %vm133, %v119, 0
  %v144 = vsel %vm133, %v124, 0
  %146 = vmatprep.subr.mxu0 0.0
  %147 = vmatpush1.msra.mxu0 0.0
  %148 = vmatprep.subr.mxu0 0.0
  %149 = vmatpush1.msra.mxu0 0.0
  %150 = vmatprep.subr.mxu0 0.0
  %151 = vmatpush1.msra.mxu0 0.0
  %152 = vmatprep.subr.mxu0 0.0
  %153 = vmatpush1.msra.mxu0 0.0
  %154 = vmatprep.subr.mxu0 0.0
  %155 = vmatpush1.msra.mxu0 0.0
  %156 = vmatprep.subr.mxu0 0.0
  %157 = vmatpush1.msra.mxu0 0.0
  %158 = vmatprep.subr.mxu0 0.0
  %159 = vmatpush1.msra.mxu0 0.0
  %160 = vmatprep.subr.mxu0 0.0
  %161 = vmatpush1.msra.mxu0 0.0
  %162 = vmatprep.subr.mxu0 0.0
  %163 = vmatpush1.msra.mxu0 0.0
  %164 = vmatprep.subr.mxu0 0.0
  %165 = vmatpush1.msra.mxu0 0.0
  %166 = vmatprep.subr.mxu0 0.0
  %167 = vmatpush1.msra.mxu0 %v132
  %168 = vmatprep.subr.mxu0 0.0
  %169 = vmatpush1.msra.mxu0 %v131
  %170 = vmatprep.subr.mxu0 0.0
  %171 = vmatpush1.msra.mxu0 %v130
  %172 = vmatprep.subr.mxu0 0.0
  %173 = vmatpush1.msra.mxu0 %v129
  %174 = vmatprep.subr.mxu0 0.0
  %175 = vmatpush1.msra.mxu0 %v128
  %176 = vmatprep.subr.mxu0 0.0
  %177 = vmatpush1.msra.mxu0 %v127
  %178 = vmatprep.subr.mxu0 0.0
  %179 = vmatpush2.msra.mxu0 0.0
  %180 = vmatprep.subr.mxu0 0.0
  %181 = vmatpush2.msra.mxu0 0.0
  %182 = vmatprep.subr.mxu0 0.0
  %183 = vmatpush2.msra.mxu0 0.0
  %184 = vmatprep.subr.mxu0 0.0
  %185 = vmatpush2.msra.mxu0 0.0
  %186 = vmatprep.subr.mxu0 0.0
  %187 = vmatpush2.msra.mxu0 0.0
  %188 = vmatprep.subr.mxu0 0.0
  %189 = vmatpush2.msra.mxu0 0.0
  %190 = vmatprep.subr.mxu0 0.0
  %191 = vmatpush2.msra.mxu0 0.0
  %192 = vmatprep.subr.mxu0 0.0
  %193 = vmatpush2.msra.mxu0 0.0
  %194 = vmatprep.subr.mxu0 0.0
  %195 = vmatpush2.msra.mxu0 0.0
  %196 = vmatprep.subr.mxu0 0.0
  %197 = vmatpush2.msra.mxu0 0.0
  %198 = vmatprep.subr.mxu0 0.0
  %199 = vmatpush2.msra.mxu0 0.0
  %200 = vmatprep.subr.mxu0 0.0
  %201 = vmatpush2.msra.mxu0 0.0
  %202 = vmatprep.subr.mxu0 0.0
  %203 = vmatpush2.msra.mxu0 0.0
  %204 = vmatprep.subr.mxu0 0.0
  %205 = vmatpush2.msra.mxu0 0.0
  %206 = vmatprep.subr.mxu0 0.0
  %207 = vmatpush2.msra.mxu0 0.0
  %208 = vmatprep.subr.mxu0 0.0
  %209 = vmatpush2.msra.mxu0 0.0
  %210 = vmatprep.mubr.f32.mxu0 0.0
  %211 = vmatmul.mubr.f32.gmra.mxu0 %v135
  %v212 = vpop.f32.mrf.mxu0
  %v213 = vadd.f32 0.0, %v212
  %v214 = vpop.f32.mrf.mxu0
  %215 = vmatprep.mubr.f32.mxu0 0.0
  %216 = vmatmul.mubr.f32.gmra.mxu0 %v138
  %v217 = vpop.f32.mrf.mxu0
  %v218 = vadd.f32 0.0, %v217
  %v219 = vpop.f32.mrf.mxu0
  %220 = vmatprep.mubr.f32.mxu0 0.0
  %221 = vmatmul.mubr.f32.gmra.mxu0 %v141
  %v222 = vpop.f32.mrf.mxu0
  %v223 = vadd.f32 0.0, %v222
  %v224 = vpop.f32.mrf.mxu0
  %225 = vmatprep.mubr.f32.mxu0 0.0
  %226 = vmatmul.mubr.f32.gmra.mxu0 %v144
  %v227 = vpop.f32.mrf.mxu0
  %v228 = vadd.f32 0.0, %v227
  %v229 = vpop.f32.mrf.mxu0
  %230 = vdwg.mxu0
  %231 = vxpose.xlu0.b32.start [1/16] %v213, 128
  %232 = vxpose.xlu0.b32.cont [2/16] %v218, 128
  %233 = vxpose.xlu0.b32.cont [3/16] 0.0, 128
  %234 = vxpose.xlu0.b32.cont [4/16] 0.0, 128
  %235 = vxpose.xlu0.b32.cont [5/16] 0.0, 128
  %236 = vxpose.xlu0.b32.cont [6/16] 0.0, 128
  %237 = vxpose.xlu0.b32.cont [7/16] 0.0, 128
  %238 = vxpose.xlu0.b32.cont [8/16] 0.0, 128
  %239 = vxpose.xlu0.b32.cont [9/16] 0.0, 128
  %240 = vxpose.xlu0.b32.cont [10/16] 0.0, 128
  %241 = vxpose.xlu0.b32.cont [11/16] 0.0, 128
  %242 = vxpose.xlu0.b32.cont [12/16] 0.0, 128
  %243 = vxpose.xlu0.b32.cont [13/16] 0.0, 128
  %244 = vxpose.xlu0.b32.cont [14/16] 0.0, 128
  %245 = vxpose.xlu0.b32.cont [15/16] 0.0, 128
  %246 = vxpose.xlu0.b32.end [16/16] 0.0, 128
  %v247 = vpop.trf.xlu0
  %v248 = vpop.trf.xlu0
  %v249 = vpop.trf.xlu0
  %v250 = vpop.trf.xlu0
  %v251 = vpop.trf.xlu0
  %v252 = vpop.trf.xlu0
  %v253 = vpop.trf.xlu0
  %v254 = vpop.trf.xlu0
  %v255 = vpop.trf.xlu0
  %v256 = vpop.trf.xlu0
  %v257 = vpop.trf.xlu0
  %v258 = vpop.trf.xlu0
  %v259 = vpop.trf.xlu0
  %v260 = vpop.trf.xlu0
  %v261 = vpop.trf.xlu0
  %v262 = vpop.trf.xlu0
  %264 = vset.pattern.permute.xlu0 0
  %265 = vperm.xlu0 %264, %v213
  %v266 = vpop.permute.xlu0 %265
  %269 = vset.pattern.permute.xlu0 0
  %270 = vperm.xlu0 %269, %v218
  %v271 = vpop.permute.xlu0 %270
  %v273 = vlaneseq
  %v274 = vshrl.u32 %v273, 7
  %v275 = vsub.s32 1, %v274
  %v276 = vrot.slane %v247, %v275
  %v277 = vadd.f32 %v266, %v276
  %v278 = vadd.f32 %v271, %v276
  %vm279 = vcmp.gt.f32.partialorder %v277, 0.0
  %vm280 = vcmp.gt.f32.partialorder %v278, 0.0
  %v281 = vmul.f32 %v277, 0.2
  %v282 = vmul.f32 %v278, 0.2
  %v283 = vsel %vm279, %v277, %v281
  %v284 = vsel %vm280, %v278, %v282
  %vm285 = vcmask 130048
  %v286 = vsel %vm285, %v283, -inf
  %287 = vmax.xlane.f32.xlu0 %v286
  %v288 = vpop.xlane.xlu0 %287
  %v289 = vsel %vm285, %v284, -inf
  %290 = vmax.xlane.f32.xlu0 %v289
  %v291 = vpop.xlane.xlu0 %290
  %v292 = vsub.f32 %v283, %v288
  %v293 = vsub.f32 %v284, %v291
  %v294 = vmul.f32 %v292, 1.442695
  %v295 = vpow.pop %v294
  %v296 = vmul.f32 %v293, 1.442695
  %v297 = vpow.pop %v296
  %v298 = vsel %vm285, %v295, 0.0
  %299 = vadd.xlane.f32.xlu0 %v298
  %v300 = vpop.xlane.xlu0 %299
  %v301 = vsel %vm285, %v297, 0.0
  %302 = vadd.xlane.f32.xlu0 %v301
  %v303 = vpop.xlane.xlu0 %302
  %v304 = vrcp.pop %v300
  %v305 = vrcp.pop %v303
  %v306 = vmul.f32 %v295, %v304
  %v307 = vmul.f32 %v297, %v305
  %v309 = vsel %vm285, %v306, 0
  %v312 = vsel %vm285, %v307, 0
  %314 = vmatprep.subr.mxu0 0.0
  %315 = vmatpush1.msra.mxu0 0.0
  %316 = vmatprep.subr.mxu0 0.0
  %317 = vmatpush1.msra.mxu0 0.0
  %318 = vmatprep.subr.mxu0 0.0
  %319 = vmatpush1.msra.mxu0 0.0
  %320 = vmatprep.subr.mxu0 0.0
  %321 = vmatpush1.msra.mxu0 0.0
  %322 = vmatprep.subr.mxu0 0.0
  %323 = vmatpush1.msra.mxu0 0.0
  %324 = vmatprep.subr.mxu0 0.0
  %325 = vmatpush1.msra.mxu0 0.0
  %326 = vmatprep.subr.mxu0 0.0
  %327 = vmatpush1.msra.mxu0 0.0
  %328 = vmatprep.subr.mxu0 0.0
  %329 = vmatpush1.msra.mxu0 0.0
  %330 = vmatprep.subr.mxu0 0.0
  %331 = vmatpush1.msra.mxu0 0.0
  %332 = vmatprep.subr.mxu0 0.0
  %333 = vmatpush1.msra.mxu0 0.0
  %334 = vmatprep.subr.mxu0 0.0
  %335 = vmatpush1.msra.mxu0 0.0
  %336 = vmatprep.subr.mxu0 0.0
  %337 = vmatpush1.msra.mxu0 0.0
  %338 = vmatprep.subr.mxu0 0.0
  %339 = vmatpush1.msra.mxu0 0.0
  %340 = vmatprep.subr.mxu0 0.0
  %341 = vmatpush1.msra.mxu0 0.0
  %342 = vmatprep.subr.mxu0 0.0
  %343 = vmatpush1.msra.mxu0 %v114
  %344 = vmatprep.subr.mxu0 0.0
  %345 = vmatpush1.msra.mxu0 %v109
  %346 = vmatprep.subr.mxu0 0.0
  %347 = vmatpush2.msra.mxu0 0.0
  %348 = vmatprep.subr.mxu0 0.0
  %349 = vmatpush2.msra.mxu0 0.0
  %350 = vmatprep.subr.mxu0 0.0
  %351 = vmatpush2.msra.mxu0 0.0
  %352 = vmatprep.subr.mxu0 0.0
  %353 = vmatpush2.msra.mxu0 0.0
  %354 = vmatprep.subr.mxu0 0.0
  %355 = vmatpush2.msra.mxu0 0.0
  %356 = vmatprep.subr.mxu0 0.0
  %357 = vmatpush2.msra.mxu0 0.0
  %358 = vmatprep.subr.mxu0 0.0
  %359 = vmatpush2.msra.mxu0 0.0
  %360 = vmatprep.subr.mxu0 0.0
  %361 = vmatpush2.msra.mxu0 0.0
  %362 = vmatprep.subr.mxu0 0.0
  %363 = vmatpush2.msra.mxu0 0.0
  %364 = vmatprep.subr.mxu0 0.0
  %365 = vmatpush2.msra.mxu0 0.0
  %366 = vmatprep.subr.mxu0 0.0
  %367 = vmatpush2.msra.mxu0 0.0
  %368 = vmatprep.subr.mxu0 0.0
  %369 = vmatpush2.msra.mxu0 0.0
  %370 = vmatprep.subr.mxu0 0.0
  %371 = vmatpush2.msra.mxu0 0.0
  %372 = vmatprep.subr.mxu0 0.0
  %373 = vmatpush2.msra.mxu0 0.0
  %374 = vmatprep.subr.mxu0 0.0
  %375 = vmatpush2.msra.mxu0 0.0
  %376 = vmatprep.subr.mxu0 0.0
  %377 = vmatpush2.msra.mxu0 0.0
  %378 = vmatprep.mubr.f32.mxu0 0.0
  %379 = vmatmul.mubr.f32.gmra.mxu0 %v309
  %v380 = vpop.f32.mrf.mxu0
  %v381 = vadd.f32 0.0, %v380
  %v382 = vpop.f32.mrf.mxu0
  %383 = vmatprep.mubr.f32.mxu0 0.0
  %384 = vmatmul.mubr.f32.gmra.mxu0 %v312
  %v385 = vpop.f32.mrf.mxu0
  %v386 = vadd.f32 0.0, %v385
  %v387 = vpop.f32.mrf.mxu0
  %388 = vdwg.mxu0
  %vm389 = vcmp.gt.f32.partialorder %v381, 0.0
  %vm390 = vcmp.gt.f32.partialorder %v386, 0.0
  %v391 = vmul.f32 %v381, 1.442695
  %v392 = vpow.pop %v391
  %v393 = vmul.f32 %v386, 1.442695
  %v394 = vpow.pop %v393
  %v395 = vsub.f32 %v392, 1.0
  %v396 = vsub.f32 %v394, 1.0
  %v397 = vsel %vm389, %v381, %v395
  %v398 = vsel %vm390, %v386, %v396
  %vm399 = vcmask 64512
  %400 = vst.msk [vmem:[#allocation2] sm:$0xff] %vm399, %v397
  %401 = vst.msk [vmem:[#allocation2 + $0x8] sm:$0xff] %vm399, %v398
  %402 = vset.pattern.permute.xlu0 2
  %403 = vperm.xlu0 %402, %v213
  %v404 = vpop.permute.xlu0 %403
  %406 = vset.pattern.permute.xlu0 2
  %407 = vperm.xlu0 %406, %v218
  %v408 = vpop.permute.xlu0 %407
  %v410 = vlaneseq
  %v411 = vshrl.u32 %v410, 7
  %v412 = vsub.s32 3, %v411
  %v413 = vrot.slane %v247, %v412
  %v414 = vadd.f32 %v404, %v413
  %v415 = vadd.f32 %v408, %v413
  %vm416 = vcmp.gt.f32.partialorder %v414, 0.0
  %vm417 = vcmp.gt.f32.partialorder %v415, 0.0
  %v418 = vmul.f32 %v414, 0.2
  %v419 = vmul.f32 %v415, 0.2
  %v420 = vsel %vm416, %v414, %v418
  %v421 = vsel %vm417, %v415, %v419
  %v422 = vsel %vm285, %v420, -inf
  %423 = vmax.xlane.f32.xlu0 %v422
  %v424 = vpop.xlane.xlu0 %423
  %v425 = vsel %vm285, %v421, -inf
  %426 = vmax.xlane.f32.xlu0 %v425
  %v427 = vpop.xlane.xlu0 %426
  %v428 = vsub.f32 %v420, %v424
  %v429 = vsub.f32 %v421, %v427
  %v430 = vmul.f32 %v428, 1.442695
  %v431 = vpow.pop %v430
  %v432 = vmul.f32 %v429, 1.442695
  %v433 = vpow.pop %v432
  %v434 = vsel %vm285, %v431, 0.0
  %435 = vadd.xlane.f32.xlu0 %v434
  %v436 = vpop.xlane.xlu0 %435
  %v437 = vsel %vm285, %v433, 0.0
  %438 = vadd.xlane.f32.xlu0 %v437
  %v439 = vpop.xlane.xlu0 %438
  %v440 = vrcp.pop %v436
  %v441 = vrcp.pop %v439
  %v442 = vmul.f32 %v431, %v440
  %v443 = vmul.f32 %v433, %v441
  %444 = vrot.lane.b32.xlu0 %v109, 120
  %v445 = vpop.permute.xlu0 %444
  %446 = vrot.lane.b32.xlu0 %v114, 120
  %v447 = vpop.permute.xlu0 %446
  %v451 = vsel %vm285, %v442, 0
  %v454 = vsel %vm285, %v443, 0
  %456 = vmatprep.subr.mxu0 0.0
  %457 = vmatpush1.msra.mxu0 0.0
  %458 = vmatprep.subr.mxu0 0.0
  %459 = vmatpush1.msra.mxu0 0.0
  %460 = vmatprep.subr.mxu0 0.0
  %461 = vmatpush1.msra.mxu0 0.0
  %462 = vmatprep.subr.mxu0 0.0
  %463 = vmatpush1.msra.mxu0 0.0
  %464 = vmatprep.subr.mxu0 0.0
  %465 = vmatpush1.msra.mxu0 0.0
  %466 = vmatprep.subr.mxu0 0.0
  %467 = vmatpush1.msra.mxu0 0.0
  %468 = vmatprep.subr.mxu0 0.0
  %469 = vmatpush1.msra.mxu0 0.0
  %470 = vmatprep.subr.mxu0 0.0
  %471 = vmatpush1.msra.mxu0 0.0
  %472 = vmatprep.subr.mxu0 0.0
  %473 = vmatpush1.msra.mxu0 0.0
  %474 = vmatprep.subr.mxu0 0.0
  %475 = vmatpush1.msra.mxu0 0.0
  %476 = vmatprep.subr.mxu0 0.0
  %477 = vmatpush1.msra.mxu0 0.0
  %478 = vmatprep.subr.mxu0 0.0
  %479 = vmatpush1.msra.mxu0 0.0
  %480 = vmatprep.subr.mxu0 0.0
  %481 = vmatpush1.msra.mxu0 0.0
  %482 = vmatprep.subr.mxu0 0.0
  %483 = vmatpush1.msra.mxu0 0.0
  %484 = vmatprep.subr.mxu0 0.0
  %485 = vmatpush1.msra.mxu0 %v447
  %486 = vmatprep.subr.mxu0 0.0
  %487 = vmatpush1.msra.mxu0 %v445
  %488 = vmatprep.subr.mxu0 0.0
  %489 = vmatpush2.msra.mxu0 0.0
  %490 = vmatprep.subr.mxu0 0.0
  %491 = vmatpush2.msra.mxu0 0.0
  %492 = vmatprep.subr.mxu0 0.0
  %493 = vmatpush2.msra.mxu0 0.0
  %494 = vmatprep.subr.mxu0 0.0
  %495 = vmatpush2.msra.mxu0 0.0
  %496 = vmatprep.subr.mxu0 0.0
  %497 = vmatpush2.msra.mxu0 0.0
  %498 = vmatprep.subr.mxu0 0.0
  %499 = vmatpush2.msra.mxu0 0.0
  %500 = vmatprep.subr.mxu0 0.0
  %501 = vmatpush2.msra.mxu0 0.0
  %502 = vmatprep.subr.mxu0 0.0
  %503 = vmatpush2.msra.mxu0 0.0
  %504 = vmatprep.subr.mxu0 0.0
  %505 = vmatpush2.msra.mxu0 0.0
  %506 = vmatprep.subr.mxu0 0.0
  %507 = vmatpush2.msra.mxu0 0.0
  %508 = vmatprep.subr.mxu0 0.0
  %509 = vmatpush2.msra.mxu0 0.0
  %510 = vmatprep.subr.mxu0 0.0
  %511 = vmatpush2.msra.mxu0 0.0
  %512 = vmatprep.subr.mxu0 0.0
  %513 = vmatpush2.msra.mxu0 0.0
  %514 = vmatprep.subr.mxu0 0.0
  %515 = vmatpush2.msra.mxu0 0.0
  %516 = vmatprep.subr.mxu0 0.0
  %517 = vmatpush2.msra.mxu0 0.0
  %518 = vmatprep.subr.mxu0 0.0
  %519 = vmatpush2.msra.mxu0 0.0
  %520 = vmatprep.mubr.f32.mxu0 0.0
  %521 = vmatmul.mubr.f32.gmra.mxu0 %v451
  %v522 = vpop.f32.mrf.mxu0
  %v523 = vadd.f32 0.0, %v522
  %v524 = vpop.f32.mrf.mxu0
  %525 = vmatprep.mubr.f32.mxu0 0.0
  %526 = vmatmul.mubr.f32.gmra.mxu0 %v454
  %v527 = vpop.f32.mrf.mxu0
  %v528 = vadd.f32 0.0, %v527
  %v529 = vpop.f32.mrf.mxu0
  %530 = vdwg.mxu0
  %vm531 = vcmp.gt.f32.partialorder %v523, 0.0
  %vm532 = vcmp.gt.f32.partialorder %v528, 0.0
  %v533 = vmul.f32 %v523, 1.442695
  %v534 = vpow.pop %v533
  %v535 = vmul.f32 %v528, 1.442695
  %v536 = vpow.pop %v535
  %v537 = vsub.f32 %v534, 1.0
  %v538 = vsub.f32 %v536, 1.0
  %v539 = vsel %vm531, %v523, %v537
  %v540 = vsel %vm532, %v528, %v538
  %543 = vrot.lane.b32.xlu0 %v539, 8
  %v544 = vpop.permute.xlu0 %543
  %545 = vrot.lane.b32.xlu0 %v540, 8
  %v546 = vpop.permute.xlu0 %545
  %vm549 = vcmask 130112
  %550 = vst.msk [vmem:[#allocation2] sm:$0xff] %vm549, %v544
  %551 = vst.msk [vmem:[#allocation2 + $0x8] sm:$0xff] %vm549, %v546
  %552 = vset.pattern.permute.xlu0 4
  %553 = vperm.xlu0 %552, %v213
  %v554 = vpop.permute.xlu0 %553
  %556 = vset.pattern.permute.xlu0 4
  %557 = vperm.xlu0 %556, %v218
  %v558 = vpop.permute.xlu0 %557
  %v560 = vlaneseq
  %v561 = vshrl.u32 %v560, 7
  %v562 = vsub.s32 5, %v561
  %v563 = vrot.slane %v247, %v562
  %v564 = vadd.f32 %v554, %v563
  %v565 = vadd.f32 %v558, %v563
  %vm566 = vcmp.gt.f32.partialorder %v564, 0.0
  %vm567 = vcmp.gt.f32.partialorder %v565, 0.0
  %v568 = vmul.f32 %v564, 0.2
  %v569 = vmul.f32 %v565, 0.2
  %v570 = vsel %vm566, %v564, %v568
  %v571 = vsel %vm567, %v565, %v569
  %v572 = vsel %vm285, %v570, -inf
  %573 = vmax.xlane.f32.xlu0 %v572
  %v574 = vpop.xlane.xlu0 %573
  %v575 = vsel %vm285, %v571, -inf
  %576 = vmax.xlane.f32.xlu0 %v575
  %v577 = vpop.xlane.xlu0 %576
  %v578 = vsub.f32 %v570, %v574
  %v579 = vsub.f32 %v571, %v577
  %v580 = vmul.f32 %v578, 1.442695
  %v581 = vpow.pop %v580
  %v582 = vmul.f32 %v579, 1.442695
  %v583 = vpow.pop %v582
  %v584 = vsel %vm285, %v581, 0.0
  %585 = vadd.xlane.f32.xlu0 %v584
  %v586 = vpop.xlane.xlu0 %585
  %v587 = vsel %vm285, %v583, 0.0
  %588 = vadd.xlane.f32.xlu0 %v587
  %v589 = vpop.xlane.xlu0 %588
  %v590 = vrcp.pop %v586
  %v591 = vrcp.pop %v589
  %v592 = vmul.f32 %v581, %v590
  %v593 = vmul.f32 %v583, %v591
  %594 = vrot.lane.b32.xlu0 %v109, 112
  %v595 = vpop.permute.xlu0 %594
  %596 = vrot.lane.b32.xlu0 %v114, 112
  %v597 = vpop.permute.xlu0 %596
  %v601 = vsel %vm285, %v592, 0
  %v604 = vsel %vm285, %v593, 0
  %606 = vmatprep.subr.mxu0 0.0
  %607 = vmatpush1.msra.mxu0 0.0
  %608 = vmatprep.subr.mxu0 0.0
  %609 = vmatpush1.msra.mxu0 0.0
  %610 = vmatprep.subr.mxu0 0.0
  %611 = vmatpush1.msra.mxu0 0.0
  %612 = vmatprep.subr.mxu0 0.0
  %613 = vmatpush1.msra.mxu0 0.0
  %614 = vmatprep.subr.mxu0 0.0
  %615 = vmatpush1.msra.mxu0 0.0
  %616 = vmatprep.subr.mxu0 0.0
  %617 = vmatpush1.msra.mxu0 0.0
  %618 = vmatprep.subr.mxu0 0.0
  %619 = vmatpush1.msra.mxu0 0.0
  %620 = vmatprep.subr.mxu0 0.0
  %621 = vmatpush1.msra.mxu0 0.0
  %622 = vmatprep.subr.mxu0 0.0
  %623 = vmatpush1.msra.mxu0 0.0
  %624 = vmatprep.subr.mxu0 0.0
  %625 = vmatpush1.msra.mxu0 0.0
  %626 = vmatprep.subr.mxu0 0.0
  %627 = vmatpush1.msra.mxu0 0.0
  %628 = vmatprep.subr.mxu0 0.0
  %629 = vmatpush1.msra.mxu0 0.0
  %630 = vmatprep.subr.mxu0 0.0
  %631 = vmatpush1.msra.mxu0 0.0
  %632 = vmatprep.subr.mxu0 0.0
  %633 = vmatpush1.msra.mxu0 0.0
  %634 = vmatprep.subr.mxu0 0.0
  %635 = vmatpush1.msra.mxu0 %v597
  %636 = vmatprep.subr.mxu0 0.0
  %637 = vmatpush1.msra.mxu0 %v595
  %638 = vmatprep.subr.mxu0 0.0
  %639 = vmatpush2.msra.mxu0 0.0
  %640 = vmatprep.subr.mxu0 0.0
  %641 = vmatpush2.msra.mxu0 0.0
  %642 = vmatprep.subr.mxu0 0.0
  %643 = vmatpush2.msra.mxu0 0.0
  %644 = vmatprep.subr.mxu0 0.0
  %645 = vmatpush2.msra.mxu0 0.0
  %646 = vmatprep.subr.mxu0 0.0
  %647 = vmatpush2.msra.mxu0 0.0
  %648 = vmatprep.subr.mxu0 0.0
  %649 = vmatpush2.msra.mxu0 0.0
  %650 = vmatprep.subr.mxu0 0.0
  %651 = vmatpush2.msra.mxu0 0.0
  %652 = vmatprep.subr.mxu0 0.0
  %653 = vmatpush2.msra.mxu0 0.0
  %654 = vmatprep.subr.mxu0 0.0
  %655 = vmatpush2.msra.mxu0 0.0
  %656 = vmatprep.subr.mxu0 0.0
  %657 = vmatpush2.msra.mxu0 0.0
  %658 = vmatprep.subr.mxu0 0.0
  %659 = vmatpush2.msra.mxu0 0.0
  %660 = vmatprep.subr.mxu0 0.0
  %661 = vmatpush2.msra.mxu0 0.0
  %662 = vmatprep.subr.mxu0 0.0
  %663 = vmatpush2.msra.mxu0 0.0
  %664 = vmatprep.subr.mxu0 0.0
  %665 = vmatpush2.msra.mxu0 0.0
  %666 = vmatprep.subr.mxu0 0.0
  %667 = vmatpush2.msra.mxu0 0.0
  %668 = vmatprep.subr.mxu0 0.0
  %669 = vmatpush2.msra.mxu0 0.0
  %670 = vmatprep.mubr.f32.mxu0 0.0
  %671 = vmatmul.mubr.f32.gmra.mxu0 %v601
  %v672 = vpop.f32.mrf.mxu0
  %v673 = vadd.f32 0.0, %v672
  %v674 = vpop.f32.mrf.mxu0
  %675 = vmatprep.mubr.f32.mxu0 0.0
  %676 = vmatmul.mubr.f32.gmra.mxu0 %v604
  %v677 = vpop.f32.mrf.mxu0
  %v678 = vadd.f32 0.0, %v677
  %v679 = vpop.f32.mrf.mxu0
  %680 = vdwg.mxu0
  %vm681 = vcmp.gt.f32.partialorder %v673, 0.0
  %vm682 = vcmp.gt.f32.partialorder %v678, 0.0
  %v683 = vmul.f32 %v673, 1.442695
  %v684 = vpow.pop %v683
  %v685 = vmul.f32 %v678, 1.442695
  %v686 = vpow.pop %v685
  %v687 = vsub.f32 %v684, 1.0
  %v688 = vsub.f32 %v686, 1.0
  %v689 = vsel %vm681, %v673, %v687
  %v690 = vsel %vm682, %v678, %v688
  %693 = vrot.lane.b32.xlu0 %v689, 16
  %v694 = vpop.permute.xlu0 %693
  %695 = vrot.lane.b32.xlu0 %v690, 16
  %v696 = vpop.permute.xlu0 %695
  %vm699 = vcmask 195712
  %700 = vst.msk [vmem:[#allocation2] sm:$0xff] %vm699, %v694
  %701 = vst.msk [vmem:[#allocation2 + $0x8] sm:$0xff] %vm699, %v696
  %702 = vset.pattern.permute.xlu0 6
  %703 = vperm.xlu0 %702, %v213
  %v704 = vpop.permute.xlu0 %703
  %706 = vset.pattern.permute.xlu0 6
  %707 = vperm.xlu0 %706, %v218
  %v708 = vpop.permute.xlu0 %707
  %v710 = vlaneseq
  %v711 = vshrl.u32 %v710, 7
  %v712 = vsub.s32 7, %v711
  %v713 = vrot.slane %v247, %v712
  %v714 = vadd.f32 %v704, %v713
  %v715 = vadd.f32 %v708, %v713
  %vm716 = vcmp.gt.f32.partialorder %v714, 0.0
  %vm717 = vcmp.gt.f32.partialorder %v715, 0.0
  %v718 = vmul.f32 %v714, 0.2
  %v719 = vmul.f32 %v715, 0.2
  %v720 = vsel %vm716, %v714, %v718
  %v721 = vsel %vm717, %v715, %v719
  %v722 = vsel %vm285, %v720, -inf
  %723 = vmax.xlane.f32.xlu0 %v722
  %v724 = vpop.xlane.xlu0 %723
  %v725 = vsel %vm285, %v721, -inf
  %726 = vmax.xlane.f32.xlu0 %v725
  %v727 = vpop.xlane.xlu0 %726
  %v728 = vsub.f32 %v720, %v724
  %v729 = vsub.f32 %v721, %v727
  %v730 = vmul.f32 %v728, 1.442695
  %v731 = vpow.pop %v730
  %v732 = vmul.f32 %v729, 1.442695
  %v733 = vpow.pop %v732
  %v734 = vsel %vm285, %v731, 0.0
  %735 = vadd.xlane.f32.xlu0 %v734
  %v736 = vpop.xlane.xlu0 %735
  %v737 = vsel %vm285, %v733, 0.0
  %738 = vadd.xlane.f32.xlu0 %v737
  %v739 = vpop.xlane.xlu0 %738
  %v740 = vrcp.pop %v736
  %v741 = vrcp.pop %v739
  %v742 = vmul.f32 %v731, %v740
  %v743 = vmul.f32 %v733, %v741
  %744 = vrot.lane.b32.xlu0 %v109, 104
  %v745 = vpop.permute.xlu0 %744
  %746 = vrot.lane.b32.xlu0 %v114, 104
  %v747 = vpop.permute.xlu0 %746
  %v751 = vsel %vm285, %v742, 0
  %v754 = vsel %vm285, %v743, 0
  %756 = vmatprep.subr.mxu0 0.0
  %757 = vmatpush1.msra.mxu0 0.0
  %758 = vmatprep.subr.mxu0 0.0
  %759 = vmatpush1.msra.mxu0 0.0
  %760 = vmatprep.subr.mxu0 0.0
  %761 = vmatpush1.msra.mxu0 0.0
  %762 = vmatprep.subr.mxu0 0.0
  %763 = vmatpush1.msra.mxu0 0.0
  %764 = vmatprep.subr.mxu0 0.0
  %765 = vmatpush1.msra.mxu0 0.0
  %766 = vmatprep.subr.mxu0 0.0
  %767 = vmatpush1.msra.mxu0 0.0
  %768 = vmatprep.subr.mxu0 0.0
  %769 = vmatpush1.msra.mxu0 0.0
  %770 = vmatprep.subr.mxu0 0.0
  %771 = vmatpush1.msra.mxu0 0.0
  %772 = vmatprep.subr.mxu0 0.0
  %773 = vmatpush1.msra.mxu0 0.0
  %774 = vmatprep.subr.mxu0 0.0
  %775 = vmatpush1.msra.mxu0 0.0
  %776 = vmatprep.subr.mxu0 0.0
  %777 = vmatpush1.msra.mxu0 0.0
  %778 = vmatprep.subr.mxu0 0.0
  %779 = vmatpush1.msra.mxu0 0.0
  %780 = vmatprep.subr.mxu0 0.0
  %781 = vmatpush1.msra.mxu0 0.0
  %782 = vmatprep.subr.mxu0 0.0
  %783 = vmatpush1.msra.mxu0 0.0
  %784 = vmatprep.subr.mxu0 0.0
  %785 = vmatpush1.msra.mxu0 %v747
  %786 = vmatprep.subr.mxu0 0.0
  %787 = vmatpush1.msra.mxu0 %v745
  %788 = vmatprep.subr.mxu0 0.0
  %789 = vmatpush2.msra.mxu0 0.0
  %790 = vmatprep.subr.mxu0 0.0
  %791 = vmatpush2.msra.mxu0 0.0
  %792 = vmatprep.subr.mxu0 0.0
  %793 = vmatpush2.msra.mxu0 0.0
  %794 = vmatprep.subr.mxu0 0.0
  %795 = vmatpush2.msra.mxu0 0.0
  %796 = vmatprep.subr.mxu0 0.0
  %797 = vmatpush2.msra.mxu0 0.0
  %798 = vmatprep.subr.mxu0 0.0
  %799 = vmatpush2.msra.mxu0 0.0
  %800 = vmatprep.subr.mxu0 0.0
  %801 = vmatpush2.msra.mxu0 0.0
  %802 = vmatprep.subr.mxu0 0.0
  %803 = vmatpush2.msra.mxu0 0.0
  %804 = vmatprep.subr.mxu0 0.0
  %805 = vmatpush2.msra.mxu0 0.0
  %806 = vmatprep.subr.mxu0 0.0
  %807 = vmatpush2.msra.mxu0 0.0
  %808 = vmatprep.subr.mxu0 0.0
  %809 = vmatpush2.msra.mxu0 0.0
  %810 = vmatprep.subr.mxu0 0.0
  %811 = vmatpush2.msra.mxu0 0.0
  %812 = vmatprep.subr.mxu0 0.0
  %813 = vmatpush2.msra.mxu0 0.0
  %814 = vmatprep.subr.mxu0 0.0
  %815 = vmatpush2.msra.mxu0 0.0
  %816 = vmatprep.subr.mxu0 0.0
  %817 = vmatpush2.msra.mxu0 0.0
  %818 = vmatprep.subr.mxu0 0.0
  %819 = vmatpush2.msra.mxu0 0.0
  %820 = vmatprep.mubr.f32.mxu0 0.0
  %821 = vmatmul.mubr.f32.gmra.mxu0 %v751
  %v822 = vpop.f32.mrf.mxu0
  %v823 = vadd.f32 0.0, %v822
  %v824 = vpop.f32.mrf.mxu0
  %825 = vmatprep.mubr.f32.mxu0 0.0
  %826 = vmatmul.mubr.f32.gmra.mxu0 %v754
  %v827 = vpop.f32.mrf.mxu0
  %v828 = vadd.f32 0.0, %v827
  %v829 = vpop.f32.mrf.mxu0
  %830 = vdwg.mxu0
  %vm831 = vcmp.gt.f32.partialorder %v823, 0.0
  %vm832 = vcmp.gt.f32.partialorder %v828, 0.0
  %v833 = vmul.f32 %v823, 1.442695
  %v834 = vpow.pop %v833
  %v835 = vmul.f32 %v828, 1.442695
  %v836 = vpow.pop %v835
  %v837 = vsub.f32 %v834, 1.0
  %v838 = vsub.f32 %v836, 1.0
  %v839 = vsel %vm831, %v823, %v837
  %v840 = vsel %vm832, %v828, %v838
  %843 = vrot.lane.b32.xlu0 %v839, 24
  %v844 = vpop.permute.xlu0 %843
  %845 = vrot.lane.b32.xlu0 %v840, 24
  %v846 = vpop.permute.xlu0 %845
  %vm849 = vcmask 261312
  %850 = vst.msk [vmem:[#allocation2] sm:$0xff] %vm849, %v844
  %851 = vst.msk [vmem:[#allocation2 + $0x8] sm:$0xff] %vm849, %v846
  %852 = vset.pattern.permute.xlu0 8
  %853 = vperm.xlu0 %852, %v213
  %v854 = vpop.permute.xlu0 %853
  %856 = vset.pattern.permute.xlu0 8
  %857 = vperm.xlu0 %856, %v218
  %v858 = vpop.permute.xlu0 %857
  %v860 = vlaneseq
  %v861 = vshrl.u32 %v860, 7
  %v862 = vsub.s32 1, %v861
  %v863 = vrot.slane %v248, %v862
  %v864 = vadd.f32 %v854, %v863
  %v865 = vadd.f32 %v858, %v863
  %vm866 = vcmp.gt.f32.partialorder %v864, 0.0
  %vm867 = vcmp.gt.f32.partialorder %v865, 0.0
  %v868 = vmul.f32 %v864, 0.2
  %v869 = vmul.f32 %v865, 0.2
  %v870 = vsel %vm866, %v864, %v868
  %v871 = vsel %vm867, %v865, %v869
  %v872 = vsel %vm285, %v870, -inf
  %873 = vmax.xlane.f32.xlu0 %v872
  %v874 = vpop.xlane.xlu0 %873
  %v875 = vsel %vm285, %v871, -inf
  %876 = vmax.xlane.f32.xlu0 %v875
  %v877 = vpop.xlane.xlu0 %876
  %v878 = vsub.f32 %v870, %v874
  %v879 = vsub.f32 %v871, %v877
  %v880 = vmul.f32 %v878, 1.442695
  %v881 = vpow.pop %v880
  %v882 = vmul.f32 %v879, 1.442695
  %v883 = vpow.pop %v882
  %v884 = vsel %vm285, %v881, 0.0
  %885 = vadd.xlane.f32.xlu0 %v884
  %v886 = vpop.xlane.xlu0 %885
  %v887 = vsel %vm285, %v883, 0.0
  %888 = vadd.xlane.f32.xlu0 %v887
  %v889 = vpop.xlane.xlu0 %888
  %v890 = vrcp.pop %v886
  %v891 = vrcp.pop %v889
  %v892 = vmul.f32 %v881, %v890
  %v893 = vmul.f32 %v883, %v891
  %894 = vrot.lane.b32.xlu0 %v109, 96
  %v895 = vpop.permute.xlu0 %894
  %896 = vrot.lane.b32.xlu0 %v114, 96
  %v897 = vpop.permute.xlu0 %896
  %v901 = vsel %vm285, %v892, 0
  %v904 = vsel %vm285, %v893, 0
  %906 = vmatprep.subr.mxu0 0.0
  %907 = vmatpush1.msra.mxu0 0.0
  %908 = vmatprep.subr.mxu0 0.0
  %909 = vmatpush1.msra.mxu0 0.0
  %910 = vmatprep.subr.mxu0 0.0
  %911 = vmatpush1.msra.mxu0 0.0
  %912 = vmatprep.subr.mxu0 0.0
  %913 = vmatpush1.msra.mxu0 0.0
  %914 = vmatprep.subr.mxu0 0.0
  %915 = vmatpush1.msra.mxu0 0.0
  %916 = vmatprep.subr.mxu0 0.0
  %917 = vmatpush1.msra.mxu0 0.0
  %918 = vmatprep.subr.mxu0 0.0
  %919 = vmatpush1.msra.mxu0 0.0
  %920 = vmatprep.subr.mxu0 0.0
  %921 = vmatpush1.msra.mxu0 0.0
  %922 = vmatprep.subr.mxu0 0.0
  %923 = vmatpush1.msra.mxu0 0.0
  %924 = vmatprep.subr.mxu0 0.0
  %925 = vmatpush1.msra.mxu0 0.0
  %926 = vmatprep.subr.mxu0 0.0
  %927 = vmatpush1.msra.mxu0 0.0
  %928 = vmatprep.subr.mxu0 0.0
  %929 = vmatpush1.msra.mxu0 0.0
  %930 = vmatprep.subr.mxu0 0.0
  %931 = vmatpush1.msra.mxu0 0.0
  %932 = vmatprep.subr.mxu0 0.0
  %933 = vmatpush1.msra.mxu0 0.0
  %934 = vmatprep.subr.mxu0 0.0
  %935 = vmatpush1.msra.mxu0 %v897
  %936 = vmatprep.subr.mxu0 0.0
  %937 = vmatpush1.msra.mxu0 %v895
  %938 = vmatprep.subr.mxu0 0.0
  %939 = vmatpush2.msra.mxu0 0.0
  %940 = vmatprep.subr.mxu0 0.0
  %941 = vmatpush2.msra.mxu0 0.0
  %942 = vmatprep.subr.mxu0 0.0
  %943 = vmatpush2.msra.mxu0 0.0
  %944 = vmatprep.subr.mxu0 0.0
  %945 = vmatpush2.msra.mxu0 0.0
  %946 = vmatprep.subr.mxu0 0.0
  %947 = vmatpush2.msra.mxu0 0.0
  %948 = vmatprep.subr.mxu0 0.0
  %949 = vmatpush2.msra.mxu0 0.0
  %950 = vmatprep.subr.mxu0 0.0
  %951 = vmatpush2.msra.mxu0 0.0
  %952 = vmatprep.subr.mxu0 0.0
  %953 = vmatpush2.msra.mxu0 0.0
  %954 = vmatprep.subr.mxu0 0.0
  %955 = vmatpush2.msra.mxu0 0.0
  %956 = vmatprep.subr.mxu0 0.0
  %957 = vmatpush2.msra.mxu0 0.0
  %958 = vmatprep.subr.mxu0 0.0
  %959 = vmatpush2.msra.mxu0 0.0
  %960 = vmatprep.subr.mxu0 0.0
  %961 = vmatpush2.msra.mxu0 0.0
  %962 = vmatprep.subr.mxu0 0.0
  %963 = vmatpush2.msra.mxu0 0.0
  %964 = vmatprep.subr.mxu0 0.0
  %965 = vmatpush2.msra.mxu0 0.0
  %966 = vmatprep.subr.mxu0 0.0
  %967 = vmatpush2.msra.mxu0 0.0
  %968 = vmatprep.subr.mxu0 0.0
  %969 = vmatpush2.msra.mxu0 0.0
  %970 = vmatprep.mubr.f32.mxu0 0.0
  %971 = vmatmul.mubr.f32.gmra.mxu0 %v901
  %v972 = vpop.f32.mrf.mxu0
  %v973 = vadd.f32 0.0, %v972
  %v974 = vpop.f32.mrf.mxu0
  %975 = vmatprep.mubr.f32.mxu0 0.0
  %976 = vmatmul.mubr.f32.gmra.mxu0 %v904
  %v977 = vpop.f32.mrf.mxu0
  %v978 = vadd.f32 0.0, %v977
  %v979 = vpop.f32.mrf.mxu0
  %980 = vdwg.mxu0
  %vm981 = vcmp.gt.f32.partialorder %v973, 0.0
  %vm982 = vcmp.gt.f32.partialorder %v978, 0.0
  %v983 = vmul.f32 %v973, 1.442695
  %v984 = vpow.pop %v983
  %v985 = vmul.f32 %v978, 1.442695
  %v986 = vpow.pop %v985
  %v987 = vsub.f32 %v984, 1.0
  %v988 = vsub.f32 %v986, 1.0
  %v989 = vsel %vm981, %v973, %v987
  %v990 = vsel %vm982, %v978, %v988
  %993 = vrot.lane.b32.xlu0 %v989, 32
  %v994 = vpop.permute.xlu0 %993
  %995 = vrot.lane.b32.xlu0 %v990, 32
  %v996 = vpop.permute.xlu0 %995
  %vm999 = vcmask 326912
  %1000 = vst.msk [vmem:[#allocation2] sm:$0xff] %vm999, %v994
  %1001 = vst.msk [vmem:[#allocation2 + $0x8] sm:$0xff] %vm999, %v996
  %1002 = vset.pattern.permute.xlu0 10
  %1003 = vperm.xlu0 %1002, %v213
  %v1004 = vpop.permute.xlu0 %1003
  %1006 = vset.pattern.permute.xlu0 10
  %1007 = vperm.xlu0 %1006, %v218
  %v1008 = vpop.permute.xlu0 %1007
  %v1010 = vlaneseq
  %v1011 = vshrl.u32 %v1010, 7
  %v1012 = vsub.s32 3, %v1011
  %v1013 = vrot.slane %v248, %v1012
  %v1014 = vadd.f32 %v1004, %v1013
  %v1015 = vadd.f32 %v1008, %v1013
  %vm1016 = vcmp.gt.f32.partialorder %v1014, 0.0
  %vm1017 = vcmp.gt.f32.partialorder %v1015, 0.0
  %v1018 = vmul.f32 %v1014, 0.2
  %v1019 = vmul.f32 %v1015, 0.2
  %v1020 = vsel %vm1016, %v1014, %v1018
  %v1021 = vsel %vm1017, %v1015, %v1019
  %v1022 = vsel %vm285, %v1020, -inf
  %1023 = vmax.xlane.f32.xlu0 %v1022
  %v1024 = vpop.xlane.xlu0 %1023
  %v1025 = vsel %vm285, %v1021, -inf
  %1026 = vmax.xlane.f32.xlu0 %v1025
  %v1027 = vpop.xlane.xlu0 %1026
  %v1028 = vsub.f32 %v1020, %v1024
  %v1029 = vsub.f32 %v1021, %v1027
  %v1030 = vmul.f32 %v1028, 1.442695
  %v1031 = vpow.pop %v1030
  %v1032 = vmul.f32 %v1029, 1.442695
  %v1033 = vpow.pop %v1032
  %v1034 = vsel %vm285, %v1031, 0.0
  %1035 = vadd.xlane.f32.xlu0 %v1034
  %v1036 = vpop.xlane.xlu0 %1035
  %v1037 = vsel %vm285, %v1033, 0.0
  %1038 = vadd.xlane.f32.xlu0 %v1037
  %v1039 = vpop.xlane.xlu0 %1038
  %v1040 = vrcp.pop %v1036
  %v1041 = vrcp.pop %v1039
  %v1042 = vmul.f32 %v1031, %v1040
  %v1043 = vmul.f32 %v1033, %v1041
  %1044 = vrot.lane.b32.xlu0 %v109, 88
  %v1045 = vpop.permute.xlu0 %1044
  %1046 = vrot.lane.b32.xlu0 %v114, 88
  %v1047 = vpop.permute.xlu0 %1046
  %v1051 = vsel %vm285, %v1042, 0
  %v1054 = vsel %vm285, %v1043, 0
  %1056 = vmatprep.subr.mxu0 0.0
  %1057 = vmatpush1.msra.mxu0 0.0
  %1058 = vmatprep.subr.mxu0 0.0
  %1059 = vmatpush1.msra.mxu0 0.0
  %1060 = vmatprep.subr.mxu0 0.0
  %1061 = vmatpush1.msra.mxu0 0.0
  %1062 = vmatprep.subr.mxu0 0.0
  %1063 = vmatpush1.msra.mxu0 0.0
  %1064 = vmatprep.subr.mxu0 0.0
  %1065 = vmatpush1.msra.mxu0 0.0
  %1066 = vmatprep.subr.mxu0 0.0
  %1067 = vmatpush1.msra.mxu0 0.0
  %1068 = vmatprep.subr.mxu0 0.0
  %1069 = vmatpush1.msra.mxu0 0.0
  %1070 = vmatprep.subr.mxu0 0.0
  %1071 = vmatpush1.msra.mxu0 0.0
  %1072 = vmatprep.subr.mxu0 0.0
  %1073 = vmatpush1.msra.mxu0 0.0
  %1074 = vmatprep.subr.mxu0 0.0
  %1075 = vmatpush1.msra.mxu0 0.0
  %1076 = vmatprep.subr.mxu0 0.0
  %1077 = vmatpush1.msra.mxu0 0.0
  %1078 = vmatprep.subr.mxu0 0.0
  %1079 = vmatpush1.msra.mxu0 0.0
  %1080 = vmatprep.subr.mxu0 0.0
  %1081 = vmatpush1.msra.mxu0 0.0
  %1082 = vmatprep.subr.mxu0 0.0
  %1083 = vmatpush1.msra.mxu0 0.0
  %1084 = vmatprep.subr.mxu0 0.0
  %1085 = vmatpush1.msra.mxu0 %v1047
  %1086 = vmatprep.subr.mxu0 0.0
  %1087 = vmatpush1.msra.mxu0 %v1045
  %1088 = vmatprep.subr.mxu0 0.0
  %1089 = vmatpush2.msra.mxu0 0.0
  %1090 = vmatprep.subr.mxu0 0.0
  %1091 = vmatpush2.msra.mxu0 0.0
  %1092 = vmatprep.subr.mxu0 0.0
  %1093 = vmatpush2.msra.mxu0 0.0
  %1094 = vmatprep.subr.mxu0 0.0
  %1095 = vmatpush2.msra.mxu0 0.0
  %1096 = vmatprep.subr.mxu0 0.0
  %1097 = vmatpush2.msra.mxu0 0.0
  %1098 = vmatprep.subr.mxu0 0.0
  %1099 = vmatpush2.msra.mxu0 0.0
  %1100 = vmatprep.subr.mxu0 0.0
  %1101 = vmatpush2.msra.mxu0 0.0
  %1102 = vmatprep.subr.mxu0 0.0
  %1103 = vmatpush2.msra.mxu0 0.0
  %1104 = vmatprep.subr.mxu0 0.0
  %1105 = vmatpush2.msra.mxu0 0.0
  %1106 = vmatprep.subr.mxu0 0.0
  %1107 = vmatpush2.msra.mxu0 0.0
  %1108 = vmatprep.subr.mxu0 0.0
  %1109 = vmatpush2.msra.mxu0 0.0
  %1110 = vmatprep.subr.mxu0 0.0
  %1111 = vmatpush2.msra.mxu0 0.0
  %1112 = vmatprep.subr.mxu0 0.0
  %1113 = vmatpush2.msra.mxu0 0.0
  %1114 = vmatprep.subr.mxu0 0.0
  %1115 = vmatpush2.msra.mxu0 0.0
  %1116 = vmatprep.subr.mxu0 0.0
  %1117 = vmatpush2.msra.mxu0 0.0
  %1118 = vmatprep.subr.mxu0 0.0
  %1119 = vmatpush2.msra.mxu0 0.0
  %1120 = vmatprep.mubr.f32.mxu0 0.0
  %1121 = vmatmul.mubr.f32.gmra.mxu0 %v1051
  %v1122 = vpop.f32.mrf.mxu0
  %v1123 = vadd.f32 0.0, %v1122
  %v1124 = vpop.f32.mrf.mxu0
  %1125 = vmatprep.mubr.f32.mxu0 0.0
  %1126 = vmatmul.mubr.f32.gmra.mxu0 %v1054
  %v1127 = vpop.f32.mrf.mxu0
  %v1128 = vadd.f32 0.0, %v1127
  %v1129 = vpop.f32.mrf.mxu0
  %1130 = vdwg.mxu0
  %vm1131 = vcmp.gt.f32.partialorder %v1123, 0.0
  %vm1132 = vcmp.gt.f32.partialorder %v1128, 0.0
  %v1133 = vmul.f32 %v1123, 1.442695
  %v1134 = vpow.pop %v1133
  %v1135 = vmul.f32 %v1128, 1.442695
  %v1136 = vpow.pop %v1135
  %v1137 = vsub.f32 %v1134, 1.0
  %v1138 = vsub.f32 %v1136, 1.0
  %v1139 = vsel %vm1131, %v1123, %v1137
  %v1140 = vsel %vm1132, %v1128, %v1138
  %1143 = vrot.lane.b32.xlu0 %v1139, 40
  %v1144 = vpop.permute.xlu0 %1143
  %1145 = vrot.lane.b32.xlu0 %v1140, 40
  %v1146 = vpop.permute.xlu0 %1145
  %vm1149 = vcmask 392512
  %1150 = vst.msk [vmem:[#allocation2] sm:$0xff] %vm1149, %v1144
  %1151 = vst.msk [vmem:[#allocation2 + $0x8] sm:$0xff] %vm1149, %v1146
  %1152 = vxpose.xlu0.b32.start [1/16] %v223, 128
  %1153 = vxpose.xlu0.b32.cont [2/16] %v228, 128
  %1154 = vxpose.xlu0.b32.cont [3/16] 0.0, 128
  %1155 = vxpose.xlu0.b32.cont [4/16] 0.0, 128
  %1156 = vxpose.xlu0.b32.cont [5/16] 0.0, 128
  %1157 = vxpose.xlu0.b32.cont [6/16] 0.0, 128
  %1158 = vxpose.xlu0.b32.cont [7/16] 0.0, 128
  %1159 = vxpose.xlu0.b32.cont [8/16] 0.0, 128
  %1160 = vxpose.xlu0.b32.cont [9/16] 0.0, 128
  %1161 = vxpose.xlu0.b32.cont [10/16] 0.0, 128
  %1162 = vxpose.xlu0.b32.cont [11/16] 0.0, 128
  %1163 = vxpose.xlu0.b32.cont [12/16] 0.0, 128
  %1164 = vxpose.xlu0.b32.cont [13/16] 0.0, 128
  %1165 = vxpose.xlu0.b32.cont [14/16] 0.0, 128
  %1166 = vxpose.xlu0.b32.cont [15/16] 0.0, 128
  %1167 = vxpose.xlu0.b32.end [16/16] 0.0, 128
  %v1168 = vpop.trf.xlu0
  %v1169 = vpop.trf.xlu0
  %v1170 = vpop.trf.xlu0
  %v1171 = vpop.trf.xlu0
  %v1172 = vpop.trf.xlu0
  %v1173 = vpop.trf.xlu0
  %v1174 = vpop.trf.xlu0
  %v1175 = vpop.trf.xlu0
  %v1176 = vpop.trf.xlu0
  %v1177 = vpop.trf.xlu0
  %v1178 = vpop.trf.xlu0
  %v1179 = vpop.trf.xlu0
  %v1180 = vpop.trf.xlu0
  %v1181 = vpop.trf.xlu0
  %v1182 = vpop.trf.xlu0
  %v1183 = vpop.trf.xlu0
  %1185 = vset.pattern.permute.xlu0 0
  %1186 = vperm.xlu0 %1185, %v223
  %v1187 = vpop.permute.xlu0 %1186
  %1190 = vset.pattern.permute.xlu0 0
  %1191 = vperm.xlu0 %1190, %v228
  %v1192 = vpop.permute.xlu0 %1191
  %v1194 = vlaneseq
  %v1195 = vshrl.u32 %v1194, 7
  %v1196 = vsub.s32 1, %v1195
  %v1197 = vrot.slane %v1168, %v1196
  %v1198 = vadd.f32 %v1187, %v1197
  %v1199 = vadd.f32 %v1192, %v1197
  %vm1200 = vcmp.gt.f32.partialorder %v1198, 0.0
  %vm1201 = vcmp.gt.f32.partialorder %v1199, 0.0
  %v1202 = vmul.f32 %v1198, 0.2
  %v1203 = vmul.f32 %v1199, 0.2
  %v1204 = vsel %vm1200, %v1198, %v1202
  %v1205 = vsel %vm1201, %v1199, %v1203
  %v1206 = vsel %vm285, %v1204, -inf
  %1207 = vmax.xlane.f32.xlu0 %v1206
  %v1208 = vpop.xlane.xlu0 %1207
  %v1209 = vsel %vm285, %v1205, -inf
  %1210 = vmax.xlane.f32.xlu0 %v1209
  %v1211 = vpop.xlane.xlu0 %1210
  %v1212 = vsub.f32 %v1204, %v1208
  %v1213 = vsub.f32 %v1205, %v1211
  %v1214 = vmul.f32 %v1212, 1.442695
  %v1215 = vpow.pop %v1214
  %v1216 = vmul.f32 %v1213, 1.442695
  %v1217 = vpow.pop %v1216
  %v1218 = vsel %vm285, %v1215, 0.0
  %1219 = vadd.xlane.f32.xlu0 %v1218
  %v1220 = vpop.xlane.xlu0 %1219
  %v1221 = vsel %vm285, %v1217, 0.0
  %1222 = vadd.xlane.f32.xlu0 %v1221
  %v1223 = vpop.xlane.xlu0 %1222
  %v1224 = vrcp.pop %v1220
  %v1225 = vrcp.pop %v1223
  %v1226 = vmul.f32 %v1215, %v1224
  %v1227 = vmul.f32 %v1217, %v1225
  %v1229 = vsel %vm285, %v1226, 0
  %v1232 = vsel %vm285, %v1227, 0
  %1234 = vmatprep.subr.mxu0 0.0
  %1235 = vmatpush1.msra.mxu0 0.0
  %1236 = vmatprep.subr.mxu0 0.0
  %1237 = vmatpush1.msra.mxu0 0.0
  %1238 = vmatprep.subr.mxu0 0.0
  %1239 = vmatpush1.msra.mxu0 0.0
  %1240 = vmatprep.subr.mxu0 0.0
  %1241 = vmatpush1.msra.mxu0 0.0
  %1242 = vmatprep.subr.mxu0 0.0
  %1243 = vmatpush1.msra.mxu0 0.0
  %1244 = vmatprep.subr.mxu0 0.0
  %1245 = vmatpush1.msra.mxu0 0.0
  %1246 = vmatprep.subr.mxu0 0.0
  %1247 = vmatpush1.msra.mxu0 0.0
  %1248 = vmatprep.subr.mxu0 0.0
  %1249 = vmatpush1.msra.mxu0 0.0
  %1250 = vmatprep.subr.mxu0 0.0
  %1251 = vmatpush1.msra.mxu0 0.0
  %1252 = vmatprep.subr.mxu0 0.0
  %1253 = vmatpush1.msra.mxu0 0.0
  %1254 = vmatprep.subr.mxu0 0.0
  %1255 = vmatpush1.msra.mxu0 0.0
  %1256 = vmatprep.subr.mxu0 0.0
  %1257 = vmatpush1.msra.mxu0 0.0
  %1258 = vmatprep.subr.mxu0 0.0
  %1259 = vmatpush1.msra.mxu0 0.0
  %1260 = vmatprep.subr.mxu0 0.0
  %1261 = vmatpush1.msra.mxu0 0.0
  %1262 = vmatprep.subr.mxu0 0.0
  %1263 = vmatpush1.msra.mxu0 %v124
  %1264 = vmatprep.subr.mxu0 0.0
  %1265 = vmatpush1.msra.mxu0 %v119
  %1266 = vmatprep.subr.mxu0 0.0
  %1267 = vmatpush2.msra.mxu0 0.0
  %1268 = vmatprep.subr.mxu0 0.0
  %1269 = vmatpush2.msra.mxu0 0.0
  %1270 = vmatprep.subr.mxu0 0.0
  %1271 = vmatpush2.msra.mxu0 0.0
  %1272 = vmatprep.subr.mxu0 0.0
  %1273 = vmatpush2.msra.mxu0 0.0
  %1274 = vmatprep.subr.mxu0 0.0
  %1275 = vmatpush2.msra.mxu0 0.0
  %1276 = vmatprep.subr.mxu0 0.0
  %1277 = vmatpush2.msra.mxu0 0.0
  %1278 = vmatprep.subr.mxu0 0.0
  %1279 = vmatpush2.msra.mxu0 0.0
  %1280 = vmatprep.subr.mxu0 0.0
  %1281 = vmatpush2.msra.mxu0 0.0
  %1282 = vmatprep.subr.mxu0 0.0
  %1283 = vmatpush2.msra.mxu0 0.0
  %1284 = vmatprep.subr.mxu0 0.0
  %1285 = vmatpush2.msra.mxu0 0.0
  %1286 = vmatprep.subr.mxu0 0.0
  %1287 = vmatpush2.msra.mxu0 0.0
  %1288 = vmatprep.subr.mxu0 0.0
  %1289 = vmatpush2.msra.mxu0 0.0
  %1290 = vmatprep.subr.mxu0 0.0
  %1291 = vmatpush2.msra.mxu0 0.0
  %1292 = vmatprep.subr.mxu0 0.0
  %1293 = vmatpush2.msra.mxu0 0.0
  %1294 = vmatprep.subr.mxu0 0.0
  %1295 = vmatpush2.msra.mxu0 0.0
  %1296 = vmatprep.subr.mxu0 0.0
  %1297 = vmatpush2.msra.mxu0 0.0
  %1298 = vmatprep.mubr.f32.mxu0 0.0
  %1299 = vmatmul.mubr.f32.gmra.mxu0 %v1229
  %v1300 = vpop.f32.mrf.mxu0
  %v1301 = vadd.f32 0.0, %v1300
  %v1302 = vpop.f32.mrf.mxu0
  %1303 = vmatprep.mubr.f32.mxu0 0.0
  %1304 = vmatmul.mubr.f32.gmra.mxu0 %v1232
  %v1305 = vpop.f32.mrf.mxu0
  %v1306 = vadd.f32 0.0, %v1305
  %v1307 = vpop.f32.mrf.mxu0
  %1308 = vdwg.mxu0
  %vm1309 = vcmp.gt.f32.partialorder %v1301, 0.0
  %vm1310 = vcmp.gt.f32.partialorder %v1306, 0.0
  %v1311 = vmul.f32 %v1301, 1.442695
  %v1312 = vpow.pop %v1311
  %v1313 = vmul.f32 %v1306, 1.442695
  %v1314 = vpow.pop %v1313
  %v1315 = vsub.f32 %v1312, 1.0
  %v1316 = vsub.f32 %v1314, 1.0
  %v1317 = vsel %vm1309, %v1301, %v1315
  %v1318 = vsel %vm1310, %v1306, %v1316
  %1319 = vst.msk [vmem:[#allocation2 + $0x10] sm:$0xff] %vm399, %v1317
  %1320 = vst.msk [vmem:[#allocation2 + $0x18] sm:$0xff] %vm399, %v1318
  %1321 = vset.pattern.permute.xlu0 2
  %1322 = vperm.xlu0 %1321, %v223
  %v1323 = vpop.permute.xlu0 %1322
  %1325 = vset.pattern.permute.xlu0 2
  %1326 = vperm.xlu0 %1325, %v228
  %v1327 = vpop.permute.xlu0 %1326
  %v1329 = vlaneseq
  %v1330 = vshrl.u32 %v1329, 7
  %v1331 = vsub.s32 3, %v1330
  %v1332 = vrot.slane %v1168, %v1331
  %v1333 = vadd.f32 %v1323, %v1332
  %v1334 = vadd.f32 %v1327, %v1332
  %vm1335 = vcmp.gt.f32.partialorder %v1333, 0.0
  %vm1336 = vcmp.gt.f32.partialorder %v1334, 0.0
  %v1337 = vmul.f32 %v1333, 0.2
  %v1338 = vmul.f32 %v1334, 0.2
  %v1339 = vsel %vm1335, %v1333, %v1337
  %v1340 = vsel %vm1336, %v1334, %v1338
  %v1341 = vsel %vm285, %v1339, -inf
  %1342 = vmax.xlane.f32.xlu0 %v1341
  %v1343 = vpop.xlane.xlu0 %1342
  %v1344 = vsel %vm285, %v1340, -inf
  %1345 = vmax.xlane.f32.xlu0 %v1344
  %v1346 = vpop.xlane.xlu0 %1345
  %v1347 = vsub.f32 %v1339, %v1343
  %v1348 = vsub.f32 %v1340, %v1346
  %v1349 = vmul.f32 %v1347, 1.442695
  %v1350 = vpow.pop %v1349
  %v1351 = vmul.f32 %v1348, 1.442695
  %v1352 = vpow.pop %v1351
  %v1353 = vsel %vm285, %v1350, 0.0
  %1354 = vadd.xlane.f32.xlu0 %v1353
  %v1355 = vpop.xlane.xlu0 %1354
  %v1356 = vsel %vm285, %v1352, 0.0
  %1357 = vadd.xlane.f32.xlu0 %v1356
  %v1358 = vpop.xlane.xlu0 %1357
  %v1359 = vrcp.pop %v1355
  %v1360 = vrcp.pop %v1358
  %v1361 = vmul.f32 %v1350, %v1359
  %v1362 = vmul.f32 %v1352, %v1360
  %1363 = vrot.lane.b32.xlu0 %v119, 120
  %v1364 = vpop.permute.xlu0 %1363
  %1365 = vrot.lane.b32.xlu0 %v124, 120
  %v1366 = vpop.permute.xlu0 %1365
  %v1370 = vsel %vm285, %v1361, 0
  %v1373 = vsel %vm285, %v1362, 0
  %1375 = vmatprep.subr.mxu0 0.0
  %1376 = vmatpush1.msra.mxu0 0.0
  %1377 = vmatprep.subr.mxu0 0.0
  %1378 = vmatpush1.msra.mxu0 0.0
  %1379 = vmatprep.subr.mxu0 0.0
  %1380 = vmatpush1.msra.mxu0 0.0
  %1381 = vmatprep.subr.mxu0 0.0
  %1382 = vmatpush1.msra.mxu0 0.0
  %1383 = vmatprep.subr.mxu0 0.0
  %1384 = vmatpush1.msra.mxu0 0.0
  %1385 = vmatprep.subr.mxu0 0.0
  %1386 = vmatpush1.msra.mxu0 0.0
  %1387 = vmatprep.subr.mxu0 0.0
  %1388 = vmatpush1.msra.mxu0 0.0
  %1389 = vmatprep.subr.mxu0 0.0
  %1390 = vmatpush1.msra.mxu0 0.0
  %1391 = vmatprep.subr.mxu0 0.0
  %1392 = vmatpush1.msra.mxu0 0.0
  %1393 = vmatprep.subr.mxu0 0.0
  %1394 = vmatpush1.msra.mxu0 0.0
  %1395 = vmatprep.subr.mxu0 0.0
  %1396 = vmatpush1.msra.mxu0 0.0
  %1397 = vmatprep.subr.mxu0 0.0
  %1398 = vmatpush1.msra.mxu0 0.0
  %1399 = vmatprep.subr.mxu0 0.0
  %1400 = vmatpush1.msra.mxu0 0.0
  %1401 = vmatprep.subr.mxu0 0.0
  %1402 = vmatpush1.msra.mxu0 0.0
  %1403 = vmatprep.subr.mxu0 0.0
  %1404 = vmatpush1.msra.mxu0 %v1366
  %1405 = vmatprep.subr.mxu0 0.0
  %1406 = vmatpush1.msra.mxu0 %v1364
  %1407 = vmatprep.subr.mxu0 0.0
  %1408 = vmatpush2.msra.mxu0 0.0
  %1409 = vmatprep.subr.mxu0 0.0
  %1410 = vmatpush2.msra.mxu0 0.0
  %1411 = vmatprep.subr.mxu0 0.0
  %1412 = vmatpush2.msra.mxu0 0.0
  %1413 = vmatprep.subr.mxu0 0.0
  %1414 = vmatpush2.msra.mxu0 0.0
  %1415 = vmatprep.subr.mxu0 0.0
  %1416 = vmatpush2.msra.mxu0 0.0
  %1417 = vmatprep.subr.mxu0 0.0
  %1418 = vmatpush2.msra.mxu0 0.0
  %1419 = vmatprep.subr.mxu0 0.0
  %1420 = vmatpush2.msra.mxu0 0.0
  %1421 = vmatprep.subr.mxu0 0.0
  %1422 = vmatpush2.msra.mxu0 0.0
  %1423 = vmatprep.subr.mxu0 0.0
  %1424 = vmatpush2.msra.mxu0 0.0
  %1425 = vmatprep.subr.mxu0 0.0
  %1426 = vmatpush2.msra.mxu0 0.0
  %1427 = vmatprep.subr.mxu0 0.0
  %1428 = vmatpush2.msra.mxu0 0.0
  %1429 = vmatprep.subr.mxu0 0.0
  %1430 = vmatpush2.msra.mxu0 0.0
  %1431 = vmatprep.subr.mxu0 0.0
  %1432 = vmatpush2.msra.mxu0 0.0
  %1433 = vmatprep.subr.mxu0 0.0
  %1434 = vmatpush2.msra.mxu0 0.0
  %1435 = vmatprep.subr.mxu0 0.0
  %1436 = vmatpush2.msra.mxu0 0.0
  %1437 = vmatprep.subr.mxu0 0.0
  %1438 = vmatpush2.msra.mxu0 0.0
  %1439 = vmatprep.mubr.f32.mxu0 0.0
  %1440 = vmatmul.mubr.f32.gmra.mxu0 %v1370
  %v1441 = vpop.f32.mrf.mxu0
  %v1442 = vadd.f32 0.0, %v1441
  %v1443 = vpop.f32.mrf.mxu0
  %1444 = vmatprep.mubr.f32.mxu0 0.0
  %1445 = vmatmul.mubr.f32.gmra.mxu0 %v1373
  %v1446 = vpop.f32.mrf.mxu0
  %v1447 = vadd.f32 0.0, %v1446
  %v1448 = vpop.f32.mrf.mxu0
  %1449 = vdwg.mxu0
  %vm1450 = vcmp.gt.f32.partialorder %v1442, 0.0
  %vm1451 = vcmp.gt.f32.partialorder %v1447, 0.0
  %v1452 = vmul.f32 %v1442, 1.442695
  %v1453 = vpow.pop %v1452
  %v1454 = vmul.f32 %v1447, 1.442695
  %v1455 = vpow.pop %v1454
  %v1456 = vsub.f32 %v1453, 1.0
  %v1457 = vsub.f32 %v1455, 1.0
  %v1458 = vsel %vm1450, %v1442, %v1456
  %v1459 = vsel %vm1451, %v1447, %v1457
  %1462 = vrot.lane.b32.xlu0 %v1458, 8
  %v1463 = vpop.permute.xlu0 %1462
  %1464 = vrot.lane.b32.xlu0 %v1459, 8
  %v1465 = vpop.permute.xlu0 %1464
  %1468 = vst.msk [vmem:[#allocation2 + $0x10] sm:$0xff] %vm549, %v1463
  %1469 = vst.msk [vmem:[#allocation2 + $0x18] sm:$0xff] %vm549, %v1465
  %1470 = vset.pattern.permute.xlu0 4
  %1471 = vperm.xlu0 %1470, %v223
  %v1472 = vpop.permute.xlu0 %1471
  %1474 = vset.pattern.permute.xlu0 4
  %1475 = vperm.xlu0 %1474, %v228
  %v1476 = vpop.permute.xlu0 %1475
  %v1478 = vlaneseq
  %v1479 = vshrl.u32 %v1478, 7
  %v1480 = vsub.s32 5, %v1479
  %v1481 = vrot.slane %v1168, %v1480
  %v1482 = vadd.f32 %v1472, %v1481
  %v1483 = vadd.f32 %v1476, %v1481
  %vm1484 = vcmp.gt.f32.partialorder %v1482, 0.0
  %vm1485 = vcmp.gt.f32.partialorder %v1483, 0.0
  %v1486 = vmul.f32 %v1482, 0.2
  %v1487 = vmul.f32 %v1483, 0.2
  %v1488 = vsel %vm1484, %v1482, %v1486
  %v1489 = vsel %vm1485, %v1483, %v1487
  %v1490 = vsel %vm285, %v1488, -inf
  %1491 = vmax.xlane.f32.xlu0 %v1490
  %v1492 = vpop.xlane.xlu0 %1491
  %v1493 = vsel %vm285, %v1489, -inf
  %1494 = vmax.xlane.f32.xlu0 %v1493
  %v1495 = vpop.xlane.xlu0 %1494
  %v1496 = vsub.f32 %v1488, %v1492
  %v1497 = vsub.f32 %v1489, %v1495
  %v1498 = vmul.f32 %v1496, 1.442695
  %v1499 = vpow.pop %v1498
  %v1500 = vmul.f32 %v1497, 1.442695
  %v1501 = vpow.pop %v1500
  %v1502 = vsel %vm285, %v1499, 0.0
  %1503 = vadd.xlane.f32.xlu0 %v1502
  %v1504 = vpop.xlane.xlu0 %1503
  %v1505 = vsel %vm285, %v1501, 0.0
  %1506 = vadd.xlane.f32.xlu0 %v1505
  %v1507 = vpop.xlane.xlu0 %1506
  %v1508 = vrcp.pop %v1504
  %v1509 = vrcp.pop %v1507
  %v1510 = vmul.f32 %v1499, %v1508
  %v1511 = vmul.f32 %v1501, %v1509
  %1512 = vrot.lane.b32.xlu0 %v119, 112
  %v1513 = vpop.permute.xlu0 %1512
  %1514 = vrot.lane.b32.xlu0 %v124, 112
  %v1515 = vpop.permute.xlu0 %1514
  %v1519 = vsel %vm285, %v1510, 0
  %v1522 = vsel %vm285, %v1511, 0
  %1524 = vmatprep.subr.mxu0 0.0
  %1525 = vmatpush1.msra.mxu0 0.0
  %1526 = vmatprep.subr.mxu0 0.0
  %1527 = vmatpush1.msra.mxu0 0.0
  %1528 = vmatprep.subr.mxu0 0.0
  %1529 = vmatpush1.msra.mxu0 0.0
  %1530 = vmatprep.subr.mxu0 0.0
  %1531 = vmatpush1.msra.mxu0 0.0
  %1532 = vmatprep.subr.mxu0 0.0
  %1533 = vmatpush1.msra.mxu0 0.0
  %1534 = vmatprep.subr.mxu0 0.0
  %1535 = vmatpush1.msra.mxu0 0.0
  %1536 = vmatprep.subr.mxu0 0.0
  %1537 = vmatpush1.msra.mxu0 0.0
  %1538 = vmatprep.subr.mxu0 0.0
  %1539 = vmatpush1.msra.mxu0 0.0
  %1540 = vmatprep.subr.mxu0 0.0
  %1541 = vmatpush1.msra.mxu0 0.0
  %1542 = vmatprep.subr.mxu0 0.0
  %1543 = vmatpush1.msra.mxu0 0.0
  %1544 = vmatprep.subr.mxu0 0.0
  %1545 = vmatpush1.msra.mxu0 0.0
  %1546 = vmatprep.subr.mxu0 0.0
  %1547 = vmatpush1.msra.mxu0 0.0
  %1548 = vmatprep.subr.mxu0 0.0
  %1549 = vmatpush1.msra.mxu0 0.0
  %1550 = vmatprep.subr.mxu0 0.0
  %1551 = vmatpush1.msra.mxu0 0.0
  %1552 = vmatprep.subr.mxu0 0.0
  %1553 = vmatpush1.msra.mxu0 %v1515
  %1554 = vmatprep.subr.mxu0 0.0
  %1555 = vmatpush1.msra.mxu0 %v1513
  %1556 = vmatprep.subr.mxu0 0.0
  %1557 = vmatpush2.msra.mxu0 0.0
  %1558 = vmatprep.subr.mxu0 0.0
  %1559 = vmatpush2.msra.mxu0 0.0
  %1560 = vmatprep.subr.mxu0 0.0
  %1561 = vmatpush2.msra.mxu0 0.0
  %1562 = vmatprep.subr.mxu0 0.0
  %1563 = vmatpush2.msra.mxu0 0.0
  %1564 = vmatprep.subr.mxu0 0.0
  %1565 = vmatpush2.msra.mxu0 0.0
  %1566 = vmatprep.subr.mxu0 0.0
  %1567 = vmatpush2.msra.mxu0 0.0
  %1568 = vmatprep.subr.mxu0 0.0
  %1569 = vmatpush2.msra.mxu0 0.0
  %1570 = vmatprep.subr.mxu0 0.0
  %1571 = vmatpush2.msra.mxu0 0.0
  %1572 = vmatprep.subr.mxu0 0.0
  %1573 = vmatpush2.msra.mxu0 0.0
  %1574 = vmatprep.subr.mxu0 0.0
  %1575 = vmatpush2.msra.mxu0 0.0
  %1576 = vmatprep.subr.mxu0 0.0
  %1577 = vmatpush2.msra.mxu0 0.0
  %1578 = vmatprep.subr.mxu0 0.0
  %1579 = vmatpush2.msra.mxu0 0.0
  %1580 = vmatprep.subr.mxu0 0.0
  %1581 = vmatpush2.msra.mxu0 0.0
  %1582 = vmatprep.subr.mxu0 0.0
  %1583 = vmatpush2.msra.mxu0 0.0
  %1584 = vmatprep.subr.mxu0 0.0
  %1585 = vmatpush2.msra.mxu0 0.0
  %1586 = vmatprep.subr.mxu0 0.0
  %1587 = vmatpush2.msra.mxu0 0.0
  %1588 = vmatprep.mubr.f32.mxu0 0.0
  %1589 = vmatmul.mubr.f32.gmra.mxu0 %v1519
  %v1590 = vpop.f32.mrf.mxu0
  %v1591 = vadd.f32 0.0, %v1590
  %v1592 = vpop.f32.mrf.mxu0
  %1593 = vmatprep.mubr.f32.mxu0 0.0
  %1594 = vmatmul.mubr.f32.gmra.mxu0 %v1522
  %v1595 = vpop.f32.mrf.mxu0
  %v1596 = vadd.f32 0.0, %v1595
  %v1597 = vpop.f32.mrf.mxu0
  %1598 = vdwg.mxu0
  %vm1599 = vcmp.gt.f32.partialorder %v1591, 0.0
  %vm1600 = vcmp.gt.f32.partialorder %v1596, 0.0
  %v1601 = vmul.f32 %v1591, 1.442695
  %v1602 = vpow.pop %v1601
  %v1603 = vmul.f32 %v1596, 1.442695
  %v1604 = vpow.pop %v1603
  %v1605 = vsub.f32 %v1602, 1.0
  %v1606 = vsub.f32 %v1604, 1.0
  %v1607 = vsel %vm1599, %v1591, %v1605
  %v1608 = vsel %vm1600, %v1596, %v1606
  %1611 = vrot.lane.b32.xlu0 %v1607, 16
  %v1612 = vpop.permute.xlu0 %1611
  %1613 = vrot.lane.b32.xlu0 %v1608, 16
  %v1614 = vpop.permute.xlu0 %1613
  %1617 = vst.msk [vmem:[#allocation2 + $0x10] sm:$0xff] %vm699, %v1612
  %1618 = vst.msk [vmem:[#allocation2 + $0x18] sm:$0xff] %vm699, %v1614
  %1619 = vset.pattern.permute.xlu0 6
  %1620 = vperm.xlu0 %1619, %v223
  %v1621 = vpop.permute.xlu0 %1620
  %1623 = vset.pattern.permute.xlu0 6
  %1624 = vperm.xlu0 %1623, %v228
  %v1625 = vpop.permute.xlu0 %1624
  %v1627 = vlaneseq
  %v1628 = vshrl.u32 %v1627, 7
  %v1629 = vsub.s32 7, %v1628
  %v1630 = vrot.slane %v1168, %v1629
  %v1631 = vadd.f32 %v1621, %v1630
  %v1632 = vadd.f32 %v1625, %v1630
  %vm1633 = vcmp.gt.f32.partialorder %v1631, 0.0
  %vm1634 = vcmp.gt.f32.partialorder %v1632, 0.0
  %v1635 = vmul.f32 %v1631, 0.2
  %v1636 = vmul.f32 %v1632, 0.2
  %v1637 = vsel %vm1633, %v1631, %v1635
  %v1638 = vsel %vm1634, %v1632, %v1636
  %v1639 = vsel %vm285, %v1637, -inf
  %1640 = vmax.xlane.f32.xlu0 %v1639
  %v1641 = vpop.xlane.xlu0 %1640
  %v1642 = vsel %vm285, %v1638, -inf
  %1643 = vmax.xlane.f32.xlu0 %v1642
  %v1644 = vpop.xlane.xlu0 %1643
  %v1645 = vsub.f32 %v1637, %v1641
  %v1646 = vsub.f32 %v1638, %v1644
  %v1647 = vmul.f32 %v1645, 1.442695
  %v1648 = vpow.pop %v1647
  %v1649 = vmul.f32 %v1646, 1.442695
  %v1650 = vpow.pop %v1649
  %v1651 = vsel %vm285, %v1648, 0.0
  %1652 = vadd.xlane.f32.xlu0 %v1651
  %v1653 = vpop.xlane.xlu0 %1652
  %v1654 = vsel %vm285, %v1650, 0.0
  %1655 = vadd.xlane.f32.xlu0 %v1654
  %v1656 = vpop.xlane.xlu0 %1655
  %v1657 = vrcp.pop %v1653
  %v1658 = vrcp.pop %v1656
  %v1659 = vmul.f32 %v1648, %v1657
  %v1660 = vmul.f32 %v1650, %v1658
  %1661 = vrot.lane.b32.xlu0 %v119, 104
  %v1662 = vpop.permute.xlu0 %1661
  %1663 = vrot.lane.b32.xlu0 %v124, 104
  %v1664 = vpop.permute.xlu0 %1663
  %v1668 = vsel %vm285, %v1659, 0
  %v1671 = vsel %vm285, %v1660, 0
  %1673 = vmatprep.subr.mxu0 0.0
  %1674 = vmatpush1.msra.mxu0 0.0
  %1675 = vmatprep.subr.mxu0 0.0
  %1676 = vmatpush1.msra.mxu0 0.0
  %1677 = vmatprep.subr.mxu0 0.0
  %1678 = vmatpush1.msra.mxu0 0.0
  %1679 = vmatprep.subr.mxu0 0.0
  %1680 = vmatpush1.msra.mxu0 0.0
  %1681 = vmatprep.subr.mxu0 0.0
  %1682 = vmatpush1.msra.mxu0 0.0
  %1683 = vmatprep.subr.mxu0 0.0
  %1684 = vmatpush1.msra.mxu0 0.0
  %1685 = vmatprep.subr.mxu0 0.0
  %1686 = vmatpush1.msra.mxu0 0.0
  %1687 = vmatprep.subr.mxu0 0.0
  %1688 = vmatpush1.msra.mxu0 0.0
  %1689 = vmatprep.subr.mxu0 0.0
  %1690 = vmatpush1.msra.mxu0 0.0
  %1691 = vmatprep.subr.mxu0 0.0
  %1692 = vmatpush1.msra.mxu0 0.0
  %1693 = vmatprep.subr.mxu0 0.0
  %1694 = vmatpush1.msra.mxu0 0.0
  %1695 = vmatprep.subr.mxu0 0.0
  %1696 = vmatpush1.msra.mxu0 0.0
  %1697 = vmatprep.subr.mxu0 0.0
  %1698 = vmatpush1.msra.mxu0 0.0
  %1699 = vmatprep.subr.mxu0 0.0
  %1700 = vmatpush1.msra.mxu0 0.0
  %1701 = vmatprep.subr.mxu0 0.0
  %1702 = vmatpush1.msra.mxu0 %v1664
  %1703 = vmatprep.subr.mxu0 0.0
  %1704 = vmatpush1.msra.mxu0 %v1662
  %1705 = vmatprep.subr.mxu0 0.0
  %1706 = vmatpush2.msra.mxu0 0.0
  %1707 = vmatprep.subr.mxu0 0.0
  %1708 = vmatpush2.msra.mxu0 0.0
  %1709 = vmatprep.subr.mxu0 0.0
  %1710 = vmatpush2.msra.mxu0 0.0
  %1711 = vmatprep.subr.mxu0 0.0
  %1712 = vmatpush2.msra.mxu0 0.0
  %1713 = vmatprep.subr.mxu0 0.0
  %1714 = vmatpush2.msra.mxu0 0.0
  %1715 = vmatprep.subr.mxu0 0.0
  %1716 = vmatpush2.msra.mxu0 0.0
  %1717 = vmatprep.subr.mxu0 0.0
  %1718 = vmatpush2.msra.mxu0 0.0
  %1719 = vmatprep.subr.mxu0 0.0
  %1720 = vmatpush2.msra.mxu0 0.0
  %1721 = vmatprep.subr.mxu0 0.0
  %1722 = vmatpush2.msra.mxu0 0.0
  %1723 = vmatprep.subr.mxu0 0.0
  %1724 = vmatpush2.msra.mxu0 0.0
  %1725 = vmatprep.subr.mxu0 0.0
  %1726 = vmatpush2.msra.mxu0 0.0
  %1727 = vmatprep.subr.mxu0 0.0
  %1728 = vmatpush2.msra.mxu0 0.0
  %1729 = vmatprep.subr.mxu0 0.0
  %1730 = vmatpush2.msra.mxu0 0.0
  %1731 = vmatprep.subr.mxu0 0.0
  %1732 = vmatpush2.msra.mxu0 0.0
  %1733 = vmatprep.subr.mxu0 0.0
  %1734 = vmatpush2.msra.mxu0 0.0
  %1735 = vmatprep.subr.mxu0 0.0
  %1736 = vmatpush2.msra.mxu0 0.0
  %1737 = vmatprep.mubr.f32.mxu0 0.0
  %1738 = vmatmul.mubr.f32.gmra.mxu0 %v1668
  %v1739 = vpop.f32.mrf.mxu0
  %v1740 = vadd.f32 0.0, %v1739
  %v1741 = vpop.f32.mrf.mxu0
  %1742 = vmatprep.mubr.f32.mxu0 0.0
  %1743 = vmatmul.mubr.f32.gmra.mxu0 %v1671
  %v1744 = vpop.f32.mrf.mxu0
  %v1745 = vadd.f32 0.0, %v1744
  %v1746 = vpop.f32.mrf.mxu0
  %1747 = vdwg.mxu0
  %vm1748 = vcmp.gt.f32.partialorder %v1740, 0.0
  %vm1749 = vcmp.gt.f32.partialorder %v1745, 0.0
  %v1750 = vmul.f32 %v1740, 1.442695
  %v1751 = vpow.pop %v1750
  %v1752 = vmul.f32 %v1745, 1.442695
  %v1753 = vpow.pop %v1752
  %v1754 = vsub.f32 %v1751, 1.0
  %v1755 = vsub.f32 %v1753, 1.0
  %v1756 = vsel %vm1748, %v1740, %v1754
  %v1757 = vsel %vm1749, %v1745, %v1755
  %1760 = vrot.lane.b32.xlu0 %v1756, 24
  %v1761 = vpop.permute.xlu0 %1760
  %1762 = vrot.lane.b32.xlu0 %v1757, 24
  %v1763 = vpop.permute.xlu0 %1762
  %1766 = vst.msk [vmem:[#allocation2 + $0x10] sm:$0xff] %vm849, %v1761
  %1767 = vst.msk [vmem:[#allocation2 + $0x18] sm:$0xff] %vm849, %v1763
  %1768 = vset.pattern.permute.xlu0 8
  %1769 = vperm.xlu0 %1768, %v223
  %v1770 = vpop.permute.xlu0 %1769
  %1772 = vset.pattern.permute.xlu0 8
  %1773 = vperm.xlu0 %1772, %v228
  %v1774 = vpop.permute.xlu0 %1773
  %v1776 = vlaneseq
  %v1777 = vshrl.u32 %v1776, 7
  %v1778 = vsub.s32 1, %v1777
  %v1779 = vrot.slane %v1169, %v1778
  %v1780 = vadd.f32 %v1770, %v1779
  %v1781 = vadd.f32 %v1774, %v1779
  %vm1782 = vcmp.gt.f32.partialorder %v1780, 0.0
  %vm1783 = vcmp.gt.f32.partialorder %v1781, 0.0
  %v1784 = vmul.f32 %v1780, 0.2
  %v1785 = vmul.f32 %v1781, 0.2
  %v1786 = vsel %vm1782, %v1780, %v1784
  %v1787 = vsel %vm1783, %v1781, %v1785
  %v1788 = vsel %vm285, %v1786, -inf
  %1789 = vmax.xlane.f32.xlu0 %v1788
  %v1790 = vpop.xlane.xlu0 %1789
  %v1791 = vsel %vm285, %v1787, -inf
  %1792 = vmax.xlane.f32.xlu0 %v1791
  %v1793 = vpop.xlane.xlu0 %1792
  %v1794 = vsub.f32 %v1786, %v1790
  %v1795 = vsub.f32 %v1787, %v1793
  %v1796 = vmul.f32 %v1794, 1.442695
  %v1797 = vpow.pop %v1796
  %v1798 = vmul.f32 %v1795, 1.442695
  %v1799 = vpow.pop %v1798
  %v1800 = vsel %vm285, %v1797, 0.0
  %1801 = vadd.xlane.f32.xlu0 %v1800
  %v1802 = vpop.xlane.xlu0 %1801
  %v1803 = vsel %vm285, %v1799, 0.0
  %1804 = vadd.xlane.f32.xlu0 %v1803
  %v1805 = vpop.xlane.xlu0 %1804
  %v1806 = vrcp.pop %v1802
  %v1807 = vrcp.pop %v1805
  %v1808 = vmul.f32 %v1797, %v1806
  %v1809 = vmul.f32 %v1799, %v1807
  %1810 = vrot.lane.b32.xlu0 %v119, 96
  %v1811 = vpop.permute.xlu0 %1810
  %1812 = vrot.lane.b32.xlu0 %v124, 96
  %v1813 = vpop.permute.xlu0 %1812
  %v1817 = vsel %vm285, %v1808, 0
  %v1820 = vsel %vm285, %v1809, 0
  %1822 = vmatprep.subr.mxu0 0.0
  %1823 = vmatpush1.msra.mxu0 0.0
  %1824 = vmatprep.subr.mxu0 0.0
  %1825 = vmatpush1.msra.mxu0 0.0
  %1826 = vmatprep.subr.mxu0 0.0
  %1827 = vmatpush1.msra.mxu0 0.0
  %1828 = vmatprep.subr.mxu0 0.0
  %1829 = vmatpush1.msra.mxu0 0.0
  %1830 = vmatprep.subr.mxu0 0.0
  %1831 = vmatpush1.msra.mxu0 0.0
  %1832 = vmatprep.subr.mxu0 0.0
  %1833 = vmatpush1.msra.mxu0 0.0
  %1834 = vmatprep.subr.mxu0 0.0
  %1835 = vmatpush1.msra.mxu0 0.0
  %1836 = vmatprep.subr.mxu0 0.0
  %1837 = vmatpush1.msra.mxu0 0.0
  %1838 = vmatprep.subr.mxu0 0.0
  %1839 = vmatpush1.msra.mxu0 0.0
  %1840 = vmatprep.subr.mxu0 0.0
  %1841 = vmatpush1.msra.mxu0 0.0
  %1842 = vmatprep.subr.mxu0 0.0
  %1843 = vmatpush1.msra.mxu0 0.0
  %1844 = vmatprep.subr.mxu0 0.0
  %1845 = vmatpush1.msra.mxu0 0.0
  %1846 = vmatprep.subr.mxu0 0.0
  %1847 = vmatpush1.msra.mxu0 0.0
  %1848 = vmatprep.subr.mxu0 0.0
  %1849 = vmatpush1.msra.mxu0 0.0
  %1850 = vmatprep.subr.mxu0 0.0
  %1851 = vmatpush1.msra.mxu0 %v1813
  %1852 = vmatprep.subr.mxu0 0.0
  %1853 = vmatpush1.msra.mxu0 %v1811
  %1854 = vmatprep.subr.mxu0 0.0
  %1855 = vmatpush2.msra.mxu0 0.0
  %1856 = vmatprep.subr.mxu0 0.0
  %1857 = vmatpush2.msra.mxu0 0.0
  %1858 = vmatprep.subr.mxu0 0.0
  %1859 = vmatpush2.msra.mxu0 0.0
  %1860 = vmatprep.subr.mxu0 0.0
  %1861 = vmatpush2.msra.mxu0 0.0
  %1862 = vmatprep.subr.mxu0 0.0
  %1863 = vmatpush2.msra.mxu0 0.0
  %1864 = vmatprep.subr.mxu0 0.0
  %1865 = vmatpush2.msra.mxu0 0.0
  %1866 = vmatprep.subr.mxu0 0.0
  %1867 = vmatpush2.msra.mxu0 0.0
  %1868 = vmatprep.subr.mxu0 0.0
  %1869 = vmatpush2.msra.mxu0 0.0
  %1870 = vmatprep.subr.mxu0 0.0
  %1871 = vmatpush2.msra.mxu0 0.0
  %1872 = vmatprep.subr.mxu0 0.0
  %1873 = vmatpush2.msra.mxu0 0.0
  %1874 = vmatprep.subr.mxu0 0.0
  %1875 = vmatpush2.msra.mxu0 0.0
  %1876 = vmatprep.subr.mxu0 0.0
  %1877 = vmatpush2.msra.mxu0 0.0
  %1878 = vmatprep.subr.mxu0 0.0
  %1879 = vmatpush2.msra.mxu0 0.0
  %1880 = vmatprep.subr.mxu0 0.0
  %1881 = vmatpush2.msra.mxu0 0.0
  %1882 = vmatprep.subr.mxu0 0.0
  %1883 = vmatpush2.msra.mxu0 0.0
  %1884 = vmatprep.subr.mxu0 0.0
  %1885 = vmatpush2.msra.mxu0 0.0
  %1886 = vmatprep.mubr.f32.mxu0 0.0
  %1887 = vmatmul.mubr.f32.gmra.mxu0 %v1817
  %v1888 = vpop.f32.mrf.mxu0
  %v1889 = vadd.f32 0.0, %v1888
  %v1890 = vpop.f32.mrf.mxu0
  %1891 = vmatprep.mubr.f32.mxu0 0.0
  %1892 = vmatmul.mubr.f32.gmra.mxu0 %v1820
  %v1893 = vpop.f32.mrf.mxu0
  %v1894 = vadd.f32 0.0, %v1893
  %v1895 = vpop.f32.mrf.mxu0
  %1896 = vdwg.mxu0
  %vm1897 = vcmp.gt.f32.partialorder %v1889, 0.0
  %vm1898 = vcmp.gt.f32.partialorder %v1894, 0.0
  %v1899 = vmul.f32 %v1889, 1.442695
  %v1900 = vpow.pop %v1899
  %v1901 = vmul.f32 %v1894, 1.442695
  %v1902 = vpow.pop %v1901
  %v1903 = vsub.f32 %v1900, 1.0
  %v1904 = vsub.f32 %v1902, 1.0
  %v1905 = vsel %vm1897, %v1889, %v1903
  %v1906 = vsel %vm1898, %v1894, %v1904
  %1909 = vrot.lane.b32.xlu0 %v1905, 32
  %v1910 = vpop.permute.xlu0 %1909
  %1911 = vrot.lane.b32.xlu0 %v1906, 32
  %v1912 = vpop.permute.xlu0 %1911
  %1915 = vst.msk [vmem:[#allocation2 + $0x10] sm:$0xff] %vm999, %v1910
  %1916 = vst.msk [vmem:[#allocation2 + $0x18] sm:$0xff] %vm999, %v1912
  %1917 = vset.pattern.permute.xlu0 10
  %1918 = vperm.xlu0 %1917, %v223
  %v1919 = vpop.permute.xlu0 %1918
  %1921 = vset.pattern.permute.xlu0 10
  %1922 = vperm.xlu0 %1921, %v228
  %v1923 = vpop.permute.xlu0 %1922
  %v1925 = vlaneseq
  %v1926 = vshrl.u32 %v1925, 7
  %v1927 = vsub.s32 3, %v1926
  %v1928 = vrot.slane %v1169, %v1927
  %v1929 = vadd.f32 %v1919, %v1928
  %v1930 = vadd.f32 %v1923, %v1928
  %vm1931 = vcmp.gt.f32.partialorder %v1929, 0.0
  %vm1932 = vcmp.gt.f32.partialorder %v1930, 0.0
  %v1933 = vmul.f32 %v1929, 0.2
  %v1934 = vmul.f32 %v1930, 0.2
  %v1935 = vsel %vm1931, %v1929, %v1933
  %v1936 = vsel %vm1932, %v1930, %v1934
  %v1937 = vsel %vm285, %v1935, -inf
  %1938 = vmax.xlane.f32.xlu0 %v1937
  %v1939 = vpop.xlane.xlu0 %1938
  %v1940 = vsel %vm285, %v1936, -inf
  %1941 = vmax.xlane.f32.xlu0 %v1940
  %v1942 = vpop.xlane.xlu0 %1941
  %v1943 = vsub.f32 %v1935, %v1939
  %v1944 = vsub.f32 %v1936, %v1942
  %v1945 = vmul.f32 %v1943, 1.442695
  %v1946 = vpow.pop %v1945
  %v1947 = vmul.f32 %v1944, 1.442695
  %v1948 = vpow.pop %v1947
  %v1949 = vsel %vm285, %v1946, 0.0
  %1950 = vadd.xlane.f32.xlu0 %v1949
  %v1951 = vpop.xlane.xlu0 %1950
  %v1952 = vsel %vm285, %v1948, 0.0
  %1953 = vadd.xlane.f32.xlu0 %v1952
  %v1954 = vpop.xlane.xlu0 %1953
  %v1955 = vrcp.pop %v1951
  %v1956 = vrcp.pop %v1954
  %v1957 = vmul.f32 %v1946, %v1955
  %v1958 = vmul.f32 %v1948, %v1956
  %1959 = vrot.lane.b32.xlu0 %v119, 88
  %v1960 = vpop.permute.xlu0 %1959
  %1961 = vrot.lane.b32.xlu0 %v124, 88
  %v1962 = vpop.permute.xlu0 %1961
  %v1966 = vsel %vm285, %v1957, 0
  %v1969 = vsel %vm285, %v1958, 0
  %1971 = vmatprep.subr.mxu0 0.0
  %1972 = vmatpush1.msra.mxu0 0.0
  %1973 = vmatprep.subr.mxu0 0.0
  %1974 = vmatpush1.msra.mxu0 0.0
  %1975 = vmatprep.subr.mxu0 0.0
  %1976 = vmatpush1.msra.mxu0 0.0
  %1977 = vmatprep.subr.mxu0 0.0
  %1978 = vmatpush1.msra.mxu0 0.0
  %1979 = vmatprep.subr.mxu0 0.0
  %1980 = vmatpush1.msra.mxu0 0.0
  %1981 = vmatprep.subr.mxu0 0.0
  %1982 = vmatpush1.msra.mxu0 0.0
  %1983 = vmatprep.subr.mxu0 0.0
  %1984 = vmatpush1.msra.mxu0 0.0
  %1985 = vmatprep.subr.mxu0 0.0
  %1986 = vmatpush1.msra.mxu0 0.0
  %1987 = vmatprep.subr.mxu0 0.0
  %1988 = vmatpush1.msra.mxu0 0.0
  %1989 = vmatprep.subr.mxu0 0.0
  %1990 = vmatpush1.msra.mxu0 0.0
  %1991 = vmatprep.subr.mxu0 0.0
  %1992 = vmatpush1.msra.mxu0 0.0
  %1993 = vmatprep.subr.mxu0 0.0
  %1994 = vmatpush1.msra.mxu0 0.0
  %1995 = vmatprep.subr.mxu0 0.0
  %1996 = vmatpush1.msra.mxu0 0.0
  %1997 = vmatprep.subr.mxu0 0.0
  %1998 = vmatpush1.msra.mxu0 0.0
  %1999 = vmatprep.subr.mxu0 0.0
  %2000 = vmatpush1.msra.mxu0 %v1962
  %2001 = vmatprep.subr.mxu0 0.0
  %2002 = vmatpush1.msra.mxu0 %v1960
  %2003 = vmatprep.subr.mxu0 0.0
  %2004 = vmatpush2.msra.mxu0 0.0
  %2005 = vmatprep.subr.mxu0 0.0
  %2006 = vmatpush2.msra.mxu0 0.0
  %2007 = vmatprep.subr.mxu0 0.0
  %2008 = vmatpush2.msra.mxu0 0.0
  %2009 = vmatprep.subr.mxu0 0.0
  %2010 = vmatpush2.msra.mxu0 0.0
  %2011 = vmatprep.subr.mxu0 0.0
  %2012 = vmatpush2.msra.mxu0 0.0
  %2013 = vmatprep.subr.mxu0 0.0
  %2014 = vmatpush2.msra.mxu0 0.0
  %2015 = vmatprep.subr.mxu0 0.0
  %2016 = vmatpush2.msra.mxu0 0.0
  %2017 = vmatprep.subr.mxu0 0.0
  %2018 = vmatpush2.msra.mxu0 0.0
  %2019 = vmatprep.subr.mxu0 0.0
  %2020 = vmatpush2.msra.mxu0 0.0
  %2021 = vmatprep.subr.mxu0 0.0
  %2022 = vmatpush2.msra.mxu0 0.0
  %2023 = vmatprep.subr.mxu0 0.0
  %2024 = vmatpush2.msra.mxu0 0.0
  %2025 = vmatprep.subr.mxu0 0.0
  %2026 = vmatpush2.msra.mxu0 0.0
  %2027 = vmatprep.subr.mxu0 0.0
  %2028 = vmatpush2.msra.mxu0 0.0
  %2029 = vmatprep.subr.mxu0 0.0
  %2030 = vmatpush2.msra.mxu0 0.0
  %2031 = vmatprep.subr.mxu0 0.0
  %2032 = vmatpush2.msra.mxu0 0.0
  %2033 = vmatprep.subr.mxu0 0.0
  %2034 = vmatpush2.msra.mxu0 0.0
  %2035 = vmatprep.mubr.f32.mxu0 0.0
  %2036 = vmatmul.mubr.f32.gmra.mxu0 %v1966
  %v2037 = vpop.f32.mrf.mxu0
  %v2038 = vadd.f32 0.0, %v2037
  %v2039 = vpop.f32.mrf.mxu0
  %2040 = vmatprep.mubr.f32.mxu0 0.0
  %2041 = vmatmul.mubr.f32.gmra.mxu0 %v1969
  %v2042 = vpop.f32.mrf.mxu0
  %v2043 = vadd.f32 0.0, %v2042
  %v2044 = vpop.f32.mrf.mxu0
  %2045 = vdwg.mxu0
  %vm2046 = vcmp.gt.f32.partialorder %v2038, 0.0
  %vm2047 = vcmp.gt.f32.partialorder %v2043, 0.0
  %v2048 = vmul.f32 %v2038, 1.442695
  %v2049 = vpow.pop %v2048
  %v2050 = vmul.f32 %v2043, 1.442695
  %v2051 = vpow.pop %v2050
  %v2052 = vsub.f32 %v2049, 1.0
  %v2053 = vsub.f32 %v2051, 1.0
  %v2054 = vsel %vm2046, %v2038, %v2052
  %v2055 = vsel %vm2047, %v2043, %v2053
  %2058 = vrot.lane.b32.xlu0 %v2054, 40
  %v2059 = vpop.permute.xlu0 %2058
  %2060 = vrot.lane.b32.xlu0 %v2055, 40
  %v2061 = vpop.permute.xlu0 %2060
  %2064 = vst.msk [vmem:[#allocation2 + $0x10] sm:$0xff] %vm1149, %v2059
  %2065 = vst.msk [vmem:[#allocation2 + $0x18] sm:$0xff] %vm1149, %v2061
  %v2066 = vld [vmem:[#allocation2] sm:$0xff]
  %v2067 = vld [vmem:[#allocation2 + $0x8] sm:$0xff]
  %v2068 = vld [vmem:[#allocation2 + $0x10] sm:$0xff]
  %v2069 = vld [vmem:[#allocation2 + $0x18] sm:$0xff]
  %v2070 = vld [vmem:[%s3] sm:$0xff]
  %v2071 = vld [vmem:[%s3 + $0x8] sm:$0xff]
  %v2072 = vld [vmem:[%s3 + $0x10] sm:$0xff]
  %v2073 = vld [vmem:[%s3 + $0x18] sm:$0xff]
  %v2074 = vld [vmem:[%s3 + $0x20] sm:$0xff]
  %v2075 = vld [vmem:[%s3 + $0x28] sm:$0xff]
  %v2077 = vsel %vm133, %v2066, 0
  %v2080 = vsel %vm133, %v2067, 0
  %v2083 = vsel %vm133, %v2068, 0
  %v2086 = vsel %vm133, %v2069, 0
  %2088 = vmatprep.subr.mxu0 0.0
  %2089 = vmatpush1.msra.mxu0 0.0
  %2090 = vmatprep.subr.mxu0 0.0
  %2091 = vmatpush1.msra.mxu0 0.0
  %2092 = vmatprep.subr.mxu0 0.0
  %2093 = vmatpush1.msra.mxu0 0.0
  %2094 = vmatprep.subr.mxu0 0.0
  %2095 = vmatpush1.msra.mxu0 0.0
  %2096 = vmatprep.subr.mxu0 0.0
  %2097 = vmatpush1.msra.mxu0 0.0
  %2098 = vmatprep.subr.mxu0 0.0
  %2099 = vmatpush1.msra.mxu0 0.0
  %2100 = vmatprep.subr.mxu0 0.0
  %2101 = vmatpush1.msra.mxu0 0.0
  %2102 = vmatprep.subr.mxu0 0.0
  %2103 = vmatpush1.msra.mxu0 0.0
  %2104 = vmatprep.subr.mxu0 0.0
  %2105 = vmatpush1.msra.mxu0 0.0
  %2106 = vmatprep.subr.mxu0 0.0
  %2107 = vmatpush1.msra.mxu0 0.0
  %2108 = vmatprep.subr.mxu0 0.0
  %2109 = vmatpush1.msra.mxu0 %v2075
  %2110 = vmatprep.subr.mxu0 0.0
  %2111 = vmatpush1.msra.mxu0 %v2074
  %2112 = vmatprep.subr.mxu0 0.0
  %2113 = vmatpush1.msra.mxu0 %v2073
  %2114 = vmatprep.subr.mxu0 0.0
  %2115 = vmatpush1.msra.mxu0 %v2072
  %2116 = vmatprep.subr.mxu0 0.0
  %2117 = vmatpush1.msra.mxu0 %v2071
  %2118 = vmatprep.subr.mxu0 0.0
  %2119 = vmatpush1.msra.mxu0 %v2070
  %2120 = vmatprep.subr.mxu0 0.0
  %2121 = vmatpush2.msra.mxu0 0.0
  %2122 = vmatprep.subr.mxu0 0.0
  %2123 = vmatpush2.msra.mxu0 0.0
  %2124 = vmatprep.subr.mxu0 0.0
  %2125 = vmatpush2.msra.mxu0 0.0
  %2126 = vmatprep.subr.mxu0 0.0
  %2127 = vmatpush2.msra.mxu0 0.0
  %2128 = vmatprep.subr.mxu0 0.0
  %2129 = vmatpush2.msra.mxu0 0.0
  %2130 = vmatprep.subr.mxu0 0.0
  %2131 = vmatpush2.msra.mxu0 0.0
  %2132 = vmatprep.subr.mxu0 0.0
  %2133 = vmatpush2.msra.mxu0 0.0
  %2134 = vmatprep.subr.mxu0 0.0
  %2135 = vmatpush2.msra.mxu0 0.0
  %2136 = vmatprep.subr.mxu0 0.0
  %2137 = vmatpush2.msra.mxu0 0.0
  %2138 = vmatprep.subr.mxu0 0.0
  %2139 = vmatpush2.msra.mxu0 0.0
  %2140 = vmatprep.subr.mxu0 0.0
  %2141 = vmatpush2.msra.mxu0 0.0
  %2142 = vmatprep.subr.mxu0 0.0
  %2143 = vmatpush2.msra.mxu0 0.0
  %2144 = vmatprep.subr.mxu0 0.0
  %2145 = vmatpush2.msra.mxu0 0.0
  %2146 = vmatprep.subr.mxu0 0.0
  %2147 = vmatpush2.msra.mxu0 0.0
  %2148 = vmatprep.subr.mxu0 0.0
  %2149 = vmatpush2.msra.mxu0 0.0
  %2150 = vmatprep.subr.mxu0 0.0
  %2151 = vmatpush2.msra.mxu0 0.0
  %2152 = vmatprep.mubr.f32.mxu0 0.0
  %2153 = vmatmul.mubr.f32.gmra.mxu0 %v2077
  %v2154 = vpop.f32.mrf.mxu0
  %v2155 = vadd.f32 0.0, %v2154
  %v2156 = vpop.f32.mrf.mxu0
  %2157 = vmatprep.mubr.f32.mxu0 0.0
  %2158 = vmatmul.mubr.f32.gmra.mxu0 %v2080
  %v2159 = vpop.f32.mrf.mxu0
  %v2160 = vadd.f32 0.0, %v2159
  %v2161 = vpop.f32.mrf.mxu0
  %2162 = vmatprep.mubr.f32.mxu0 0.0
  %2163 = vmatmul.mubr.f32.gmra.mxu0 %v2083
  %v2164 = vpop.f32.mrf.mxu0
  %v2165 = vadd.f32 0.0, %v2164
  %v2166 = vpop.f32.mrf.mxu0
  %2167 = vmatprep.mubr.f32.mxu0 0.0
  %2168 = vmatmul.mubr.f32.gmra.mxu0 %v2086
  %v2169 = vpop.f32.mrf.mxu0
  %v2170 = vadd.f32 0.0, %v2169
  %v2171 = vpop.f32.mrf.mxu0
  %2172 = vdwg.mxu0
  %v2173 = vld [vmem:[%s4] sm:$0xf]
  %v2175 = vsel %vm25, %v2155, 0
  %v2178 = vsel %vm25, %v2160, 0
  %v2181 = vsel %vm25, %v2165, 0
  %v2184 = vsel %vm25, %v2170, 0
  %v2187 = vsel %vm38, %v2173, 0
  %2189 = vmatprep.subr.mxu0 0.0
  %2190 = vmatpush1.msra.mxu0 0.0
  %2191 = vmatprep.subr.mxu0 0.0
  %2192 = vmatpush1.msra.mxu0 0.0
  %2193 = vmatprep.subr.mxu0 0.0
  %2194 = vmatpush1.msra.mxu0 0.0
  %2195 = vmatprep.subr.mxu0 0.0
  %2196 = vmatpush1.msra.mxu0 0.0
  %2197 = vmatprep.subr.mxu0 0.0
  %2198 = vmatpush1.msra.mxu0 0.0
  %2199 = vmatprep.subr.mxu0 0.0
  %2200 = vmatpush1.msra.mxu0 0.0
  %2201 = vmatprep.subr.mxu0 0.0
  %2202 = vmatpush1.msra.mxu0 0.0
  %2203 = vmatprep.subr.mxu0 0.0
  %2204 = vmatpush1.msra.mxu0 0.0
  %2205 = vmatprep.subr.mxu0 0.0
  %2206 = vmatpush1.msra.mxu0 0.0
  %2207 = vmatprep.subr.mxu0 0.0
  %2208 = vmatpush1.msra.mxu0 0.0
  %2209 = vmatprep.subr.mxu0 0.0
  %2210 = vmatpush1.msra.mxu0 0.0
  %2211 = vmatprep.subr.mxu0 0.0
  %2212 = vmatpush1.msra.mxu0 0.0
  %2213 = vmatprep.subr.mxu0 0.0
  %2214 = vmatpush1.msra.mxu0 0.0
  %2215 = vmatprep.subr.mxu0 0.0
  %2216 = vmatpush1.msra.mxu0 0.0
  %2217 = vmatprep.subr.mxu0 0.0
  %2218 = vmatpush1.msra.mxu0 0.0
  %2219 = vmatprep.subr.mxu0 0.0
  %2220 = vmatpush1.msra.mxu0 %v2187
  %2221 = vmatprep.subr.mxu0 0.0
  %2222 = vmatpush2.msra.mxu0 0.0
  %2223 = vmatprep.subr.mxu0 0.0
  %2224 = vmatpush2.msra.mxu0 0.0
  %2225 = vmatprep.subr.mxu0 0.0
  %2226 = vmatpush2.msra.mxu0 0.0
  %2227 = vmatprep.subr.mxu0 0.0
  %2228 = vmatpush2.msra.mxu0 0.0
  %2229 = vmatprep.subr.mxu0 0.0
  %2230 = vmatpush2.msra.mxu0 0.0
  %2231 = vmatprep.subr.mxu0 0.0
  %2232 = vmatpush2.msra.mxu0 0.0
  %2233 = vmatprep.subr.mxu0 0.0
  %2234 = vmatpush2.msra.mxu0 0.0
  %2235 = vmatprep.subr.mxu0 0.0
  %2236 = vmatpush2.msra.mxu0 0.0
  %2237 = vmatprep.subr.mxu0 0.0
  %2238 = vmatpush2.msra.mxu0 0.0
  %2239 = vmatprep.subr.mxu0 0.0
  %2240 = vmatpush2.msra.mxu0 0.0
  %2241 = vmatprep.subr.mxu0 0.0
  %2242 = vmatpush2.msra.mxu0 0.0
  %2243 = vmatprep.subr.mxu0 0.0
  %2244 = vmatpush2.msra.mxu0 0.0
  %2245 = vmatprep.subr.mxu0 0.0
  %2246 = vmatpush2.msra.mxu0 0.0
  %2247 = vmatprep.subr.mxu0 0.0
  %2248 = vmatpush2.msra.mxu0 0.0
  %2249 = vmatprep.subr.mxu0 0.0
  %2250 = vmatpush2.msra.mxu0 0.0
  %2251 = vmatprep.subr.mxu0 0.0
  %2252 = vmatpush2.msra.mxu0 0.0
  %2253 = vmatprep.mubr.f32.mxu0 0.0
  %2254 = vmatmul.mubr.f32.gmra.mxu0 %v2175
  %v2255 = vpop.f32.mrf.mxu0
  %v2256 = vadd.f32 0.0, %v2255
  %v2257 = vpop.f32.mrf.mxu0
  %2258 = vmatprep.mubr.f32.mxu0 0.0
  %2259 = vmatmul.mubr.f32.gmra.mxu0 %v2178
  %v2260 = vpop.f32.mrf.mxu0
  %v2261 = vadd.f32 0.0, %v2260
  %v2262 = vpop.f32.mrf.mxu0
  %2263 = vmatprep.mubr.f32.mxu0 0.0
  %2264 = vmatmul.mubr.f32.gmra.mxu0 %v2181
  %v2265 = vpop.f32.mrf.mxu0
  %v2266 = vadd.f32 0.0, %v2265
  %v2267 = vpop.f32.mrf.mxu0
  %2268 = vmatprep.mubr.f32.mxu0 0.0
  %2269 = vmatmul.mubr.f32.gmra.mxu0 %v2184
  %v2270 = vpop.f32.mrf.mxu0
  %v2271 = vadd.f32 0.0, %v2270
  %v2272 = vpop.f32.mrf.mxu0
  %2273 = vdwg.mxu0
  %2274 = vxpose.xlu0.b32.start [1/16] %v2256, 128
  %2275 = vxpose.xlu0.b32.cont [2/16] %v2261, 128
  %2276 = vxpose.xlu0.b32.cont [3/16] 0.0, 128
  %2277 = vxpose.xlu0.b32.cont [4/16] 0.0, 128
  %2278 = vxpose.xlu0.b32.cont [5/16] 0.0, 128
  %2279 = vxpose.xlu0.b32.cont [6/16] 0.0, 128
  %2280 = vxpose.xlu0.b32.cont [7/16] 0.0, 128
  %2281 = vxpose.xlu0.b32.cont [8/16] 0.0, 128
  %2282 = vxpose.xlu0.b32.cont [9/16] 0.0, 128
  %2283 = vxpose.xlu0.b32.cont [10/16] 0.0, 128
  %2284 = vxpose.xlu0.b32.cont [11/16] 0.0, 128
  %2285 = vxpose.xlu0.b32.cont [12/16] 0.0, 128
  %2286 = vxpose.xlu0.b32.cont [13/16] 0.0, 128
  %2287 = vxpose.xlu0.b32.cont [14/16] 0.0, 128
  %2288 = vxpose.xlu0.b32.cont [15/16] 0.0, 128
  %2289 = vxpose.xlu0.b32.end [16/16] 0.0, 128
  %v2290 = vpop.trf.xlu0
  %v2291 = vpop.trf.xlu0
  %v2292 = vpop.trf.xlu0
  %v2293 = vpop.trf.xlu0
  %v2294 = vpop.trf.xlu0
  %v2295 = vpop.trf.xlu0
  %v2296 = vpop.trf.xlu0
  %v2297 = vpop.trf.xlu0
  %v2298 = vpop.trf.xlu0
  %v2299 = vpop.trf.xlu0
  %v2300 = vpop.trf.xlu0
  %v2301 = vpop.trf.xlu0
  %v2302 = vpop.trf.xlu0
  %v2303 = vpop.trf.xlu0
  %v2304 = vpop.trf.xlu0
  %v2305 = vpop.trf.xlu0
  %2307 = vset.pattern.permute.xlu0 0
  %2308 = vperm.xlu0 %2307, %v2256
  %v2309 = vpop.permute.xlu0 %2308
  %2312 = vset.pattern.permute.xlu0 0
  %2313 = vperm.xlu0 %2312, %v2261
  %v2314 = vpop.permute.xlu0 %2313
  %v2316 = vlaneseq
  %v2317 = vshrl.u32 %v2316, 7
  %v2318 = vsub.s32 1, %v2317
  %v2319 = vrot.slane %v2290, %v2318
  %v2320 = vadd.f32 %v2309, %v2319
  %v2321 = vadd.f32 %v2314, %v2319
  %vm2322 = vcmp.gt.f32.partialorder %v2320, 0.0
  %vm2323 = vcmp.gt.f32.partialorder %v2321, 0.0
  %v2324 = vmul.f32 %v2320, 0.2
  %v2325 = vmul.f32 %v2321, 0.2
  %v2326 = vsel %vm2322, %v2320, %v2324
  %v2327 = vsel %vm2323, %v2321, %v2325
  %v2328 = vsel %vm285, %v2326, -inf
  %2329 = vmax.xlane.f32.xlu0 %v2328
  %v2330 = vpop.xlane.xlu0 %2329
  %v2331 = vsel %vm285, %v2327, -inf
  %2332 = vmax.xlane.f32.xlu0 %v2331
  %v2333 = vpop.xlane.xlu0 %2332
  %v2334 = vsub.f32 %v2326, %v2330
  %v2335 = vsub.f32 %v2327, %v2333
  %v2336 = vmul.f32 %v2334, 1.442695
  %v2337 = vpow.pop %v2336
  %v2338 = vmul.f32 %v2335, 1.442695
  %v2339 = vpow.pop %v2338
  %v2340 = vsel %vm285, %v2337, 0.0
  %2341 = vadd.xlane.f32.xlu0 %v2340
  %v2342 = vpop.xlane.xlu0 %2341
  %v2343 = vsel %vm285, %v2339, 0.0
  %2344 = vadd.xlane.f32.xlu0 %v2343
  %v2345 = vpop.xlane.xlu0 %2344
  %v2346 = vrcp.pop %v2342
  %v2347 = vrcp.pop %v2345
  %v2348 = vmul.f32 %v2337, %v2346
  %v2349 = vmul.f32 %v2339, %v2347
  %v2351 = vsel %vm285, %v2348, 0
  %v2354 = vsel %vm285, %v2349, 0
  %2356 = vmatprep.subr.mxu0 0.0
  %2357 = vmatpush1.msra.mxu0 0.0
  %2358 = vmatprep.subr.mxu0 0.0
  %2359 = vmatpush1.msra.mxu0 0.0
  %2360 = vmatprep.subr.mxu0 0.0
  %2361 = vmatpush1.msra.mxu0 0.0
  %2362 = vmatprep.subr.mxu0 0.0
  %2363 = vmatpush1.msra.mxu0 0.0
  %2364 = vmatprep.subr.mxu0 0.0
  %2365 = vmatpush1.msra.mxu0 0.0
  %2366 = vmatprep.subr.mxu0 0.0
  %2367 = vmatpush1.msra.mxu0 0.0
  %2368 = vmatprep.subr.mxu0 0.0
  %2369 = vmatpush1.msra.mxu0 0.0
  %2370 = vmatprep.subr.mxu0 0.0
  %2371 = vmatpush1.msra.mxu0 0.0
  %2372 = vmatprep.subr.mxu0 0.0
  %2373 = vmatpush1.msra.mxu0 0.0
  %2374 = vmatprep.subr.mxu0 0.0
  %2375 = vmatpush1.msra.mxu0 0.0
  %2376 = vmatprep.subr.mxu0 0.0
  %2377 = vmatpush1.msra.mxu0 0.0
  %2378 = vmatprep.subr.mxu0 0.0
  %2379 = vmatpush1.msra.mxu0 0.0
  %2380 = vmatprep.subr.mxu0 0.0
  %2381 = vmatpush1.msra.mxu0 0.0
  %2382 = vmatprep.subr.mxu0 0.0
  %2383 = vmatpush1.msra.mxu0 0.0
  %2384 = vmatprep.subr.mxu0 0.0
  %2385 = vmatpush1.msra.mxu0 %v2160
  %2386 = vmatprep.subr.mxu0 0.0
  %2387 = vmatpush1.msra.mxu0 %v2155
  %2388 = vmatprep.subr.mxu0 0.0
  %2389 = vmatpush2.msra.mxu0 0.0
  %2390 = vmatprep.subr.mxu0 0.0
  %2391 = vmatpush2.msra.mxu0 0.0
  %2392 = vmatprep.subr.mxu0 0.0
  %2393 = vmatpush2.msra.mxu0 0.0
  %2394 = vmatprep.subr.mxu0 0.0
  %2395 = vmatpush2.msra.mxu0 0.0
  %2396 = vmatprep.subr.mxu0 0.0
  %2397 = vmatpush2.msra.mxu0 0.0
  %2398 = vmatprep.subr.mxu0 0.0
  %2399 = vmatpush2.msra.mxu0 0.0
  %2400 = vmatprep.subr.mxu0 0.0
  %2401 = vmatpush2.msra.mxu0 0.0
  %2402 = vmatprep.subr.mxu0 0.0
  %2403 = vmatpush2.msra.mxu0 0.0
  %2404 = vmatprep.subr.mxu0 0.0
  %2405 = vmatpush2.msra.mxu0 0.0
  %2406 = vmatprep.subr.mxu0 0.0
  %2407 = vmatpush2.msra.mxu0 0.0
  %2408 = vmatprep.subr.mxu0 0.0
  %2409 = vmatpush2.msra.mxu0 0.0
  %2410 = vmatprep.subr.mxu0 0.0
  %2411 = vmatpush2.msra.mxu0 0.0
  %2412 = vmatprep.subr.mxu0 0.0
  %2413 = vmatpush2.msra.mxu0 0.0
  %2414 = vmatprep.subr.mxu0 0.0
  %2415 = vmatpush2.msra.mxu0 0.0
  %2416 = vmatprep.subr.mxu0 0.0
  %2417 = vmatpush2.msra.mxu0 0.0
  %2418 = vmatprep.subr.mxu0 0.0
  %2419 = vmatpush2.msra.mxu0 0.0
  %2420 = vmatprep.mubr.f32.mxu0 0.0
  %2421 = vmatmul.mubr.f32.gmra.mxu0 %v2351
  %v2422 = vpop.f32.mrf.mxu0
  %v2423 = vadd.f32 0.0, %v2422
  %v2424 = vpop.f32.mrf.mxu0
  %2425 = vmatprep.mubr.f32.mxu0 0.0
  %2426 = vmatmul.mubr.f32.gmra.mxu0 %v2354
  %v2427 = vpop.f32.mrf.mxu0
  %v2428 = vadd.f32 0.0, %v2427
  %v2429 = vpop.f32.mrf.mxu0
  %2430 = vdwg.mxu0
  %vm2431 = vcmp.gt.f32.partialorder %v2423, 0.0
  %vm2432 = vcmp.gt.f32.partialorder %v2428, 0.0
  %v2433 = vmul.f32 %v2423, 1.442695
  %v2434 = vpow.pop %v2433
  %v2435 = vmul.f32 %v2428, 1.442695
  %v2436 = vpow.pop %v2435
  %v2437 = vsub.f32 %v2434, 1.0
  %v2438 = vsub.f32 %v2436, 1.0
  %v2439 = vsel %vm2431, %v2423, %v2437
  %v2440 = vsel %vm2432, %v2428, %v2438
  %2441 = vst.msk [vmem:[%s5] sm:$0xff] %vm25, %v2439
  %2442 = vst.msk [vmem:[%s5 + $0x8] sm:$0xff] %vm25, %v2440
  %2443 = vxpose.xlu0.b32.start [1/16] %v2266, 128
  %2444 = vxpose.xlu0.b32.cont [2/16] %v2271, 128
  %2445 = vxpose.xlu0.b32.cont [3/16] 0.0, 128
  %2446 = vxpose.xlu0.b32.cont [4/16] 0.0, 128
  %2447 = vxpose.xlu0.b32.cont [5/16] 0.0, 128
  %2448 = vxpose.xlu0.b32.cont [6/16] 0.0, 128
  %2449 = vxpose.xlu0.b32.cont [7/16] 0.0, 128
  %2450 = vxpose.xlu0.b32.cont [8/16] 0.0, 128
  %2451 = vxpose.xlu0.b32.cont [9/16] 0.0, 128
  %2452 = vxpose.xlu0.b32.cont [10/16] 0.0, 128
  %2453 = vxpose.xlu0.b32.cont [11/16] 0.0, 128
  %2454 = vxpose.xlu0.b32.cont [12/16] 0.0, 128
  %2455 = vxpose.xlu0.b32.cont [13/16] 0.0, 128
  %2456 = vxpose.xlu0.b32.cont [14/16] 0.0, 128
  %2457 = vxpose.xlu0.b32.cont [15/16] 0.0, 128
  %2458 = vxpose.xlu0.b32.end [16/16] 0.0, 128
  %v2459 = vpop.trf.xlu0
  %v2460 = vpop.trf.xlu0
  %v2461 = vpop.trf.xlu0
  %v2462 = vpop.trf.xlu0
  %v2463 = vpop.trf.xlu0
  %v2464 = vpop.trf.xlu0
  %v2465 = vpop.trf.xlu0
  %v2466 = vpop.trf.xlu0
  %v2467 = vpop.trf.xlu0
  %v2468 = vpop.trf.xlu0
  %v2469 = vpop.trf.xlu0
  %v2470 = vpop.trf.xlu0
  %v2471 = vpop.trf.xlu0
  %v2472 = vpop.trf.xlu0
  %v2473 = vpop.trf.xlu0
  %v2474 = vpop.trf.xlu0
  %2476 = vset.pattern.permute.xlu0 0
  %2477 = vperm.xlu0 %2476, %v2266
  %v2478 = vpop.permute.xlu0 %2477
  %2481 = vset.pattern.permute.xlu0 0
  %2482 = vperm.xlu0 %2481, %v2271
  %v2483 = vpop.permute.xlu0 %2482
  %v2485 = vlaneseq
  %v2486 = vshrl.u32 %v2485, 7
  %v2487 = vsub.s32 1, %v2486
  %v2488 = vrot.slane %v2459, %v2487
  %v2489 = vadd.f32 %v2478, %v2488
  %v2490 = vadd.f32 %v2483, %v2488
  %vm2491 = vcmp.gt.f32.partialorder %v2489, 0.0
  %vm2492 = vcmp.gt.f32.partialorder %v2490, 0.0
  %v2493 = vmul.f32 %v2489, 0.2
  %v2494 = vmul.f32 %v2490, 0.2
  %v2495 = vsel %vm2491, %v2489, %v2493
  %v2496 = vsel %vm2492, %v2490, %v2494
  %v2497 = vsel %vm285, %v2495, -inf
  %2498 = vmax.xlane.f32.xlu0 %v2497
  %v2499 = vpop.xlane.xlu0 %2498
  %v2500 = vsel %vm285, %v2496, -inf
  %2501 = vmax.xlane.f32.xlu0 %v2500
  %v2502 = vpop.xlane.xlu0 %2501
  %v2503 = vsub.f32 %v2495, %v2499
  %v2504 = vsub.f32 %v2496, %v2502
  %v2505 = vmul.f32 %v2503, 1.442695
  %v2506 = vpow.pop %v2505
  %v2507 = vmul.f32 %v2504, 1.442695
  %v2508 = vpow.pop %v2507
  %v2509 = vsel %vm285, %v2506, 0.0
  %2510 = vadd.xlane.f32.xlu0 %v2509
  %v2511 = vpop.xlane.xlu0 %2510
  %v2512 = vsel %vm285, %v2508, 0.0
  %2513 = vadd.xlane.f32.xlu0 %v2512
  %v2514 = vpop.xlane.xlu0 %2513
  %v2515 = vrcp.pop %v2511
  %v2516 = vrcp.pop %v2514
  %v2517 = vmul.f32 %v2506, %v2515
  %v2518 = vmul.f32 %v2508, %v2516
  %v2520 = vsel %vm285, %v2517, 0
  %v2523 = vsel %vm285, %v2518, 0
  %2525 = vmatprep.subr.mxu0 0.0
  %2526 = vmatpush1.msra.mxu0 0.0
  %2527 = vmatprep.subr.mxu0 0.0
  %2528 = vmatpush1.msra.mxu0 0.0
  %2529 = vmatprep.subr.mxu0 0.0
  %2530 = vmatpush1.msra.mxu0 0.0
  %2531 = vmatprep.subr.mxu0 0.0
  %2532 = vmatpush1.msra.mxu0 0.0
  %2533 = vmatprep.subr.mxu0 0.0
  %2534 = vmatpush1.msra.mxu0 0.0
  %2535 = vmatprep.subr.mxu0 0.0
  %2536 = vmatpush1.msra.mxu0 0.0
  %2537 = vmatprep.subr.mxu0 0.0
  %2538 = vmatpush1.msra.mxu0 0.0
  %2539 = vmatprep.subr.mxu0 0.0
  %2540 = vmatpush1.msra.mxu0 0.0
  %2541 = vmatprep.subr.mxu0 0.0
  %2542 = vmatpush1.msra.mxu0 0.0
  %2543 = vmatprep.subr.mxu0 0.0
  %2544 = vmatpush1.msra.mxu0 0.0
  %2545 = vmatprep.subr.mxu0 0.0
  %2546 = vmatpush1.msra.mxu0 0.0
  %2547 = vmatprep.subr.mxu0 0.0
  %2548 = vmatpush1.msra.mxu0 0.0
  %2549 = vmatprep.subr.mxu0 0.0
  %2550 = vmatpush1.msra.mxu0 0.0
  %2551 = vmatprep.subr.mxu0 0.0
  %2552 = vmatpush1.msra.mxu0 0.0
  %2553 = vmatprep.subr.mxu0 0.0
  %2554 = vmatpush1.msra.mxu0 %v2170
  %2555 = vmatprep.subr.mxu0 0.0
  %2556 = vmatpush1.msra.mxu0 %v2165
  %2557 = vmatprep.subr.mxu0 0.0
  %2558 = vmatpush2.msra.mxu0 0.0
  %2559 = vmatprep.subr.mxu0 0.0
  %2560 = vmatpush2.msra.mxu0 0.0
  %2561 = vmatprep.subr.mxu0 0.0
  %2562 = vmatpush2.msra.mxu0 0.0
  %2563 = vmatprep.subr.mxu0 0.0
  %2564 = vmatpush2.msra.mxu0 0.0
  %2565 = vmatprep.subr.mxu0 0.0
  %2566 = vmatpush2.msra.mxu0 0.0
  %2567 = vmatprep.subr.mxu0 0.0
  %2568 = vmatpush2.msra.mxu0 0.0
  %2569 = vmatprep.subr.mxu0 0.0
  %2570 = vmatpush2.msra.mxu0 0.0
  %2571 = vmatprep.subr.mxu0 0.0
  %2572 = vmatpush2.msra.mxu0 0.0
  %2573 = vmatprep.subr.mxu0 0.0
  %2574 = vmatpush2.msra.mxu0 0.0
  %2575 = vmatprep.subr.mxu0 0.0
  %2576 = vmatpush2.msra.mxu0 0.0
  %2577 = vmatprep.subr.mxu0 0.0
  %2578 = vmatpush2.msra.mxu0 0.0
  %2579 = vmatprep.subr.mxu0 0.0
  %2580 = vmatpush2.msra.mxu0 0.0
  %2581 = vmatprep.subr.mxu0 0.0
  %2582 = vmatpush2.msra.mxu0 0.0
  %2583 = vmatprep.subr.mxu0 0.0
  %2584 = vmatpush2.msra.mxu0 0.0
  %2585 = vmatprep.subr.mxu0 0.0
  %2586 = vmatpush2.msra.mxu0 0.0
  %2587 = vmatprep.subr.mxu0 0.0
  %2588 = vmatpush2.msra.mxu0 0.0
  %2589 = vmatprep.mubr.f32.mxu0 0.0
  %2590 = vmatmul.mubr.f32.gmra.mxu0 %v2520
  %v2591 = vpop.f32.mrf.mxu0
  %v2592 = vadd.f32 0.0, %v2591
  %v2593 = vpop.f32.mrf.mxu0
  %2594 = vmatprep.mubr.f32.mxu0 0.0
  %2595 = vmatmul.mubr.f32.gmra.mxu0 %v2523
  %v2596 = vpop.f32.mrf.mxu0
  %v2597 = vadd.f32 0.0, %v2596
  %v2598 = vpop.f32.mrf.mxu0
  %2599 = vdwg.mxu0
  %vm2600 = vcmp.gt.f32.partialorder %v2592, 0.0
  %vm2601 = vcmp.gt.f32.partialorder %v2597, 0.0
  %v2602 = vmul.f32 %v2592, 1.442695
  %v2603 = vpow.pop %v2602
  %v2604 = vmul.f32 %v2597, 1.442695
  %v2605 = vpow.pop %v2604
  %v2606 = vsub.f32 %v2603, 1.0
  %v2607 = vsub.f32 %v2605, 1.0
  %v2608 = vsel %vm2600, %v2592, %v2606
  %v2609 = vsel %vm2601, %v2597, %v2607
  %2610 = vst.msk [vmem:[%s5 + $0x10] sm:$0xff] %vm25, %v2608
  %2611 = vst.msk [vmem:[%s5 + $0x18] sm:$0xff] %vm25, %v2609
  // Predicated region
  $region22: #{tpu_custom_call.1} parent=0 // pred_check
    _
  $region23: #{tpu_custom_call.1} parent=0 // pred_check_branch
    %2613 = sbr.rel (0) target = $region25
  $region24: #{tpu_custom_call.1} parent=0 // pred_region
    _
  $region25: #{tpu_custom_call.1} parent=0 // pred_fallthru
    _
  // Predicated region
  $region26: #{tpu_custom_call.1} parent=0 // pred_check
    _
  $region27: #{tpu_custom_call.1} parent=0 // pred_check_branch
    %2615 = sbr.rel (0) target = $region29
  $region28: #{tpu_custom_call.1} parent=0 // pred_region
    _
  $region29: #{tpu_custom_call.1} parent=0 // pred_fallthru
    _

</llo_original>
